<compile_context>
chip_gen: v7x
topology: tpu7x:2x2x1
jax: 0.10.0
libtpu: 0.0.40
codegen_flags: <defaults>
</compile_context>

<pallas_src>
import functools

import jax
import jax.numpy as jnp
from jax import lax
from jax.experimental import pallas as pl
from jax.experimental.pallas import tpu as pltpu


def _softplus(x):
    # matches torch.nn.functional.softplus (beta=1, threshold=20)
    return jnp.where(x > 20.0, x, jnp.log1p(jnp.exp(jnp.minimum(x, 20.0))))


def mamba_kernel(x_ref, w_in_ref, b_in_ref, w_conv_ref, b_conv_ref,
                 w_x_ref, b_x_ref, w_dt_ref, b_dt_ref,
                 w_out_ref, b_out_ref, a_t_ref,
                 o_ref, expa_sc, *, B, L):
    K, d_inner = w_conv_ref.shape
    d_state = a_t_ref.shape[0]
    BL = B * L
    f32 = jnp.float32
    HI = lax.Precision.HIGHEST
    LO = lax.Precision.DEFAULT       # single bf16 pass on the serial recurrence

    x = x_ref[...]                                               # (B*L, d_model)

    # ---- in_proj: x @ W_in^T + b, split into (x, res) ----
    xr = jnp.dot(x, w_in_ref[...], precision=HI,
                 preferred_element_type=f32) + b_in_ref[...]
    x_part = xr[:, :d_inner]                                     # (B*L, d_inner)
    res = xr[:, d_inner:]                                        # (B*L, d_inner)

    # ---- causal depthwise conv1d, per batch row-block, in registers ----
    ridx = lax.broadcasted_iota(jnp.int32, (BL, 1), 0)           # flat row index
    tpos = ridx % L                                              # position inside its sequence
    padded = jnp.concatenate(
        [jnp.zeros((K - 1, d_inner), f32), x_part], axis=0)      # (K-1+B*L, d_inner)
    conv = jnp.zeros((BL, d_inner), f32)
    for k in range(K):                                           # K small & static
        s = K - 1 - k                                            # temporal shift of tap k
        seg = padded[k:k + BL, :]                                # x[b, t-s] (stale across batch edge)
        if s > 0:
            seg = jnp.where(tpos >= s, seg, 0.0)                 # zero cross-batch / pre-pad rows
        conv = conv + seg * w_conv_ref[k:k + 1, :]
    conv = conv + b_conv_ref[...]
    xc = conv * jax.nn.sigmoid(conv)                             # SiLU

    # ---- fused, lane-padded x_proj -> [B | C | delta_raw | 0-pad] ----
    xbc = jnp.dot(xc, w_x_ref[...], precision=HI,
                  preferred_element_type=f32) + b_x_ref[...]     # (B*L, 128)
    Bm = xbc[:, :d_state]                                        # (B*L, d_state)
    Cm = xbc[:, d_state:2 * d_state]                             # (B*L, d_state)
    draw = xbc[:, 2 * d_state:2 * d_state + 1]                   # (B*L, 1)

    # ---- dt_proj (in_features == 1) on the VPU, softplus, per-step means ----
    dt_lin = draw * w_dt_ref[...] + b_dt_ref[...]                # (B*L, d_inner)
    dmean = jnp.mean(_softplus(dt_lin), axis=-1, keepdims=True)  # (B*L, 1)
    xmean = jnp.mean(xc, axis=-1, keepdims=True)                 # (B*L, 1)

    # ---- precompute exp(dmean * A^T) for every (b, t) into VMEM scratch ----
    # (keeps the EUP work and the exp(dt*A) tiles OFF the serial chain and out
    #  of the register file; the loop only reloads prefetchable 32x32 tiles)
    a_t = a_t_ref[...]                                           # -exp(A_log)^T
    for n in range(BL):
        expa_sc[n] = jnp.exp(dmean[n:n + 1, :] * a_t)            # (d_state, d_state)

    bx = Bm * xmean                                              # (B*L, d_state)

    # ---- sequential recurrence: B independent chains interleaved per step ----
    ytall = jnp.zeros((BL, d_state), f32)
    yts = [jnp.zeros((1, d_state), f32) for _ in range(B)]
    for t in range(L):
        for b in range(B):                                       # independent chains -> ILP
            n = b * L + t
            m = expa_sc[n]                                       # exp(dt*A)^T (row-vector form)
            yt = jnp.dot(yts[b], m, precision=LO,
                         preferred_element_type=f32) + bx[n:n + 1, :]
            nrm = jnp.sqrt(jnp.sum(yt * yt, axis=-1, keepdims=True))
            yt = yt * pl.reciprocal(nrm + 1e-6, approx=True)     # EUP, not a VPU divide
            yts[b] = yt
            ytall = ytall + jnp.where(ridx == n, 1.0, 0.0) * yt  # place row n (off-chain)

    # y[:, t, :] = (C_t . y_t) broadcast over d_inner, then residual add
    y_scalar = jnp.sum(Cm * ytall, axis=-1, keepdims=True)       # (B*L, 1)
    y = y_scalar + res                                           # (B*L, d_inner)

    out = jnp.dot(y, w_out_ref[...], precision=HI,
                  preferred_element_type=f32) + b_out_ref[...]
    o_ref[...] = out.astype(o_ref.dtype)                         # lane-dense (B*L, d_out)


def mamba_layer_forward(x, params):
    B, L, d_model = x.shape
    K, d_inner = params["w_conv"].shape
    d_state = params["a_log"].shape[0]
    d_out = params["w_out"].shape[1]
    BL = B * L

    # constant: compute -exp(A_log)^T once in the wrapper, not inside the kernel
    a_t = jnp.transpose(-jnp.exp(params["a_log"]))               # (ds, ds)

    # lane-pad the fused x_proj weight/bias (width 2*d_state+1) up to a 128 multiple
    n_x = params["w_x"].shape[1]
    n_x_pad = ((n_x + 127) // 128) * 128
    w_x = jnp.pad(params["w_x"], ((0, 0), (0, n_x_pad - n_x)))
    b_x = jnp.pad(params["b_x"], ((0, 0), (0, n_x_pad - n_x)))

    weights = [params["w_in"], params["b_in"],
               params["w_conv"], params["b_conv"],
               w_x, b_x,
               params["w_dt"], params["b_dt"],
               params["w_out"], params["b_out"],
               a_t]

    x_flat = x.reshape(BL, d_model)

    flops = (2 * BL * d_model * 2 * d_inner        # in_proj
             + 2 * BL * d_inner * n_x_pad          # x_proj (padded)
             + 2 * BL * d_inner * d_out            # out_proj
             + 2 * BL * d_state * d_state          # recurrence matvecs
             + 4 * BL * d_inner * K)               # depthwise conv
    transcendentals = (BL * d_state * d_state      # exp(dt*A)
                       + 3 * BL * d_inner          # softplus + sigmoid
                       + 2 * BL)                   # sqrt + reciprocal
    bytes_accessed = 4 * (int(x_flat.size) + sum(int(w.size) for w in weights)
                          + BL * d_out)

    kernel = functools.partial(mamba_kernel, B=B, L=L)
    vmem_spec = pl.BlockSpec(memory_space=pltpu.MemorySpace.VMEM)

    out = pl.pallas_call(
        kernel,
        out_shape=jax.ShapeDtypeStruct((BL, d_out), jnp.float32),
        in_specs=[vmem_spec] * (1 + len(weights)),
        out_specs=vmem_spec,
        scratch_shapes=[pltpu.VMEM((BL, d_state, d_state), jnp.float32)],
        cost_estimate=pl.CostEstimate(flops=flops,
                                      transcendentals=transcendentals,
                                      bytes_accessed=bytes_accessed),
    )(x_flat, *weights)
    # TODO(synk): if B grows large, tile 8-16 batch elements per grid step and
    # mark the batch axis CORE_PARALLEL to engage v7x's second TensorCore.
    return out.reshape(B, L, d_out)


def init_params(key, d_model, d_state=32, d_conv=4, expand=2, d_out=128):
    d_inner = expand * d_model
    ks = jax.random.split(key, 10)
    n = lambda k, shp, std: std * jax.random.normal(k, shp, jnp.float32)
    # torch-layout parameters (out_features, in_features), pre-transposed
    W_in = n(ks[0], (2 * d_inner, d_model), 1.0)
    b_in = n(ks[1], (2 * d_inner,), 0.1)
    W_conv = n(ks[2], (d_inner, 1, d_conv), 1.0)       # groups=d_inner depthwise
    b_conv = n(ks[3], (d_inner,), 0.1)
    W_x = n(ks[4], (2 * d_state + 1, d_inner), 0.5)    # fused x_proj
    b_x = n(ks[5], (2 * d_state + 1,), 0.1)
    W_dt = n(ks[6], (d_inner, 1), 0.1)
    b_dt = n(ks[7], (d_inner,), 0.1)
    W_out = n(ks[8], (d_out, d_inner), 1.0)
    b_out = n(ks[9], (d_out,), 0.1)
    a_log = jnp.log(jnp.ones((d_state, d_state), jnp.float32) * 0.1)
    return dict(
        w_in=W_in.T,                           # (d_model, 2*d_inner)
        b_in=b_in[None, :],
        w_conv=W_conv[:, 0, :].T,              # (K, d_inner)
        b_conv=b_conv[None, :],
        w_x=W_x.T,                             # (d_inner, 2*d_state+1)  fused
        b_x=b_x[None, :],
        w_dt=W_dt.T,                           # (1, d_inner)
        b_dt=b_dt[None, :],
        w_out=W_out.T,                         # (d_inner, d_out)
        b_out=b_out[None, :],
        a_log=a_log,
    )


def reference_forward(x, p):
    """Pure-JAX reference reproducing the PyTorch forward semantics."""
    B, L, _ = x.shape
    K, d_inner = p["w_conv"].shape
    d_state = p["a_log"].shape[0]
    HI = lax.Precision.HIGHEST
    xr = jnp.einsum("bld,dk->blk", x, p["w_in"], precision=HI) + p["b_in"]
    xp, res = xr[..., :d_inner], xr[..., d_inner:]
    pad = jnp.pad(xp, ((0, 0), (K - 1, 0), (0, 0)))
    conv = sum(pad[:, k:k + L, :] * p["w_conv"][k] for k in range(K)) + p["b_conv"]
    xc = conv * jax.nn.sigmoid(conv)
    xbc = jnp.einsum("bld,dk->blk", xc, p["w_x"], precision=HI) + p["b_x"]
    Bm, Cm = xbc[..., :d_state], xbc[..., d_state:2 * d_state]
    draw = xbc[..., 2 * d_state:]
    dt_lin = draw * p["w_dt"][0] + p["b_dt"][0]
    dmean = _softplus(dt_lin).mean(-1)                           # (B, L)
    xmean = xc.mean(-1)                                          # (B, L)
    A = -jnp.exp(p["a_log"])
    yt = jnp.zeros((B, d_state), jnp.float32)
    ys = []
    for t in range(L):
        expA = jnp.exp(dmean[:, t][:, None, None] * A)           # (B, ds, ds)
        yt = jnp.einsum("bij,bj->bi", expA, yt, precision=HI) \
            + Bm[:, t, :] * xmean[:, t][:, None]
        yt = yt / (jnp.sqrt(jnp.sum(yt * yt, -1, keepdims=True)) + 1e-6)
        ys.append(jnp.sum(Cm[:, t, :] * yt, -1))
    y = jnp.stack(ys, axis=1)[..., None] + res
    return jnp.einsum("bld,dk->blk", y, p["w_out"], precision=HI) + p["b_out"]


if __name__ == "__main__":
    d_model, d_state, d_conv, expand, d_out = 16, 32, 4, 2, 128
    batch, seq_len = 2, 8

    key = jax.random.PRNGKey(0)
    kp, kx = jax.random.split(key)
    params = init_params(kp, d_model, d_state, d_conv, expand, d_out)
    x = 0.5 * jax.random.normal(kx, (batch, seq_len, d_model), jnp.float32)

    out = jax.block_until_ready(mamba_layer_forward(x, params))
    assert out.shape == (batch, seq_len, d_out)

    ref = reference_forward(x, params)
    err = float(jnp.max(jnp.abs(out - ref)))
    scale = float(jnp.max(jnp.abs(ref))) + 1e-6
    if err / scale > 5e-3:
        raise SystemExit(f"mismatch: max abs err {err}, ref scale {scale}")
    print("KERNEL_OK")
</pallas_src>

<mosaic_0001>
module attributes {stable_mosaic.version = 11 : i64} {
  func.func @mamba_kernel(%arg0: memref<16x16xf32, #tpu.memory_space<vmem>>, %arg1: memref<16x64xf32, #tpu.memory_space<vmem>>, %arg2: memref<1x64xf32, #tpu.memory_space<vmem>>, %arg3: memref<4x32xf32, #tpu.memory_space<vmem>>, %arg4: memref<1x32xf32, #tpu.memory_space<vmem>>, %arg5: memref<32x128xf32, #tpu.memory_space<vmem>>, %arg6: memref<1x128xf32, #tpu.memory_space<vmem>>, %arg7: memref<1x32xf32, #tpu.memory_space<vmem>>, %arg8: memref<1x32xf32, #tpu.memory_space<vmem>>, %arg9: memref<32x128xf32, #tpu.memory_space<vmem>>, %arg10: memref<1x128xf32, #tpu.memory_space<vmem>>, %arg11: memref<32x32xf32, #tpu.memory_space<vmem>>, %arg12: memref<16x128xf32, #tpu.memory_space<vmem>>, %arg13: memref<16x32x32xf32, #tpu.memory_space<vmem>>) attributes {dimension_semantics = [], scalar_prefetch = 0 : i64, scratch_operands = 1 : i64, tpu.core_type = #tpu.core_type<tc>} {
    %c0 = arith.constant 0 : index
    %c0_0 = arith.constant 0 : index
    %0 = vector.load %arg0[%c0, %c0_0] : memref<16x16xf32, #tpu.memory_space<vmem>>, vector<16x16xf32>
    %c0_1 = arith.constant 0 : index
    %c0_2 = arith.constant 0 : index
    %1 = vector.load %arg1[%c0_1, %c0_2] : memref<16x64xf32, #tpu.memory_space<vmem>>, vector<16x64xf32>
    %cst = arith.constant dense<0.000000e+00> : vector<16x64xf32>
    %2 = tpu.matmul %0, %1, %cst {dimension_numbers = #tpu.dot_dimension_numbers<[1], [0], [0], [1], [0, 0, 1, 1], [], []>, precision = #tpu.contract_precision<fp32>} : vector<16x16xf32>, vector<16x64xf32>, vector<16x64xf32> -> vector<16x64xf32>
    %c0_3 = arith.constant 0 : index
    %c0_4 = arith.constant 0 : index
    %3 = vector.load %arg2[%c0_3, %c0_4] : memref<1x64xf32, #tpu.memory_space<vmem>>, vector<1x64xf32>
    %4 = vector.broadcast %3 : vector<1x64xf32> to vector<16x64xf32>
    %5 = arith.addf %2, %4 : vector<16x64xf32>
    %6 = vector.extract_strided_slice %5 {offsets = [0, 0], sizes = [16, 32], strides = [1, 1]} : vector<16x64xf32> to vector<16x32xf32>
    %7 = vector.extract_strided_slice %5 {offsets = [0, 32], sizes = [16, 32], strides = [1, 1]} : vector<16x64xf32> to vector<16x32xf32>
    %8 = tpu.iota {dimensions = array<i32: 0>} : vector<16x1xi32>
    %c8_i32 = arith.constant 8 : i32
    %c0_i32 = arith.constant 0 : i32
    %9 = arith.cmpi eq, %c8_i32, %c0_i32 : i32
    %c1_i32 = arith.constant 1 : i32
    %10 = arith.select %9, %c1_i32, %c8_i32 : i32
    %11 = vector.broadcast %10 : i32 to vector<16x1xi32>
    %12 = arith.remsi %8, %11 : vector<16x1xi32>
    %c0_i32_5 = arith.constant 0 : i32
    %13 = vector.broadcast %c0_i32_5 : i32 to vector<16x1xi32>
    %14 = arith.cmpi ne, %12, %13 : vector<16x1xi32>
    %c0_i32_6 = arith.constant 0 : i32
    %15 = vector.broadcast %c0_i32_6 : i32 to vector<16x1xi32>
    %16 = arith.cmpi slt, %12, %15 : vector<16x1xi32>
    %c0_i32_7 = arith.constant 0 : i32
    %17 = arith.cmpi slt, %10, %c0_i32_7 : i32
    %18 = vector.broadcast %17 : i1 to vector<16x1xi1>
    %19 = vector.broadcast %18 : vector<16x1xi1> to vector<16x1xi1>
    %20 = arith.xori %16, %19 : vector<16x1xi1>
    %21 = arith.andi %20, %14 : vector<16x1xi1>
    %22 = vector.broadcast %10 : i32 to vector<16x1xi32>
    %23 = arith.addi %12, %22 : vector<16x1xi32>
    %24 = arith.select %21, %23, %12 : vector<16x1xi1>, vector<16x1xi32>
    %cst_8 = arith.constant 0.000000e+00 : f32
    %25 = vector.broadcast %cst_8 : f32 to vector<3x32xf32>
    %26 = tpu.concatenate %25, %6 in 0 : vector<3x32xf32>, vector<16x32xf32> -> vector<19x32xf32>
    %cst_9 = arith.constant 0.000000e+00 : f32
    %27 = vector.broadcast %cst_9 : f32 to vector<16x32xf32>
    %28 = vector.extract_strided_slice %26 {offsets = [0, 0], sizes = [16, 32], strides = [1, 1]} : vector<19x32xf32> to vector<16x32xf32>
    %c3_i32 = arith.constant 3 : i32
    %29 = vector.broadcast %c3_i32 : i32 to vector<16x1xi32>
    %30 = arith.cmpi sge, %24, %29 : vector<16x1xi32>
    %cst_10 = arith.constant 0.000000e+00 : f32
    %31 = vector.shape_cast %30 : vector<16x1xi1> to vector<16x1xi1>
    %32 = vector.broadcast %31 : vector<16x1xi1> to vector<16x32xi1>
    %33 = vector.broadcast %cst_10 : f32 to vector<16x32xf32>
    %34 = arith.select %32, %28, %33 : vector<16x32xi1>, vector<16x32xf32>
    %c0_11 = arith.constant 0 : index
    %c0_12 = arith.constant 0 : index
    %35 = vector.load %arg3[%c0_11, %c0_12] : memref<4x32xf32, #tpu.memory_space<vmem>>, vector<1x32xf32>
    %36 = vector.broadcast %35 : vector<1x32xf32> to vector<16x32xf32>
    %37 = arith.mulf %34, %36 : vector<16x32xf32>
    %38 = arith.addf %27, %37 : vector<16x32xf32>
    %39 = vector.extract_strided_slice %26 {offsets = [1, 0], sizes = [16, 32], strides = [1, 1]} : vector<19x32xf32> to vector<16x32xf32>
    %c2_i32 = arith.constant 2 : i32
    %40 = vector.broadcast %c2_i32 : i32 to vector<16x1xi32>
    %41 = arith.cmpi sge, %24, %40 : vector<16x1xi32>
    %cst_13 = arith.constant 0.000000e+00 : f32
    %42 = vector.shape_cast %41 : vector<16x1xi1> to vector<16x1xi1>
    %43 = vector.broadcast %42 : vector<16x1xi1> to vector<16x32xi1>
    %44 = vector.broadcast %cst_13 : f32 to vector<16x32xf32>
    %45 = arith.select %43, %39, %44 : vector<16x32xi1>, vector<16x32xf32>
    %c1 = arith.constant 1 : index
    %c0_14 = arith.constant 0 : index
    %46 = vector.load %arg3[%c1, %c0_14] : memref<4x32xf32, #tpu.memory_space<vmem>>, vector<1x32xf32>
    %47 = vector.broadcast %46 : vector<1x32xf32> to vector<16x32xf32>
    %48 = arith.mulf %45, %47 : vector<16x32xf32>
    %49 = arith.addf %38, %48 : vector<16x32xf32>
    %50 = vector.extract_strided_slice %26 {offsets = [2, 0], sizes = [16, 32], strides = [1, 1]} : vector<19x32xf32> to vector<16x32xf32>
    %c1_i32_15 = arith.constant 1 : i32
    %51 = vector.broadcast %c1_i32_15 : i32 to vector<16x1xi32>
    %52 = arith.cmpi sge, %24, %51 : vector<16x1xi32>
    %cst_16 = arith.constant 0.000000e+00 : f32
    %53 = vector.shape_cast %52 : vector<16x1xi1> to vector<16x1xi1>
    %54 = vector.broadcast %53 : vector<16x1xi1> to vector<16x32xi1>
    %55 = vector.broadcast %cst_16 : f32 to vector<16x32xf32>
    %56 = arith.select %54, %50, %55 : vector<16x32xi1>, vector<16x32xf32>
    %c2 = arith.constant 2 : index
    %c0_17 = arith.constant 0 : index
    %57 = vector.load %arg3[%c2, %c0_17] : memref<4x32xf32, #tpu.memory_space<vmem>>, vector<1x32xf32>
    %58 = vector.broadcast %57 : vector<1x32xf32> to vector<16x32xf32>
    %59 = arith.mulf %56, %58 : vector<16x32xf32>
    %60 = arith.addf %49, %59 : vector<16x32xf32>
    %61 = vector.extract_strided_slice %26 {offsets = [3, 0], sizes = [16, 32], strides = [1, 1]} : vector<19x32xf32> to vector<16x32xf32>
    %c3 = arith.constant 3 : index
    %c0_18 = arith.constant 0 : index
    %62 = vector.load %arg3[%c3, %c0_18] : memref<4x32xf32, #tpu.memory_space<vmem>>, vector<1x32xf32>
    %63 = vector.broadcast %62 : vector<1x32xf32> to vector<16x32xf32>
    %64 = arith.mulf %61, %63 : vector<16x32xf32>
    %65 = arith.addf %60, %64 : vector<16x32xf32>
    %c0_19 = arith.constant 0 : index
    %c0_20 = arith.constant 0 : index
    %66 = vector.load %arg4[%c0_19, %c0_20] : memref<1x32xf32, #tpu.memory_space<vmem>>, vector<1x32xf32>
    %67 = vector.broadcast %66 : vector<1x32xf32> to vector<16x32xf32>
    %68 = arith.addf %65, %67 : vector<16x32xf32>
    %69 = arith.negf %68 : vector<16x32xf32>
    %70 = math.exp %69 : vector<16x32xf32>
    %cst_21 = arith.constant 1.000000e+00 : f32
    %71 = vector.broadcast %cst_21 : f32 to vector<16x32xf32>
    %72 = arith.addf %71, %70 : vector<16x32xf32>
    %73 = arith.divf %71, %72 : vector<16x32xf32>
    %74 = arith.mulf %68, %73 : vector<16x32xf32>
    %c0_22 = arith.constant 0 : index
    %c0_23 = arith.constant 0 : index
    %75 = vector.load %arg5[%c0_22, %c0_23] : memref<32x128xf32, #tpu.memory_space<vmem>>, vector<32x128xf32>
    %cst_24 = arith.constant dense<0.000000e+00> : vector<16x128xf32>
    %76 = tpu.matmul %74, %75, %cst_24 {dimension_numbers = #tpu.dot_dimension_numbers<[1], [0], [0], [1], [0, 0, 1, 1], [], []>, precision = #tpu.contract_precision<fp32>} : vector<16x32xf32>, vector<32x128xf32>, vector<16x128xf32> -> vector<16x128xf32>
    %c0_25 = arith.constant 0 : index
    %c0_26 = arith.constant 0 : index
    %77 = vector.load %arg6[%c0_25, %c0_26] : memref<1x128xf32, #tpu.memory_space<vmem>>, vector<1x128xf32>
    %78 = vector.broadcast %77 : vector<1x128xf32> to vector<16x128xf32>
    %79 = arith.addf %76, %78 : vector<16x128xf32>
    %80 = vector.extract_strided_slice %79 {offsets = [0, 0], sizes = [16, 32], strides = [1, 1]} : vector<16x128xf32> to vector<16x32xf32>
    %81 = vector.extract_strided_slice %79 {offsets = [0, 32], sizes = [16, 32], strides = [1, 1]} : vector<16x128xf32> to vector<16x32xf32>
    %82 = vector.extract_strided_slice %79 {offsets = [0, 64], sizes = [16, 1], strides = [1, 1]} : vector<16x128xf32> to vector<16x1xf32>
    %c0_27 = arith.constant 0 : index
    %c0_28 = arith.constant 0 : index
    %83 = vector.load %arg7[%c0_27, %c0_28] : memref<1x32xf32, #tpu.memory_space<vmem>>, vector<1x32xf32>
    %84 = vector.broadcast %82 : vector<16x1xf32> to vector<16x32xf32>
    %85 = vector.broadcast %83 : vector<1x32xf32> to vector<16x32xf32>
    %86 = arith.mulf %84, %85 : vector<16x32xf32>
    %c0_29 = arith.constant 0 : index
    %c0_30 = arith.constant 0 : index
    %87 = vector.load %arg8[%c0_29, %c0_30] : memref<1x32xf32, #tpu.memory_space<vmem>>, vector<1x32xf32>
    %88 = vector.broadcast %87 : vector<1x32xf32> to vector<16x32xf32>
    %89 = arith.addf %86, %88 : vector<16x32xf32>
    %cst_31 = arith.constant 2.000000e+01 : f32
    %90 = vector.broadcast %cst_31 : f32 to vector<16x32xf32>
    %91 = arith.cmpf ogt, %89, %90 : vector<16x32xf32>
    %cst_32 = arith.constant 2.000000e+01 : f32
    %92 = vector.broadcast %cst_32 : f32 to vector<16x32xf32>
    %93 = arith.minimumf %89, %92 : vector<16x32xf32>
    %94 = math.exp %93 : vector<16x32xf32>
    %95 = math.log1p %94 : vector<16x32xf32>
    %96 = arith.select %91, %89, %95 : vector<16x32xi1>, vector<16x32xf32>
    %cst_33 = arith.constant dense<0.000000e+00> : vector<16xf32>
    %97 = vector.multi_reduction <add>, %96, %cst_33 [1] : vector<16x32xf32> to vector<16xf32>
    %98 = vector.shape_cast %97 : vector<16xf32> to vector<16x1xf32>
    %cst_34 = arith.constant 3.200000e+01 : f32
    %99 = vector.broadcast %cst_34 : f32 to vector<16x1xf32>
    %100 = arith.divf %98, %99 : vector<16x1xf32>
    %cst_35 = arith.constant dense<0.000000e+00> : vector<16xf32>
    %101 = vector.multi_reduction <add>, %74, %cst_35 [1] : vector<16x32xf32> to vector<16xf32>
    %102 = vector.shape_cast %101 : vector<16xf32> to vector<16x1xf32>
    %cst_36 = arith.constant 3.200000e+01 : f32
    %103 = vector.broadcast %cst_36 : f32 to vector<16x1xf32>
    %104 = arith.divf %102, %103 : vector<16x1xf32>
    %c0_37 = arith.constant 0 : index
    %c0_38 = arith.constant 0 : index
    %105 = vector.load %arg11[%c0_37, %c0_38] : memref<32x32xf32, #tpu.memory_space<vmem>>, vector<32x32xf32>
    %106 = vector.extract_strided_slice %100 {offsets = [0, 0], sizes = [1, 1], strides = [1, 1]} : vector<16x1xf32> to vector<1x1xf32>
    %107 = vector.broadcast %106 : vector<1x1xf32> to vector<32x32xf32>
    %108 = arith.mulf %107, %105 : vector<32x32xf32>
    %109 = math.exp %108 : vector<32x32xf32>
    %c0_39 = arith.constant 0 : index
    %c0_40 = arith.constant 0 : index
    %c0_41 = arith.constant 0 : index
    %110 = vector.load %arg13[%c0_39, %c0_40, %c0_41] : memref<16x32x32xf32, #tpu.memory_space<vmem>>, vector<1x32x32xf32>
    %111 = vector.shape_cast %110 : vector<1x32x32xf32> to vector<32x32xf32>
    %112 = vector.shape_cast %109 : vector<32x32xf32> to vector<1x32x32xf32>
    tpu.vector_store %arg13[%c0_39, %c0_40, %c0_41], %112 {strides = array<i32>} : memref<16x32x32xf32, #tpu.memory_space<vmem>>, vector<1x32x32xf32>,
    %113 = vector.extract_strided_slice %100 {offsets = [1, 0], sizes = [1, 1], strides = [1, 1]} : vector<16x1xf32> to vector<1x1xf32>
    %114 = vector.broadcast %113 : vector<1x1xf32> to vector<32x32xf32>
    %115 = arith.mulf %114, %105 : vector<32x32xf32>
    %116 = math.exp %115 : vector<32x32xf32>
    %c1_42 = arith.constant 1 : index
    %c0_43 = arith.constant 0 : index
    %c0_44 = arith.constant 0 : index
    %117 = vector.load %arg13[%c1_42, %c0_43, %c0_44] : memref<16x32x32xf32, #tpu.memory_space<vmem>>, vector<1x32x32xf32>
    %118 = vector.shape_cast %117 : vector<1x32x32xf32> to vector<32x32xf32>
    %119 = vector.shape_cast %116 : vector<32x32xf32> to vector<1x32x32xf32>
    tpu.vector_store %arg13[%c1_42, %c0_43, %c0_44], %119 {strides = array<i32>} : memref<16x32x32xf32, #tpu.memory_space<vmem>>, vector<1x32x32xf32>,
    %120 = vector.extract_strided_slice %100 {offsets = [2, 0], sizes = [1, 1], strides = [1, 1]} : vector<16x1xf32> to vector<1x1xf32>
    %121 = vector.broadcast %120 : vector<1x1xf32> to vector<32x32xf32>
    %122 = arith.mulf %121, %105 : vector<32x32xf32>
    %123 = math.exp %122 : vector<32x32xf32>
    %c2_45 = arith.constant 2 : index
    %c0_46 = arith.constant 0 : index
    %c0_47 = arith.constant 0 : index
    %124 = vector.load %arg13[%c2_45, %c0_46, %c0_47] : memref<16x32x32xf32, #tpu.memory_space<vmem>>, vector<1x32x32xf32>
    %125 = vector.shape_cast %124 : vector<1x32x32xf32> to vector<32x32xf32>
    %126 = vector.shape_cast %123 : vector<32x32xf32> to vector<1x32x32xf32>
    tpu.vector_store %arg13[%c2_45, %c0_46, %c0_47], %126 {strides = array<i32>} : memref<16x32x32xf32, #tpu.memory_space<vmem>>, vector<1x32x32xf32>,
    %127 = vector.extract_strided_slice %100 {offsets = [3, 0], sizes = [1, 1], strides = [1, 1]} : vector<16x1xf32> to vector<1x1xf32>
    %128 = vector.broadcast %127 : vector<1x1xf32> to vector<32x32xf32>
    %129 = arith.mulf %128, %105 : vector<32x32xf32>
    %130 = math.exp %129 : vector<32x32xf32>
    %c3_48 = arith.constant 3 : index
    %c0_49 = arith.constant 0 : index
    %c0_50 = arith.constant 0 : index
    %131 = vector.load %arg13[%c3_48, %c0_49, %c0_50] : memref<16x32x32xf32, #tpu.memory_space<vmem>>, vector<1x32x32xf32>
    %132 = vector.shape_cast %131 : vector<1x32x32xf32> to vector<32x32xf32>
    %133 = vector.shape_cast %130 : vector<32x32xf32> to vector<1x32x32xf32>
    tpu.vector_store %arg13[%c3_48, %c0_49, %c0_50], %133 {strides = array<i32>} : memref<16x32x32xf32, #tpu.memory_space<vmem>>, vector<1x32x32xf32>,
    %134 = vector.extract_strided_slice %100 {offsets = [4, 0], sizes = [1, 1], strides = [1, 1]} : vector<16x1xf32> to vector<1x1xf32>
    %135 = vector.broadcast %134 : vector<1x1xf32> to vector<32x32xf32>
    %136 = arith.mulf %135, %105 : vector<32x32xf32>
    %137 = math.exp %136 : vector<32x32xf32>
    %c4 = arith.constant 4 : index
    %c0_51 = arith.constant 0 : index
    %c0_52 = arith.constant 0 : index
    %138 = vector.load %arg13[%c4, %c0_51, %c0_52] : memref<16x32x32xf32, #tpu.memory_space<vmem>>, vector<1x32x32xf32>
    %139 = vector.shape_cast %138 : vector<1x32x32xf32> to vector<32x32xf32>
    %140 = vector.shape_cast %137 : vector<32x32xf32> to vector<1x32x32xf32>
    tpu.vector_store %arg13[%c4, %c0_51, %c0_52], %140 {strides = array<i32>} : memref<16x32x32xf32, #tpu.memory_space<vmem>>, vector<1x32x32xf32>,
    %141 = vector.extract_strided_slice %100 {offsets = [5, 0], sizes = [1, 1], strides = [1, 1]} : vector<16x1xf32> to vector<1x1xf32>
    %142 = vector.broadcast %141 : vector<1x1xf32> to vector<32x32xf32>
    %143 = arith.mulf %142, %105 : vector<32x32xf32>
    %144 = math.exp %143 : vector<32x32xf32>
    %c5 = arith.constant 5 : index
    %c0_53 = arith.constant 0 : index
    %c0_54 = arith.constant 0 : index
    %145 = vector.load %arg13[%c5, %c0_53, %c0_54] : memref<16x32x32xf32, #tpu.memory_space<vmem>>, vector<1x32x32xf32>
    %146 = vector.shape_cast %145 : vector<1x32x32xf32> to vector<32x32xf32>
    %147 = vector.shape_cast %144 : vector<32x32xf32> to vector<1x32x32xf32>
    tpu.vector_store %arg13[%c5, %c0_53, %c0_54], %147 {strides = array<i32>} : memref<16x32x32xf32, #tpu.memory_space<vmem>>, vector<1x32x32xf32>,
    %148 = vector.extract_strided_slice %100 {offsets = [6, 0], sizes = [1, 1], strides = [1, 1]} : vector<16x1xf32> to vector<1x1xf32>
    %149 = vector.broadcast %148 : vector<1x1xf32> to vector<32x32xf32>
    %150 = arith.mulf %149, %105 : vector<32x32xf32>
    %151 = math.exp %150 : vector<32x32xf32>
    %c6 = arith.constant 6 : index
    %c0_55 = arith.constant 0 : index
    %c0_56 = arith.constant 0 : index
    %152 = vector.load %arg13[%c6, %c0_55, %c0_56] : memref<16x32x32xf32, #tpu.memory_space<vmem>>, vector<1x32x32xf32>
    %153 = vector.shape_cast %152 : vector<1x32x32xf32> to vector<32x32xf32>
    %154 = vector.shape_cast %151 : vector<32x32xf32> to vector<1x32x32xf32>
    tpu.vector_store %arg13[%c6, %c0_55, %c0_56], %154 {strides = array<i32>} : memref<16x32x32xf32, #tpu.memory_space<vmem>>, vector<1x32x32xf32>,
    %155 = vector.extract_strided_slice %100 {offsets = [7, 0], sizes = [1, 1], strides = [1, 1]} : vector<16x1xf32> to vector<1x1xf32>
    %156 = vector.broadcast %155 : vector<1x1xf32> to vector<32x32xf32>
    %157 = arith.mulf %156, %105 : vector<32x32xf32>
    %158 = math.exp %157 : vector<32x32xf32>
    %c7 = arith.constant 7 : index
    %c0_57 = arith.constant 0 : index
    %c0_58 = arith.constant 0 : index
    %159 = vector.load %arg13[%c7, %c0_57, %c0_58] : memref<16x32x32xf32, #tpu.memory_space<vmem>>, vector<1x32x32xf32>
    %160 = vector.shape_cast %159 : vector<1x32x32xf32> to vector<32x32xf32>
    %161 = vector.shape_cast %158 : vector<32x32xf32> to vector<1x32x32xf32>
    tpu.vector_store %arg13[%c7, %c0_57, %c0_58], %161 {strides = array<i32>} : memref<16x32x32xf32, #tpu.memory_space<vmem>>, vector<1x32x32xf32>,
    %162 = vector.extract_strided_slice %100 {offsets = [8, 0], sizes = [1, 1], strides = [1, 1]} : vector<16x1xf32> to vector<1x1xf32>
    %163 = vector.broadcast %162 : vector<1x1xf32> to vector<32x32xf32>
    %164 = arith.mulf %163, %105 : vector<32x32xf32>
    %165 = math.exp %164 : vector<32x32xf32>
    %c8 = arith.constant 8 : index
    %c0_59 = arith.constant 0 : index
    %c0_60 = arith.constant 0 : index
    %166 = vector.load %arg13[%c8, %c0_59, %c0_60] : memref<16x32x32xf32, #tpu.memory_space<vmem>>, vector<1x32x32xf32>
    %167 = vector.shape_cast %166 : vector<1x32x32xf32> to vector<32x32xf32>
    %168 = vector.shape_cast %165 : vector<32x32xf32> to vector<1x32x32xf32>
    tpu.vector_store %arg13[%c8, %c0_59, %c0_60], %168 {strides = array<i32>} : memref<16x32x32xf32, #tpu.memory_space<vmem>>, vector<1x32x32xf32>,
    %169 = vector.extract_strided_slice %100 {offsets = [9, 0], sizes = [1, 1], strides = [1, 1]} : vector<16x1xf32> to vector<1x1xf32>
    %170 = vector.broadcast %169 : vector<1x1xf32> to vector<32x32xf32>
    %171 = arith.mulf %170, %105 : vector<32x32xf32>
    %172 = math.exp %171 : vector<32x32xf32>
    %c9 = arith.constant 9 : index
    %c0_61 = arith.constant 0 : index
    %c0_62 = arith.constant 0 : index
    %173 = vector.load %arg13[%c9, %c0_61, %c0_62] : memref<16x32x32xf32, #tpu.memory_space<vmem>>, vector<1x32x32xf32>
    %174 = vector.shape_cast %173 : vector<1x32x32xf32> to vector<32x32xf32>
    %175 = vector.shape_cast %172 : vector<32x32xf32> to vector<1x32x32xf32>
    tpu.vector_store %arg13[%c9, %c0_61, %c0_62], %175 {strides = array<i32>} : memref<16x32x32xf32, #tpu.memory_space<vmem>>, vector<1x32x32xf32>,
    %176 = vector.extract_strided_slice %100 {offsets = [10, 0], sizes = [1, 1], strides = [1, 1]} : vector<16x1xf32> to vector<1x1xf32>
    %177 = vector.broadcast %176 : vector<1x1xf32> to vector<32x32xf32>
    %178 = arith.mulf %177, %105 : vector<32x32xf32>
    %179 = math.exp %178 : vector<32x32xf32>
    %c10 = arith.constant 10 : index
    %c0_63 = arith.constant 0 : index
    %c0_64 = arith.constant 0 : index
    %180 = vector.load %arg13[%c10, %c0_63, %c0_64] : memref<16x32x32xf32, #tpu.memory_space<vmem>>, vector<1x32x32xf32>
    %181 = vector.shape_cast %180 : vector<1x32x32xf32> to vector<32x32xf32>
    %182 = vector.shape_cast %179 : vector<32x32xf32> to vector<1x32x32xf32>
    tpu.vector_store %arg13[%c10, %c0_63, %c0_64], %182 {strides = array<i32>} : memref<16x32x32xf32, #tpu.memory_space<vmem>>, vector<1x32x32xf32>,
    %183 = vector.extract_strided_slice %100 {offsets = [11, 0], sizes = [1, 1], strides = [1, 1]} : vector<16x1xf32> to vector<1x1xf32>
    %184 = vector.broadcast %183 : vector<1x1xf32> to vector<32x32xf32>
    %185 = arith.mulf %184, %105 : vector<32x32xf32>
    %186 = math.exp %185 : vector<32x32xf32>
    %c11 = arith.constant 11 : index
    %c0_65 = arith.constant 0 : index
    %c0_66 = arith.constant 0 : index
    %187 = vector.load %arg13[%c11, %c0_65, %c0_66] : memref<16x32x32xf32, #tpu.memory_space<vmem>>, vector<1x32x32xf32>
    %188 = vector.shape_cast %187 : vector<1x32x32xf32> to vector<32x32xf32>
    %189 = vector.shape_cast %186 : vector<32x32xf32> to vector<1x32x32xf32>
    tpu.vector_store %arg13[%c11, %c0_65, %c0_66], %189 {strides = array<i32>} : memref<16x32x32xf32, #tpu.memory_space<vmem>>, vector<1x32x32xf32>,
    %190 = vector.extract_strided_slice %100 {offsets = [12, 0], sizes = [1, 1], strides = [1, 1]} : vector<16x1xf32> to vector<1x1xf32>
    %191 = vector.broadcast %190 : vector<1x1xf32> to vector<32x32xf32>
    %192 = arith.mulf %191, %105 : vector<32x32xf32>
    %193 = math.exp %192 : vector<32x32xf32>
    %c12 = arith.constant 12 : index
    %c0_67 = arith.constant 0 : index
    %c0_68 = arith.constant 0 : index
    %194 = vector.load %arg13[%c12, %c0_67, %c0_68] : memref<16x32x32xf32, #tpu.memory_space<vmem>>, vector<1x32x32xf32>
    %195 = vector.shape_cast %194 : vector<1x32x32xf32> to vector<32x32xf32>
    %196 = vector.shape_cast %193 : vector<32x32xf32> to vector<1x32x32xf32>
    tpu.vector_store %arg13[%c12, %c0_67, %c0_68], %196 {strides = array<i32>} : memref<16x32x32xf32, #tpu.memory_space<vmem>>, vector<1x32x32xf32>,
    %197 = vector.extract_strided_slice %100 {offsets = [13, 0], sizes = [1, 1], strides = [1, 1]} : vector<16x1xf32> to vector<1x1xf32>
    %198 = vector.broadcast %197 : vector<1x1xf32> to vector<32x32xf32>
    %199 = arith.mulf %198, %105 : vector<32x32xf32>
    %200 = math.exp %199 : vector<32x32xf32>
    %c13 = arith.constant 13 : index
    %c0_69 = arith.constant 0 : index
    %c0_70 = arith.constant 0 : index
    %201 = vector.load %arg13[%c13, %c0_69, %c0_70] : memref<16x32x32xf32, #tpu.memory_space<vmem>>, vector<1x32x32xf32>
    %202 = vector.shape_cast %201 : vector<1x32x32xf32> to vector<32x32xf32>
    %203 = vector.shape_cast %200 : vector<32x32xf32> to vector<1x32x32xf32>
    tpu.vector_store %arg13[%c13, %c0_69, %c0_70], %203 {strides = array<i32>} : memref<16x32x32xf32, #tpu.memory_space<vmem>>, vector<1x32x32xf32>,
    %204 = vector.extract_strided_slice %100 {offsets = [14, 0], sizes = [1, 1], strides = [1, 1]} : vector<16x1xf32> to vector<1x1xf32>
    %205 = vector.broadcast %204 : vector<1x1xf32> to vector<32x32xf32>
    %206 = arith.mulf %205, %105 : vector<32x32xf32>
    %207 = math.exp %206 : vector<32x32xf32>
    %c14 = arith.constant 14 : index
    %c0_71 = arith.constant 0 : index
    %c0_72 = arith.constant 0 : index
    %208 = vector.load %arg13[%c14, %c0_71, %c0_72] : memref<16x32x32xf32, #tpu.memory_space<vmem>>, vector<1x32x32xf32>
    %209 = vector.shape_cast %208 : vector<1x32x32xf32> to vector<32x32xf32>
    %210 = vector.shape_cast %207 : vector<32x32xf32> to vector<1x32x32xf32>
    tpu.vector_store %arg13[%c14, %c0_71, %c0_72], %210 {strides = array<i32>} : memref<16x32x32xf32, #tpu.memory_space<vmem>>, vector<1x32x32xf32>,
    %211 = vector.extract_strided_slice %100 {offsets = [15, 0], sizes = [1, 1], strides = [1, 1]} : vector<16x1xf32> to vector<1x1xf32>
    %212 = vector.broadcast %211 : vector<1x1xf32> to vector<32x32xf32>
    %213 = arith.mulf %212, %105 : vector<32x32xf32>
    %214 = math.exp %213 : vector<32x32xf32>
    %c15 = arith.constant 15 : index
    %c0_73 = arith.constant 0 : index
    %c0_74 = arith.constant 0 : index
    %215 = vector.load %arg13[%c15, %c0_73, %c0_74] : memref<16x32x32xf32, #tpu.memory_space<vmem>>, vector<1x32x32xf32>
    %216 = vector.shape_cast %215 : vector<1x32x32xf32> to vector<32x32xf32>
    %217 = vector.shape_cast %214 : vector<32x32xf32> to vector<1x32x32xf32>
    tpu.vector_store %arg13[%c15, %c0_73, %c0_74], %217 {strides = array<i32>} : memref<16x32x32xf32, #tpu.memory_space<vmem>>, vector<1x32x32xf32>,
    %218 = vector.broadcast %104 : vector<16x1xf32> to vector<16x32xf32>
    %219 = arith.mulf %80, %218 : vector<16x32xf32>
    %cst_75 = arith.constant 0.000000e+00 : f32
    %220 = vector.broadcast %cst_75 : f32 to vector<16x32xf32>
    %cst_76 = arith.constant 0.000000e+00 : f32
    %221 = vector.broadcast %cst_76 : f32 to vector<1x32xf32>
    %cst_77 = arith.constant 0.000000e+00 : f32
    %222 = vector.broadcast %cst_77 : f32 to vector<1x32xf32>
    %c0_78 = arith.constant 0 : index
    %c0_79 = arith.constant 0 : index
    %c0_80 = arith.constant 0 : index
    %223 = vector.load %arg13[%c0_78, %c0_79, %c0_80] : memref<16x32x32xf32, #tpu.memory_space<vmem>>, vector<1x32x32xf32>
    %224 = vector.shape_cast %223 : vector<1x32x32xf32> to vector<32x32xf32>
    %cst_81 = arith.constant dense<0.000000e+00> : vector<1x32xf32>
    %225 = tpu.matmul %221, %224, %cst_81 {dimension_numbers = #tpu.dot_dimension_numbers<[1], [0], [0], [1], [0, 0, 1, 1], [], []>} : vector<1x32xf32>, vector<32x32xf32>, vector<1x32xf32> -> vector<1x32xf32>
    %226 = vector.extract_strided_slice %219 {offsets = [0, 0], sizes = [1, 32], strides = [1, 1]} : vector<16x32xf32> to vector<1x32xf32>
    %227 = arith.addf %225, %226 : vector<1x32xf32>
    %228 = arith.mulf %227, %227 : vector<1x32xf32>
    %cst_82 = arith.constant dense<0.000000e+00> : vector<1xf32>
    %229 = vector.multi_reduction <add>, %228, %cst_82 [1] : vector<1x32xf32> to vector<1xf32>
    %230 = vector.shape_cast %229 : vector<1xf32> to vector<1x1xf32>
    %231 = math.sqrt %230 : vector<1x1xf32>
    %cst_83 = arith.constant 9.99999997E-7 : f32
    %232 = vector.broadcast %cst_83 : f32 to vector<1x1xf32>
    %233 = arith.addf %231, %232 : vector<1x1xf32>
    %234 = tpu.reciprocal %233 {approx = true} : vector<1x1xf32> -> vector<1x1xf32>
    %235 = vector.broadcast %234 : vector<1x1xf32> to vector<1x32xf32>
    %236 = arith.mulf %227, %235 : vector<1x32xf32>
    %c0_i32_84 = arith.constant 0 : i32
    %237 = vector.broadcast %c0_i32_84 : i32 to vector<16x1xi32>
    %238 = arith.cmpi eq, %8, %237 : vector<16x1xi32>
    %cst_85 = arith.constant 1.000000e+00 : f32
    %cst_86 = arith.constant 0.000000e+00 : f32
    %239 = vector.broadcast %cst_85 : f32 to vector<16x1xf32>
    %240 = vector.broadcast %cst_86 : f32 to vector<16x1xf32>
    %241 = arith.select %238, %239, %240 : vector<16x1xi1>, vector<16x1xf32>
    %242 = vector.broadcast %241 : vector<16x1xf32> to vector<16x32xf32>
    %243 = vector.broadcast %236 : vector<1x32xf32> to vector<16x32xf32>
    %244 = arith.mulf %242, %243 : vector<16x32xf32>
    %245 = arith.addf %220, %244 : vector<16x32xf32>
    %c8_87 = arith.constant 8 : index
    %c0_88 = arith.constant 0 : index
    %c0_89 = arith.constant 0 : index
    %246 = vector.load %arg13[%c8_87, %c0_88, %c0_89] : memref<16x32x32xf32, #tpu.memory_space<vmem>>, vector<1x32x32xf32>
    %247 = vector.shape_cast %246 : vector<1x32x32xf32> to vector<32x32xf32>
    %cst_90 = arith.constant dense<0.000000e+00> : vector<1x32xf32>
    %248 = tpu.matmul %222, %247, %cst_90 {dimension_numbers = #tpu.dot_dimension_numbers<[1], [0], [0], [1], [0, 0, 1, 1], [], []>} : vector<1x32xf32>, vector<32x32xf32>, vector<1x32xf32> -> vector<1x32xf32>
    %249 = vector.extract_strided_slice %219 {offsets = [8, 0], sizes = [1, 32], strides = [1, 1]} : vector<16x32xf32> to vector<1x32xf32>
    %250 = arith.addf %248, %249 : vector<1x32xf32>
    %251 = arith.mulf %250, %250 : vector<1x32xf32>
    %cst_91 = arith.constant dense<0.000000e+00> : vector<1xf32>
    %252 = vector.multi_reduction <add>, %251, %cst_91 [1] : vector<1x32xf32> to vector<1xf32>
    %253 = vector.shape_cast %252 : vector<1xf32> to vector<1x1xf32>
    %254 = math.sqrt %253 : vector<1x1xf32>
    %cst_92 = arith.constant 9.99999997E-7 : f32
    %255 = vector.broadcast %cst_92 : f32 to vector<1x1xf32>
    %256 = arith.addf %254, %255 : vector<1x1xf32>
    %257 = tpu.reciprocal %256 {approx = true} : vector<1x1xf32> -> vector<1x1xf32>
    %258 = vector.broadcast %257 : vector<1x1xf32> to vector<1x32xf32>
    %259 = arith.mulf %250, %258 : vector<1x32xf32>
    %c8_i32_93 = arith.constant 8 : i32
    %260 = vector.broadcast %c8_i32_93 : i32 to vector<16x1xi32>
    %261 = arith.cmpi eq, %8, %260 : vector<16x1xi32>
    %cst_94 = arith.constant 1.000000e+00 : f32
    %cst_95 = arith.constant 0.000000e+00 : f32
    %262 = vector.broadcast %cst_94 : f32 to vector<16x1xf32>
    %263 = vector.broadcast %cst_95 : f32 to vector<16x1xf32>
    %264 = arith.select %261, %262, %263 : vector<16x1xi1>, vector<16x1xf32>
    %265 = vector.broadcast %264 : vector<16x1xf32> to vector<16x32xf32>
    %266 = vector.broadcast %259 : vector<1x32xf32> to vector<16x32xf32>
    %267 = arith.mulf %265, %266 : vector<16x32xf32>
    %268 = arith.addf %245, %267 : vector<16x32xf32>
    %c1_96 = arith.constant 1 : index
    %c0_97 = arith.constant 0 : index
    %c0_98 = arith.constant 0 : index
    %269 = vector.load %arg13[%c1_96, %c0_97, %c0_98] : memref<16x32x32xf32, #tpu.memory_space<vmem>>, vector<1x32x32xf32>
    %270 = vector.shape_cast %269 : vector<1x32x32xf32> to vector<32x32xf32>
    %cst_99 = arith.constant dense<0.000000e+00> : vector<1x32xf32>
    %271 = tpu.matmul %236, %270, %cst_99 {dimension_numbers = #tpu.dot_dimension_numbers<[1], [0], [0], [1], [0, 0, 1, 1], [], []>} : vector<1x32xf32>, vector<32x32xf32>, vector<1x32xf32> -> vector<1x32xf32>
    %272 = vector.extract_strided_slice %219 {offsets = [1, 0], sizes = [1, 32], strides = [1, 1]} : vector<16x32xf32> to vector<1x32xf32>
    %273 = arith.addf %271, %272 : vector<1x32xf32>
    %274 = arith.mulf %273, %273 : vector<1x32xf32>
    %cst_100 = arith.constant dense<0.000000e+00> : vector<1xf32>
    %275 = vector.multi_reduction <add>, %274, %cst_100 [1] : vector<1x32xf32> to vector<1xf32>
    %276 = vector.shape_cast %275 : vector<1xf32> to vector<1x1xf32>
    %277 = math.sqrt %276 : vector<1x1xf32>
    %cst_101 = arith.constant 9.99999997E-7 : f32
    %278 = vector.broadcast %cst_101 : f32 to vector<1x1xf32>
    %279 = arith.addf %277, %278 : vector<1x1xf32>
    %280 = tpu.reciprocal %279 {approx = true} : vector<1x1xf32> -> vector<1x1xf32>
    %281 = vector.broadcast %280 : vector<1x1xf32> to vector<1x32xf32>
    %282 = arith.mulf %273, %281 : vector<1x32xf32>
    %c1_i32_102 = arith.constant 1 : i32
    %283 = vector.broadcast %c1_i32_102 : i32 to vector<16x1xi32>
    %284 = arith.cmpi eq, %8, %283 : vector<16x1xi32>
    %cst_103 = arith.constant 1.000000e+00 : f32
    %cst_104 = arith.constant 0.000000e+00 : f32
    %285 = vector.broadcast %cst_103 : f32 to vector<16x1xf32>
    %286 = vector.broadcast %cst_104 : f32 to vector<16x1xf32>
    %287 = arith.select %284, %285, %286 : vector<16x1xi1>, vector<16x1xf32>
    %288 = vector.broadcast %287 : vector<16x1xf32> to vector<16x32xf32>
    %289 = vector.broadcast %282 : vector<1x32xf32> to vector<16x32xf32>
    %290 = arith.mulf %288, %289 : vector<16x32xf32>
    %291 = arith.addf %268, %290 : vector<16x32xf32>
    %c9_105 = arith.constant 9 : index
    %c0_106 = arith.constant 0 : index
    %c0_107 = arith.constant 0 : index
    %292 = vector.load %arg13[%c9_105, %c0_106, %c0_107] : memref<16x32x32xf32, #tpu.memory_space<vmem>>, vector<1x32x32xf32>
    %293 = vector.shape_cast %292 : vector<1x32x32xf32> to vector<32x32xf32>
    %cst_108 = arith.constant dense<0.000000e+00> : vector<1x32xf32>
    %294 = tpu.matmul %259, %293, %cst_108 {dimension_numbers = #tpu.dot_dimension_numbers<[1], [0], [0], [1], [0, 0, 1, 1], [], []>} : vector<1x32xf32>, vector<32x32xf32>, vector<1x32xf32> -> vector<1x32xf32>
    %295 = vector.extract_strided_slice %219 {offsets = [9, 0], sizes = [1, 32], strides = [1, 1]} : vector<16x32xf32> to vector<1x32xf32>
    %296 = arith.addf %294, %295 : vector<1x32xf32>
    %297 = arith.mulf %296, %296 : vector<1x32xf32>
    %cst_109 = arith.constant dense<0.000000e+00> : vector<1xf32>
    %298 = vector.multi_reduction <add>, %297, %cst_109 [1] : vector<1x32xf32> to vector<1xf32>
    %299 = vector.shape_cast %298 : vector<1xf32> to vector<1x1xf32>
    %300 = math.sqrt %299 : vector<1x1xf32>
    %cst_110 = arith.constant 9.99999997E-7 : f32
    %301 = vector.broadcast %cst_110 : f32 to vector<1x1xf32>
    %302 = arith.addf %300, %301 : vector<1x1xf32>
    %303 = tpu.reciprocal %302 {approx = true} : vector<1x1xf32> -> vector<1x1xf32>
    %304 = vector.broadcast %303 : vector<1x1xf32> to vector<1x32xf32>
    %305 = arith.mulf %296, %304 : vector<1x32xf32>
    %c9_i32 = arith.constant 9 : i32
    %306 = vector.broadcast %c9_i32 : i32 to vector<16x1xi32>
    %307 = arith.cmpi eq, %8, %306 : vector<16x1xi32>
    %cst_111 = arith.constant 1.000000e+00 : f32
    %cst_112 = arith.constant 0.000000e+00 : f32
    %308 = vector.broadcast %cst_111 : f32 to vector<16x1xf32>
    %309 = vector.broadcast %cst_112 : f32 to vector<16x1xf32>
    %310 = arith.select %307, %308, %309 : vector<16x1xi1>, vector<16x1xf32>
    %311 = vector.broadcast %310 : vector<16x1xf32> to vector<16x32xf32>
    %312 = vector.broadcast %305 : vector<1x32xf32> to vector<16x32xf32>
    %313 = arith.mulf %311, %312 : vector<16x32xf32>
    %314 = arith.addf %291, %313 : vector<16x32xf32>
    %c2_113 = arith.constant 2 : index
    %c0_114 = arith.constant 0 : index
    %c0_115 = arith.constant 0 : index
    %315 = vector.load %arg13[%c2_113, %c0_114, %c0_115] : memref<16x32x32xf32, #tpu.memory_space<vmem>>, vector<1x32x32xf32>
    %316 = vector.shape_cast %315 : vector<1x32x32xf32> to vector<32x32xf32>
    %cst_116 = arith.constant dense<0.000000e+00> : vector<1x32xf32>
    %317 = tpu.matmul %282, %316, %cst_116 {dimension_numbers = #tpu.dot_dimension_numbers<[1], [0], [0], [1], [0, 0, 1, 1], [], []>} : vector<1x32xf32>, vector<32x32xf32>, vector<1x32xf32> -> vector<1x32xf32>
    %318 = vector.extract_strided_slice %219 {offsets = [2, 0], sizes = [1, 32], strides = [1, 1]} : vector<16x32xf32> to vector<1x32xf32>
    %319 = arith.addf %317, %318 : vector<1x32xf32>
    %320 = arith.mulf %319, %319 : vector<1x32xf32>
    %cst_117 = arith.constant dense<0.000000e+00> : vector<1xf32>
    %321 = vector.multi_reduction <add>, %320, %cst_117 [1] : vector<1x32xf32> to vector<1xf32>
    %322 = vector.shape_cast %321 : vector<1xf32> to vector<1x1xf32>
    %323 = math.sqrt %322 : vector<1x1xf32>
    %cst_118 = arith.constant 9.99999997E-7 : f32
    %324 = vector.broadcast %cst_118 : f32 to vector<1x1xf32>
    %325 = arith.addf %323, %324 : vector<1x1xf32>
    %326 = tpu.reciprocal %325 {approx = true} : vector<1x1xf32> -> vector<1x1xf32>
    %327 = vector.broadcast %326 : vector<1x1xf32> to vector<1x32xf32>
    %328 = arith.mulf %319, %327 : vector<1x32xf32>
    %c2_i32_119 = arith.constant 2 : i32
    %329 = vector.broadcast %c2_i32_119 : i32 to vector<16x1xi32>
    %330 = arith.cmpi eq, %8, %329 : vector<16x1xi32>
    %cst_120 = arith.constant 1.000000e+00 : f32
    %cst_121 = arith.constant 0.000000e+00 : f32
    %331 = vector.broadcast %cst_120 : f32 to vector<16x1xf32>
    %332 = vector.broadcast %cst_121 : f32 to vector<16x1xf32>
    %333 = arith.select %330, %331, %332 : vector<16x1xi1>, vector<16x1xf32>
    %334 = vector.broadcast %333 : vector<16x1xf32> to vector<16x32xf32>
    %335 = vector.broadcast %328 : vector<1x32xf32> to vector<16x32xf32>
    %336 = arith.mulf %334, %335 : vector<16x32xf32>
    %337 = arith.addf %314, %336 : vector<16x32xf32>
    %c10_122 = arith.constant 10 : index
    %c0_123 = arith.constant 0 : index
    %c0_124 = arith.constant 0 : index
    %338 = vector.load %arg13[%c10_122, %c0_123, %c0_124] : memref<16x32x32xf32, #tpu.memory_space<vmem>>, vector<1x32x32xf32>
    %339 = vector.shape_cast %338 : vector<1x32x32xf32> to vector<32x32xf32>
    %cst_125 = arith.constant dense<0.000000e+00> : vector<1x32xf32>
    %340 = tpu.matmul %305, %339, %cst_125 {dimension_numbers = #tpu.dot_dimension_numbers<[1], [0], [0], [1], [0, 0, 1, 1], [], []>} : vector<1x32xf32>, vector<32x32xf32>, vector<1x32xf32> -> vector<1x32xf32>
    %341 = vector.extract_strided_slice %219 {offsets = [10, 0], sizes = [1, 32], strides = [1, 1]} : vector<16x32xf32> to vector<1x32xf32>
    %342 = arith.addf %340, %341 : vector<1x32xf32>
    %343 = arith.mulf %342, %342 : vector<1x32xf32>
    %cst_126 = arith.constant dense<0.000000e+00> : vector<1xf32>
    %344 = vector.multi_reduction <add>, %343, %cst_126 [1] : vector<1x32xf32> to vector<1xf32>
    %345 = vector.shape_cast %344 : vector<1xf32> to vector<1x1xf32>
    %346 = math.sqrt %345 : vector<1x1xf32>
    %cst_127 = arith.constant 9.99999997E-7 : f32
    %347 = vector.broadcast %cst_127 : f32 to vector<1x1xf32>
    %348 = arith.addf %346, %347 : vector<1x1xf32>
    %349 = tpu.reciprocal %348 {approx = true} : vector<1x1xf32> -> vector<1x1xf32>
    %350 = vector.broadcast %349 : vector<1x1xf32> to vector<1x32xf32>
    %351 = arith.mulf %342, %350 : vector<1x32xf32>
    %c10_i32 = arith.constant 10 : i32
    %352 = vector.broadcast %c10_i32 : i32 to vector<16x1xi32>
    %353 = arith.cmpi eq, %8, %352 : vector<16x1xi32>
    %cst_128 = arith.constant 1.000000e+00 : f32
    %cst_129 = arith.constant 0.000000e+00 : f32
    %354 = vector.broadcast %cst_128 : f32 to vector<16x1xf32>
    %355 = vector.broadcast %cst_129 : f32 to vector<16x1xf32>
    %356 = arith.select %353, %354, %355 : vector<16x1xi1>, vector<16x1xf32>
    %357 = vector.broadcast %356 : vector<16x1xf32> to vector<16x32xf32>
    %358 = vector.broadcast %351 : vector<1x32xf32> to vector<16x32xf32>
    %359 = arith.mulf %357, %358 : vector<16x32xf32>
    %360 = arith.addf %337, %359 : vector<16x32xf32>
    %c3_130 = arith.constant 3 : index
    %c0_131 = arith.constant 0 : index
    %c0_132 = arith.constant 0 : index
    %361 = vector.load %arg13[%c3_130, %c0_131, %c0_132] : memref<16x32x32xf32, #tpu.memory_space<vmem>>, vector<1x32x32xf32>
    %362 = vector.shape_cast %361 : vector<1x32x32xf32> to vector<32x32xf32>
    %cst_133 = arith.constant dense<0.000000e+00> : vector<1x32xf32>
    %363 = tpu.matmul %328, %362, %cst_133 {dimension_numbers = #tpu.dot_dimension_numbers<[1], [0], [0], [1], [0, 0, 1, 1], [], []>} : vector<1x32xf32>, vector<32x32xf32>, vector<1x32xf32> -> vector<1x32xf32>
    %364 = vector.extract_strided_slice %219 {offsets = [3, 0], sizes = [1, 32], strides = [1, 1]} : vector<16x32xf32> to vector<1x32xf32>
    %365 = arith.addf %363, %364 : vector<1x32xf32>
    %366 = arith.mulf %365, %365 : vector<1x32xf32>
    %cst_134 = arith.constant dense<0.000000e+00> : vector<1xf32>
    %367 = vector.multi_reduction <add>, %366, %cst_134 [1] : vector<1x32xf32> to vector<1xf32>
    %368 = vector.shape_cast %367 : vector<1xf32> to vector<1x1xf32>
    %369 = math.sqrt %368 : vector<1x1xf32>
    %cst_135 = arith.constant 9.99999997E-7 : f32
    %370 = vector.broadcast %cst_135 : f32 to vector<1x1xf32>
    %371 = arith.addf %369, %370 : vector<1x1xf32>
    %372 = tpu.reciprocal %371 {approx = true} : vector<1x1xf32> -> vector<1x1xf32>
    %373 = vector.broadcast %372 : vector<1x1xf32> to vector<1x32xf32>
    %374 = arith.mulf %365, %373 : vector<1x32xf32>
    %c3_i32_136 = arith.constant 3 : i32
    %375 = vector.broadcast %c3_i32_136 : i32 to vector<16x1xi32>
    %376 = arith.cmpi eq, %8, %375 : vector<16x1xi32>
    %cst_137 = arith.constant 1.000000e+00 : f32
    %cst_138 = arith.constant 0.000000e+00 : f32
    %377 = vector.broadcast %cst_137 : f32 to vector<16x1xf32>
    %378 = vector.broadcast %cst_138 : f32 to vector<16x1xf32>
    %379 = arith.select %376, %377, %378 : vector<16x1xi1>, vector<16x1xf32>
    %380 = vector.broadcast %379 : vector<16x1xf32> to vector<16x32xf32>
    %381 = vector.broadcast %374 : vector<1x32xf32> to vector<16x32xf32>
    %382 = arith.mulf %380, %381 : vector<16x32xf32>
    %383 = arith.addf %360, %382 : vector<16x32xf32>
    %c11_139 = arith.constant 11 : index
    %c0_140 = arith.constant 0 : index
    %c0_141 = arith.constant 0 : index
    %384 = vector.load %arg13[%c11_139, %c0_140, %c0_141] : memref<16x32x32xf32, #tpu.memory_space<vmem>>, vector<1x32x32xf32>
    %385 = vector.shape_cast %384 : vector<1x32x32xf32> to vector<32x32xf32>
    %cst_142 = arith.constant dense<0.000000e+00> : vector<1x32xf32>
    %386 = tpu.matmul %351, %385, %cst_142 {dimension_numbers = #tpu.dot_dimension_numbers<[1], [0], [0], [1], [0, 0, 1, 1], [], []>} : vector<1x32xf32>, vector<32x32xf32>, vector<1x32xf32> -> vector<1x32xf32>
    %387 = vector.extract_strided_slice %219 {offsets = [11, 0], sizes = [1, 32], strides = [1, 1]} : vector<16x32xf32> to vector<1x32xf32>
    %388 = arith.addf %386, %387 : vector<1x32xf32>
    %389 = arith.mulf %388, %388 : vector<1x32xf32>
    %cst_143 = arith.constant dense<0.000000e+00> : vector<1xf32>
    %390 = vector.multi_reduction <add>, %389, %cst_143 [1] : vector<1x32xf32> to vector<1xf32>
    %391 = vector.shape_cast %390 : vector<1xf32> to vector<1x1xf32>
    %392 = math.sqrt %391 : vector<1x1xf32>
    %cst_144 = arith.constant 9.99999997E-7 : f32
    %393 = vector.broadcast %cst_144 : f32 to vector<1x1xf32>
    %394 = arith.addf %392, %393 : vector<1x1xf32>
    %395 = tpu.reciprocal %394 {approx = true} : vector<1x1xf32> -> vector<1x1xf32>
    %396 = vector.broadcast %395 : vector<1x1xf32> to vector<1x32xf32>
    %397 = arith.mulf %388, %396 : vector<1x32xf32>
    %c11_i32 = arith.constant 11 : i32
    %398 = vector.broadcast %c11_i32 : i32 to vector<16x1xi32>
    %399 = arith.cmpi eq, %8, %398 : vector<16x1xi32>
    %cst_145 = arith.constant 1.000000e+00 : f32
    %cst_146 = arith.constant 0.000000e+00 : f32
    %400 = vector.broadcast %cst_145 : f32 to vector<16x1xf32>
    %401 = vector.broadcast %cst_146 : f32 to vector<16x1xf32>
    %402 = arith.select %399, %400, %401 : vector<16x1xi1>, vector<16x1xf32>
    %403 = vector.broadcast %402 : vector<16x1xf32> to vector<16x32xf32>
    %404 = vector.broadcast %397 : vector<1x32xf32> to vector<16x32xf32>
    %405 = arith.mulf %403, %404 : vector<16x32xf32>
    %406 = arith.addf %383, %405 : vector<16x32xf32>
    %c4_147 = arith.constant 4 : index
    %c0_148 = arith.constant 0 : index
    %c0_149 = arith.constant 0 : index
    %407 = vector.load %arg13[%c4_147, %c0_148, %c0_149] : memref<16x32x32xf32, #tpu.memory_space<vmem>>, vector<1x32x32xf32>
    %408 = vector.shape_cast %407 : vector<1x32x32xf32> to vector<32x32xf32>
    %cst_150 = arith.constant dense<0.000000e+00> : vector<1x32xf32>
    %409 = tpu.matmul %374, %408, %cst_150 {dimension_numbers = #tpu.dot_dimension_numbers<[1], [0], [0], [1], [0, 0, 1, 1], [], []>} : vector<1x32xf32>, vector<32x32xf32>, vector<1x32xf32> -> vector<1x32xf32>
    %410 = vector.extract_strided_slice %219 {offsets = [4, 0], sizes = [1, 32], strides = [1, 1]} : vector<16x32xf32> to vector<1x32xf32>
    %411 = arith.addf %409, %410 : vector<1x32xf32>
    %412 = arith.mulf %411, %411 : vector<1x32xf32>
    %cst_151 = arith.constant dense<0.000000e+00> : vector<1xf32>
    %413 = vector.multi_reduction <add>, %412, %cst_151 [1] : vector<1x32xf32> to vector<1xf32>
    %414 = vector.shape_cast %413 : vector<1xf32> to vector<1x1xf32>
    %415 = math.sqrt %414 : vector<1x1xf32>
    %cst_152 = arith.constant 9.99999997E-7 : f32
    %416 = vector.broadcast %cst_152 : f32 to vector<1x1xf32>
    %417 = arith.addf %415, %416 : vector<1x1xf32>
    %418 = tpu.reciprocal %417 {approx = true} : vector<1x1xf32> -> vector<1x1xf32>
    %419 = vector.broadcast %418 : vector<1x1xf32> to vector<1x32xf32>
    %420 = arith.mulf %411, %419 : vector<1x32xf32>
    %c4_i32 = arith.constant 4 : i32
    %421 = vector.broadcast %c4_i32 : i32 to vector<16x1xi32>
    %422 = arith.cmpi eq, %8, %421 : vector<16x1xi32>
    %cst_153 = arith.constant 1.000000e+00 : f32
    %cst_154 = arith.constant 0.000000e+00 : f32
    %423 = vector.broadcast %cst_153 : f32 to vector<16x1xf32>
    %424 = vector.broadcast %cst_154 : f32 to vector<16x1xf32>
    %425 = arith.select %422, %423, %424 : vector<16x1xi1>, vector<16x1xf32>
    %426 = vector.broadcast %425 : vector<16x1xf32> to vector<16x32xf32>
    %427 = vector.broadcast %420 : vector<1x32xf32> to vector<16x32xf32>
    %428 = arith.mulf %426, %427 : vector<16x32xf32>
    %429 = arith.addf %406, %428 : vector<16x32xf32>
    %c12_155 = arith.constant 12 : index
    %c0_156 = arith.constant 0 : index
    %c0_157 = arith.constant 0 : index
    %430 = vector.load %arg13[%c12_155, %c0_156, %c0_157] : memref<16x32x32xf32, #tpu.memory_space<vmem>>, vector<1x32x32xf32>
    %431 = vector.shape_cast %430 : vector<1x32x32xf32> to vector<32x32xf32>
    %cst_158 = arith.constant dense<0.000000e+00> : vector<1x32xf32>
    %432 = tpu.matmul %397, %431, %cst_158 {dimension_numbers = #tpu.dot_dimension_numbers<[1], [0], [0], [1], [0, 0, 1, 1], [], []>} : vector<1x32xf32>, vector<32x32xf32>, vector<1x32xf32> -> vector<1x32xf32>
    %433 = vector.extract_strided_slice %219 {offsets = [12, 0], sizes = [1, 32], strides = [1, 1]} : vector<16x32xf32> to vector<1x32xf32>
    %434 = arith.addf %432, %433 : vector<1x32xf32>
    %435 = arith.mulf %434, %434 : vector<1x32xf32>
    %cst_159 = arith.constant dense<0.000000e+00> : vector<1xf32>
    %436 = vector.multi_reduction <add>, %435, %cst_159 [1] : vector<1x32xf32> to vector<1xf32>
    %437 = vector.shape_cast %436 : vector<1xf32> to vector<1x1xf32>
    %438 = math.sqrt %437 : vector<1x1xf32>
    %cst_160 = arith.constant 9.99999997E-7 : f32
    %439 = vector.broadcast %cst_160 : f32 to vector<1x1xf32>
    %440 = arith.addf %438, %439 : vector<1x1xf32>
    %441 = tpu.reciprocal %440 {approx = true} : vector<1x1xf32> -> vector<1x1xf32>
    %442 = vector.broadcast %441 : vector<1x1xf32> to vector<1x32xf32>
    %443 = arith.mulf %434, %442 : vector<1x32xf32>
    %c12_i32 = arith.constant 12 : i32
    %444 = vector.broadcast %c12_i32 : i32 to vector<16x1xi32>
    %445 = arith.cmpi eq, %8, %444 : vector<16x1xi32>
    %cst_161 = arith.constant 1.000000e+00 : f32
    %cst_162 = arith.constant 0.000000e+00 : f32
    %446 = vector.broadcast %cst_161 : f32 to vector<16x1xf32>
    %447 = vector.broadcast %cst_162 : f32 to vector<16x1xf32>
    %448 = arith.select %445, %446, %447 : vector<16x1xi1>, vector<16x1xf32>
    %449 = vector.broadcast %448 : vector<16x1xf32> to vector<16x32xf32>
    %450 = vector.broadcast %443 : vector<1x32xf32> to vector<16x32xf32>
    %451 = arith.mulf %449, %450 : vector<16x32xf32>
    %452 = arith.addf %429, %451 : vector<16x32xf32>
    %c5_163 = arith.constant 5 : index
    %c0_164 = arith.constant 0 : index
    %c0_165 = arith.constant 0 : index
    %453 = vector.load %arg13[%c5_163, %c0_164, %c0_165] : memref<16x32x32xf32, #tpu.memory_space<vmem>>, vector<1x32x32xf32>
    %454 = vector.shape_cast %453 : vector<1x32x32xf32> to vector<32x32xf32>
    %cst_166 = arith.constant dense<0.000000e+00> : vector<1x32xf32>
    %455 = tpu.matmul %420, %454, %cst_166 {dimension_numbers = #tpu.dot_dimension_numbers<[1], [0], [0], [1], [0, 0, 1, 1], [], []>} : vector<1x32xf32>, vector<32x32xf32>, vector<1x32xf32> -> vector<1x32xf32>
    %456 = vector.extract_strided_slice %219 {offsets = [5, 0], sizes = [1, 32], strides = [1, 1]} : vector<16x32xf32> to vector<1x32xf32>
    %457 = arith.addf %455, %456 : vector<1x32xf32>
    %458 = arith.mulf %457, %457 : vector<1x32xf32>
    %cst_167 = arith.constant dense<0.000000e+00> : vector<1xf32>
    %459 = vector.multi_reduction <add>, %458, %cst_167 [1] : vector<1x32xf32> to vector<1xf32>
    %460 = vector.shape_cast %459 : vector<1xf32> to vector<1x1xf32>
    %461 = math.sqrt %460 : vector<1x1xf32>
    %cst_168 = arith.constant 9.99999997E-7 : f32
    %462 = vector.broadcast %cst_168 : f32 to vector<1x1xf32>
    %463 = arith.addf %461, %462 : vector<1x1xf32>
    %464 = tpu.reciprocal %463 {approx = true} : vector<1x1xf32> -> vector<1x1xf32>
    %465 = vector.broadcast %464 : vector<1x1xf32> to vector<1x32xf32>
    %466 = arith.mulf %457, %465 : vector<1x32xf32>
    %c5_i32 = arith.constant 5 : i32
    %467 = vector.broadcast %c5_i32 : i32 to vector<16x1xi32>
    %468 = arith.cmpi eq, %8, %467 : vector<16x1xi32>
    %cst_169 = arith.constant 1.000000e+00 : f32
    %cst_170 = arith.constant 0.000000e+00 : f32
    %469 = vector.broadcast %cst_169 : f32 to vector<16x1xf32>
    %470 = vector.broadcast %cst_170 : f32 to vector<16x1xf32>
    %471 = arith.select %468, %469, %470 : vector<16x1xi1>, vector<16x1xf32>
    %472 = vector.broadcast %471 : vector<16x1xf32> to vector<16x32xf32>
    %473 = vector.broadcast %466 : vector<1x32xf32> to vector<16x32xf32>
    %474 = arith.mulf %472, %473 : vector<16x32xf32>
    %475 = arith.addf %452, %474 : vector<16x32xf32>
    %c13_171 = arith.constant 13 : index
    %c0_172 = arith.constant 0 : index
    %c0_173 = arith.constant 0 : index
    %476 = vector.load %arg13[%c13_171, %c0_172, %c0_173] : memref<16x32x32xf32, #tpu.memory_space<vmem>>, vector<1x32x32xf32>
    %477 = vector.shape_cast %476 : vector<1x32x32xf32> to vector<32x32xf32>
    %cst_174 = arith.constant dense<0.000000e+00> : vector<1x32xf32>
    %478 = tpu.matmul %443, %477, %cst_174 {dimension_numbers = #tpu.dot_dimension_numbers<[1], [0], [0], [1], [0, 0, 1, 1], [], []>} : vector<1x32xf32>, vector<32x32xf32>, vector<1x32xf32> -> vector<1x32xf32>
    %479 = vector.extract_strided_slice %219 {offsets = [13, 0], sizes = [1, 32], strides = [1, 1]} : vector<16x32xf32> to vector<1x32xf32>
    %480 = arith.addf %478, %479 : vector<1x32xf32>
    %481 = arith.mulf %480, %480 : vector<1x32xf32>
    %cst_175 = arith.constant dense<0.000000e+00> : vector<1xf32>
    %482 = vector.multi_reduction <add>, %481, %cst_175 [1] : vector<1x32xf32> to vector<1xf32>
    %483 = vector.shape_cast %482 : vector<1xf32> to vector<1x1xf32>
    %484 = math.sqrt %483 : vector<1x1xf32>
    %cst_176 = arith.constant 9.99999997E-7 : f32
    %485 = vector.broadcast %cst_176 : f32 to vector<1x1xf32>
    %486 = arith.addf %484, %485 : vector<1x1xf32>
    %487 = tpu.reciprocal %486 {approx = true} : vector<1x1xf32> -> vector<1x1xf32>
    %488 = vector.broadcast %487 : vector<1x1xf32> to vector<1x32xf32>
    %489 = arith.mulf %480, %488 : vector<1x32xf32>
    %c13_i32 = arith.constant 13 : i32
    %490 = vector.broadcast %c13_i32 : i32 to vector<16x1xi32>
    %491 = arith.cmpi eq, %8, %490 : vector<16x1xi32>
    %cst_177 = arith.constant 1.000000e+00 : f32
    %cst_178 = arith.constant 0.000000e+00 : f32
    %492 = vector.broadcast %cst_177 : f32 to vector<16x1xf32>
    %493 = vector.broadcast %cst_178 : f32 to vector<16x1xf32>
    %494 = arith.select %491, %492, %493 : vector<16x1xi1>, vector<16x1xf32>
    %495 = vector.broadcast %494 : vector<16x1xf32> to vector<16x32xf32>
    %496 = vector.broadcast %489 : vector<1x32xf32> to vector<16x32xf32>
    %497 = arith.mulf %495, %496 : vector<16x32xf32>
    %498 = arith.addf %475, %497 : vector<16x32xf32>
    %c6_179 = arith.constant 6 : index
    %c0_180 = arith.constant 0 : index
    %c0_181 = arith.constant 0 : index
    %499 = vector.load %arg13[%c6_179, %c0_180, %c0_181] : memref<16x32x32xf32, #tpu.memory_space<vmem>>, vector<1x32x32xf32>
    %500 = vector.shape_cast %499 : vector<1x32x32xf32> to vector<32x32xf32>
    %cst_182 = arith.constant dense<0.000000e+00> : vector<1x32xf32>
    %501 = tpu.matmul %466, %500, %cst_182 {dimension_numbers = #tpu.dot_dimension_numbers<[1], [0], [0], [1], [0, 0, 1, 1], [], []>} : vector<1x32xf32>, vector<32x32xf32>, vector<1x32xf32> -> vector<1x32xf32>
    %502 = vector.extract_strided_slice %219 {offsets = [6, 0], sizes = [1, 32], strides = [1, 1]} : vector<16x32xf32> to vector<1x32xf32>
    %503 = arith.addf %501, %502 : vector<1x32xf32>
    %504 = arith.mulf %503, %503 : vector<1x32xf32>
    %cst_183 = arith.constant dense<0.000000e+00> : vector<1xf32>
    %505 = vector.multi_reduction <add>, %504, %cst_183 [1] : vector<1x32xf32> to vector<1xf32>
    %506 = vector.shape_cast %505 : vector<1xf32> to vector<1x1xf32>
    %507 = math.sqrt %506 : vector<1x1xf32>
    %cst_184 = arith.constant 9.99999997E-7 : f32
    %508 = vector.broadcast %cst_184 : f32 to vector<1x1xf32>
    %509 = arith.addf %507, %508 : vector<1x1xf32>
    %510 = tpu.reciprocal %509 {approx = true} : vector<1x1xf32> -> vector<1x1xf32>
    %511 = vector.broadcast %510 : vector<1x1xf32> to vector<1x32xf32>
    %512 = arith.mulf %503, %511 : vector<1x32xf32>
    %c6_i32 = arith.constant 6 : i32
    %513 = vector.broadcast %c6_i32 : i32 to vector<16x1xi32>
    %514 = arith.cmpi eq, %8, %513 : vector<16x1xi32>
    %cst_185 = arith.constant 1.000000e+00 : f32
    %cst_186 = arith.constant 0.000000e+00 : f32
    %515 = vector.broadcast %cst_185 : f32 to vector<16x1xf32>
    %516 = vector.broadcast %cst_186 : f32 to vector<16x1xf32>
    %517 = arith.select %514, %515, %516 : vector<16x1xi1>, vector<16x1xf32>
    %518 = vector.broadcast %517 : vector<16x1xf32> to vector<16x32xf32>
    %519 = vector.broadcast %512 : vector<1x32xf32> to vector<16x32xf32>
    %520 = arith.mulf %518, %519 : vector<16x32xf32>
    %521 = arith.addf %498, %520 : vector<16x32xf32>
    %c14_187 = arith.constant 14 : index
    %c0_188 = arith.constant 0 : index
    %c0_189 = arith.constant 0 : index
    %522 = vector.load %arg13[%c14_187, %c0_188, %c0_189] : memref<16x32x32xf32, #tpu.memory_space<vmem>>, vector<1x32x32xf32>
    %523 = vector.shape_cast %522 : vector<1x32x32xf32> to vector<32x32xf32>
    %cst_190 = arith.constant dense<0.000000e+00> : vector<1x32xf32>
    %524 = tpu.matmul %489, %523, %cst_190 {dimension_numbers = #tpu.dot_dimension_numbers<[1], [0], [0], [1], [0, 0, 1, 1], [], []>} : vector<1x32xf32>, vector<32x32xf32>, vector<1x32xf32> -> vector<1x32xf32>
    %525 = vector.extract_strided_slice %219 {offsets = [14, 0], sizes = [1, 32], strides = [1, 1]} : vector<16x32xf32> to vector<1x32xf32>
    %526 = arith.addf %524, %525 : vector<1x32xf32>
    %527 = arith.mulf %526, %526 : vector<1x32xf32>
    %cst_191 = arith.constant dense<0.000000e+00> : vector<1xf32>
    %528 = vector.multi_reduction <add>, %527, %cst_191 [1] : vector<1x32xf32> to vector<1xf32>
    %529 = vector.shape_cast %528 : vector<1xf32> to vector<1x1xf32>
    %530 = math.sqrt %529 : vector<1x1xf32>
    %cst_192 = arith.constant 9.99999997E-7 : f32
    %531 = vector.broadcast %cst_192 : f32 to vector<1x1xf32>
    %532 = arith.addf %530, %531 : vector<1x1xf32>
    %533 = tpu.reciprocal %532 {approx = true} : vector<1x1xf32> -> vector<1x1xf32>
    %534 = vector.broadcast %533 : vector<1x1xf32> to vector<1x32xf32>
    %535 = arith.mulf %526, %534 : vector<1x32xf32>
    %c14_i32 = arith.constant 14 : i32
    %536 = vector.broadcast %c14_i32 : i32 to vector<16x1xi32>
    %537 = arith.cmpi eq, %8, %536 : vector<16x1xi32>
    %cst_193 = arith.constant 1.000000e+00 : f32
    %cst_194 = arith.constant 0.000000e+00 : f32
    %538 = vector.broadcast %cst_193 : f32 to vector<16x1xf32>
    %539 = vector.broadcast %cst_194 : f32 to vector<16x1xf32>
    %540 = arith.select %537, %538, %539 : vector<16x1xi1>, vector<16x1xf32>
    %541 = vector.broadcast %540 : vector<16x1xf32> to vector<16x32xf32>
    %542 = vector.broadcast %535 : vector<1x32xf32> to vector<16x32xf32>
    %543 = arith.mulf %541, %542 : vector<16x32xf32>
    %544 = arith.addf %521, %543 : vector<16x32xf32>
    %c7_195 = arith.constant 7 : index
    %c0_196 = arith.constant 0 : index
    %c0_197 = arith.constant 0 : index
    %545 = vector.load %arg13[%c7_195, %c0_196, %c0_197] : memref<16x32x32xf32, #tpu.memory_space<vmem>>, vector<1x32x32xf32>
    %546 = vector.shape_cast %545 : vector<1x32x32xf32> to vector<32x32xf32>
    %cst_198 = arith.constant dense<0.000000e+00> : vector<1x32xf32>
    %547 = tpu.matmul %512, %546, %cst_198 {dimension_numbers = #tpu.dot_dimension_numbers<[1], [0], [0], [1], [0, 0, 1, 1], [], []>} : vector<1x32xf32>, vector<32x32xf32>, vector<1x32xf32> -> vector<1x32xf32>
    %548 = vector.extract_strided_slice %219 {offsets = [7, 0], sizes = [1, 32], strides = [1, 1]} : vector<16x32xf32> to vector<1x32xf32>
    %549 = arith.addf %547, %548 : vector<1x32xf32>
    %550 = arith.mulf %549, %549 : vector<1x32xf32>
    %cst_199 = arith.constant dense<0.000000e+00> : vector<1xf32>
    %551 = vector.multi_reduction <add>, %550, %cst_199 [1] : vector<1x32xf32> to vector<1xf32>
    %552 = vector.shape_cast %551 : vector<1xf32> to vector<1x1xf32>
    %553 = math.sqrt %552 : vector<1x1xf32>
    %cst_200 = arith.constant 9.99999997E-7 : f32
    %554 = vector.broadcast %cst_200 : f32 to vector<1x1xf32>
    %555 = arith.addf %553, %554 : vector<1x1xf32>
    %556 = tpu.reciprocal %555 {approx = true} : vector<1x1xf32> -> vector<1x1xf32>
    %557 = vector.broadcast %556 : vector<1x1xf32> to vector<1x32xf32>
    %558 = arith.mulf %549, %557 : vector<1x32xf32>
    %c7_i32 = arith.constant 7 : i32
    %559 = vector.broadcast %c7_i32 : i32 to vector<16x1xi32>
    %560 = arith.cmpi eq, %8, %559 : vector<16x1xi32>
    %cst_201 = arith.constant 1.000000e+00 : f32
    %cst_202 = arith.constant 0.000000e+00 : f32
    %561 = vector.broadcast %cst_201 : f32 to vector<16x1xf32>
    %562 = vector.broadcast %cst_202 : f32 to vector<16x1xf32>
    %563 = arith.select %560, %561, %562 : vector<16x1xi1>, vector<16x1xf32>
    %564 = vector.broadcast %563 : vector<16x1xf32> to vector<16x32xf32>
    %565 = vector.broadcast %558 : vector<1x32xf32> to vector<16x32xf32>
    %566 = arith.mulf %564, %565 : vector<16x32xf32>
    %567 = arith.addf %544, %566 : vector<16x32xf32>
    %c15_203 = arith.constant 15 : index
    %c0_204 = arith.constant 0 : index
    %c0_205 = arith.constant 0 : index
    %568 = vector.load %arg13[%c15_203, %c0_204, %c0_205] : memref<16x32x32xf32, #tpu.memory_space<vmem>>, vector<1x32x32xf32>
    %569 = vector.shape_cast %568 : vector<1x32x32xf32> to vector<32x32xf32>
    %cst_206 = arith.constant dense<0.000000e+00> : vector<1x32xf32>
    %570 = tpu.matmul %535, %569, %cst_206 {dimension_numbers = #tpu.dot_dimension_numbers<[1], [0], [0], [1], [0, 0, 1, 1], [], []>} : vector<1x32xf32>, vector<32x32xf32>, vector<1x32xf32> -> vector<1x32xf32>
    %571 = vector.extract_strided_slice %219 {offsets = [15, 0], sizes = [1, 32], strides = [1, 1]} : vector<16x32xf32> to vector<1x32xf32>
    %572 = arith.addf %570, %571 : vector<1x32xf32>
    %573 = arith.mulf %572, %572 : vector<1x32xf32>
    %cst_207 = arith.constant dense<0.000000e+00> : vector<1xf32>
    %574 = vector.multi_reduction <add>, %573, %cst_207 [1] : vector<1x32xf32> to vector<1xf32>
    %575 = vector.shape_cast %574 : vector<1xf32> to vector<1x1xf32>
    %576 = math.sqrt %575 : vector<1x1xf32>
    %cst_208 = arith.constant 9.99999997E-7 : f32
    %577 = vector.broadcast %cst_208 : f32 to vector<1x1xf32>
    %578 = arith.addf %576, %577 : vector<1x1xf32>
    %579 = tpu.reciprocal %578 {approx = true} : vector<1x1xf32> -> vector<1x1xf32>
    %580 = vector.broadcast %579 : vector<1x1xf32> to vector<1x32xf32>
    %581 = arith.mulf %572, %580 : vector<1x32xf32>
    %c15_i32 = arith.constant 15 : i32
    %582 = vector.broadcast %c15_i32 : i32 to vector<16x1xi32>
    %583 = arith.cmpi eq, %8, %582 : vector<16x1xi32>
    %cst_209 = arith.constant 1.000000e+00 : f32
    %cst_210 = arith.constant 0.000000e+00 : f32
    %584 = vector.broadcast %cst_209 : f32 to vector<16x1xf32>
    %585 = vector.broadcast %cst_210 : f32 to vector<16x1xf32>
    %586 = arith.select %583, %584, %585 : vector<16x1xi1>, vector<16x1xf32>
    %587 = vector.broadcast %586 : vector<16x1xf32> to vector<16x32xf32>
    %588 = vector.broadcast %581 : vector<1x32xf32> to vector<16x32xf32>
    %589 = arith.mulf %587, %588 : vector<16x32xf32>
    %590 = arith.addf %567, %589 : vector<16x32xf32>
    %591 = arith.mulf %81, %590 : vector<16x32xf32>
    %cst_211 = arith.constant dense<0.000000e+00> : vector<16xf32>
    %592 = vector.multi_reduction <add>, %591, %cst_211 [1] : vector<16x32xf32> to vector<16xf32>
    %593 = vector.shape_cast %592 : vector<16xf32> to vector<16x1xf32>
    %594 = vector.broadcast %593 : vector<16x1xf32> to vector<16x32xf32>
    %595 = arith.addf %594, %7 : vector<16x32xf32>
    %c0_212 = arith.constant 0 : index
    %c0_213 = arith.constant 0 : index
    %596 = vector.load %arg9[%c0_212, %c0_213] : memref<32x128xf32, #tpu.memory_space<vmem>>, vector<32x128xf32>
    %cst_214 = arith.constant dense<0.000000e+00> : vector<16x128xf32>
    %597 = tpu.matmul %595, %596, %cst_214 {dimension_numbers = #tpu.dot_dimension_numbers<[1], [0], [0], [1], [0, 0, 1, 1], [], []>, precision = #tpu.contract_precision<fp32>} : vector<16x32xf32>, vector<32x128xf32>, vector<16x128xf32> -> vector<16x128xf32>
    %c0_215 = arith.constant 0 : index
    %c0_216 = arith.constant 0 : index
    %598 = vector.load %arg10[%c0_215, %c0_216] : memref<1x128xf32, #tpu.memory_space<vmem>>, vector<1x128xf32>
    %599 = vector.broadcast %598 : vector<1x128xf32> to vector<16x128xf32>
    %600 = arith.addf %597, %599 : vector<16x128xf32>
    %c0_217 = arith.constant 0 : index
    %c0_218 = arith.constant 0 : index
    %601 = vector.load %arg12[%c0_217, %c0_218] : memref<16x128xf32, #tpu.memory_space<vmem>>, vector<16x128xf32>
    tpu.vector_store %arg12[%c0_217, %c0_218], %600 {strides = array<i32>} : memref<16x128xf32, #tpu.memory_space<vmem>>, vector<16x128xf32>,
    return
  }
}

</mosaic_0001>

<llo_original>
// kernel: tpu_custom_call.1
$region0: #{tpu_custom_call.1}
  #allocation0 [shape = 'u32[]', space=smem, size = 0x4, offset = 0x4, fixed_abs, tag = 'smem constant byte address 0x4 - core index']
  #allocation1 [shape = 'u32[144,128]{1,0:T(1,128)}', space=vmem, size = 0x12000, scoped, tag = 'internal scratch']
  #allocation2 [shape = 'f32[16,32,32]{2,1,0:T(8,128)}', space=vmem, size = 0x40000, scoped, tag = 'scratch operand']
  %s0 = inlined_call_operand.hbm [shape: f32[16,16], index: 0, kind: input, shape index: {}]
  %s1 = inlined_call_operand.hbm [shape: f32[16,64], index: 1, kind: input, shape index: {}]
  %s2 = inlined_call_operand.vmem [shape: f32[1,64], index: 2, kind: input, shape index: {}]
  %s3 = inlined_call_operand.hbm [shape: f32[4,32], index: 3, kind: input, shape index: {}]
  %s4 = inlined_call_operand.vmem [shape: f32[1,32], index: 4, kind: input, shape index: {}]
  %s5 = inlined_call_operand.hbm [shape: f32[32,128], index: 5, kind: input, shape index: {}]
  %s6 = inlined_call_operand.hbm [shape: f32[1,128], index: 6, kind: input, shape index: {}]
  %s7 = inlined_call_operand.hbm [shape: f32[1,32], index: 7, kind: input, shape index: {}]
  %s8 = inlined_call_operand.hbm [shape: f32[1,32], index: 8, kind: input, shape index: {}]
  %s9 = inlined_call_operand.vmem [shape: f32[32,128], index: 9, kind: input, shape index: {}]
  %s10 = inlined_call_operand.vmem [shape: f32[1,128], index: 10, kind: input, shape index: {}]
  %s11 = inlined_call_operand.hbm [shape: f32[32,32], index: 11, kind: input, shape index: {}]
  %s12 = inlined_call_operand.hbm [shape: f32[16,128], index: 12, kind: output, shape index: {}]
  %s13 = sld [smem:[#allocation0]]
  $region90: #{tpu_custom_call.1} parent=0
    _
  %s15 = ssub.s32 1, %s13
  %s16 = scalar_select 0, %s15, %s13
  $region1: #{tpu_custom_call.1} parent=0
    #allocation3 [shape = 'u8[8192]{0}', space=vmem, size = 0x2000, scoped, tag = 'input window, operand 0, single buffered']
    #allocation4 [shape = 's32[1]{0}', space=sflag, size = 0x4, scoped, tag = 'scoped memory for tpu_custom_call.1']
    #allocation5 [shape = 's32[1]{0}', space=sflag, size = 0x4, scoped, tag = 'scoped memory for tpu_custom_call.1']
    #allocation6 [shape = 'u8[8192]{0}', space=vmem, size = 0x2000, scoped, tag = 'input window, operand 1, single buffered']
    #allocation7 [shape = 's32[1]{0}', space=sflag, size = 0x4, scoped, tag = 'scoped memory for tpu_custom_call.1']
    #allocation8 [shape = 'u8[2048]{0}', space=vmem, size = 0x800, scoped, tag = 'input window, operand 3, single buffered']
    #allocation9 [shape = 'u8[16384]{0}', space=vmem, size = 0x4000, scoped, tag = 'input window, operand 5, single buffered']
    #allocation10 [shape = 's32[1]{0}', space=sflag, size = 0x4, scoped, tag = 'scoped memory for tpu_custom_call.1']
    #allocation11 [shape = 'u8[512]{0}', space=vmem, size = 0x400, scoped, tag = 'input window, operand 6, single buffered']
    #allocation12 [shape = 'u8[512]{0}', space=vmem, size = 0x400, scoped, tag = 'input window, operand 7, single buffered']
    #allocation13 [shape = 's32[1]{0}', space=sflag, size = 0x4, scoped, tag = 'scoped memory for tpu_custom_call.1']
    #allocation14 [shape = 'u8[512]{0}', space=vmem, size = 0x400, scoped, tag = 'input window, operand 8, single buffered']
    #allocation15 [shape = 'u8[16384]{0}', space=vmem, size = 0x4000, scoped, tag = 'input window, operand 11, single buffered']
    #allocation16 [shape = 's32[1]{0}', space=sflag, size = 0x4, scoped, tag = 'scoped memory for tpu_custom_call.1']
    #allocation17 [shape = 'u8[8192]{0}', space=vmem, size = 0x2000, scoped, tag = 'output window, operand 0, single buffered']
    %17 = vsyncpa [#allocation4], 0
    %18 = vsyncpa [#allocation7], 0
    %19 = vsyncpa [#allocation10], 0
    %20 = vsyncpa [#allocation13], 0
    %21 = vsyncpa [#allocation16], 0
    %22 = vsyncpa [#allocation5], 0
    // Predicated region
    $region2: #{tpu_custom_call.1} parent=1 // pred_check
      _
    $region3: #{tpu_custom_call.1} parent=1 // pred_check_branch
      %24 = sbr.rel (0) target = $region5
    $region4: #{tpu_custom_call.1} parent=1 // pred_region
      %s26 = ssub.s32 256, 256
      %27 = vsyncadd [#allocation4], %s26
      %s28 = sshll.u32 [#allocation3], 4
      %s29 = int_to_ptr.vmem [resolvable:$true] %s28
      %34 = dma.hbm_to_vmem [thread:$0]  %s0, 256, %s29, [#allocation4], 128, 128, 8
    $region5: #{tpu_custom_call.1} parent=1 // pred_fallthru
      _
    // Predicated region
    $region6: #{tpu_custom_call.1} parent=1 // pred_check
      _
    $region7: #{tpu_custom_call.1} parent=1 // pred_check_branch
      %36 = sbr.rel (0) target = $region9
    $region8: #{tpu_custom_call.1} parent=1 // pred_region
      %s38 = ssub.s32 256, 256
      %39 = vsyncadd [#allocation7], %s38
      %s40 = sshll.u32 [#allocation6], 4
      %s41 = int_to_ptr.vmem [resolvable:$true] %s40
      %46 = dma.hbm_to_vmem [thread:$0]  %s1, 256, %s41, [#allocation7], 128, 128, 8
    $region9: #{tpu_custom_call.1} parent=1 // pred_fallthru
      _
    // Predicated region
    $region10: #{tpu_custom_call.1} parent=1 // pred_check
      _
    $region11: #{tpu_custom_call.1} parent=1 // pred_check_branch
      %48 = sbr.rel (0) target = $region13
    $region12: #{tpu_custom_call.1} parent=1 // pred_region
      _
    $region13: #{tpu_custom_call.1} parent=1 // pred_fallthru
      _
    // Predicated region
    $region14: #{tpu_custom_call.1} parent=1 // pred_check
      _
    $region15: #{tpu_custom_call.1} parent=1 // pred_check_branch
      %50 = sbr.rel (0) target = $region17
    $region16: #{tpu_custom_call.1} parent=1 // pred_region
      %s52 = ssub.s32 64, 64
      %53 = vsyncadd [#allocation7], %s52
      %s55 = sshll.u32 [#allocation8], 4
      %s56 = int_to_ptr.vmem [resolvable:$true] %s55
      %58 = dma.hbm_to_vmem [thread:$0]  %s3, 64, %s56, [#allocation7]
    $region17: #{tpu_custom_call.1} parent=1 // pred_fallthru
      _
    // Predicated region
    $region18: #{tpu_custom_call.1} parent=1 // pred_check
      _
    $region19: #{tpu_custom_call.1} parent=1 // pred_check_branch
      %60 = sbr.rel (0) target = $region21
    $region20: #{tpu_custom_call.1} parent=1 // pred_region
      _
    $region21: #{tpu_custom_call.1} parent=1 // pred_fallthru
      _
    // Predicated region
    $region22: #{tpu_custom_call.1} parent=1 // pred_check
      _
    $region23: #{tpu_custom_call.1} parent=1 // pred_check_branch
      %62 = sbr.rel (0) target = $region25
    $region24: #{tpu_custom_call.1} parent=1 // pred_region
      %s64 = ssub.s32 512, 512
      %65 = vsyncadd [#allocation10], %s64
      %s66 = sshll.u32 [#allocation9], 4
      %s67 = int_to_ptr.vmem [resolvable:$true] %s66
      %72 = dma.hbm_to_vmem [thread:$0]  %s5, 512, %s67, [#allocation10], 128, 128, 8
    $region25: #{tpu_custom_call.1} parent=1 // pred_fallthru
      _
    // Predicated region
    $region26: #{tpu_custom_call.1} parent=1 // pred_check
      _
    $region27: #{tpu_custom_call.1} parent=1 // pred_check_branch
      %74 = sbr.rel (0) target = $region29
    $region28: #{tpu_custom_call.1} parent=1 // pred_region
      %s76 = ssub.s32 16, 16
      %77 = vsyncadd [#allocation10], %s76
      %s79 = sshll.u32 [#allocation11], 4
      %s80 = int_to_ptr.vmem [resolvable:$true] %s79
      %82 = dma.hbm_to_vmem [thread:$0]  %s6, 16, %s80, [#allocation10]
    $region29: #{tpu_custom_call.1} parent=1 // pred_fallthru
      _
    // Predicated region
    $region30: #{tpu_custom_call.1} parent=1 // pred_check
      _
    $region31: #{tpu_custom_call.1} parent=1 // pred_check_branch
      %84 = sbr.rel (0) target = $region33
    $region32: #{tpu_custom_call.1} parent=1 // pred_region
      %s86 = ssub.s32 16, 16
      %87 = vsyncadd [#allocation13], %s86
      %s89 = sshll.u32 [#allocation12], 4
      %s90 = int_to_ptr.vmem [resolvable:$true] %s89
      %92 = dma.hbm_to_vmem [thread:$0]  %s7, 16, %s90, [#allocation13]
    $region33: #{tpu_custom_call.1} parent=1 // pred_fallthru
      _
    // Predicated region
    $region34: #{tpu_custom_call.1} parent=1 // pred_check
      _
    $region35: #{tpu_custom_call.1} parent=1 // pred_check_branch
      %94 = sbr.rel (0) target = $region37
    $region36: #{tpu_custom_call.1} parent=1 // pred_region
      %s96 = ssub.s32 16, 16
      %97 = vsyncadd [#allocation13], %s96
      %s99 = sshll.u32 [#allocation14], 4
      %s100 = int_to_ptr.vmem [resolvable:$true] %s99
      %102 = dma.hbm_to_vmem [thread:$0]  %s8, 16, %s100, [#allocation13]
    $region37: #{tpu_custom_call.1} parent=1 // pred_fallthru
      _
    // Predicated region
    $region38: #{tpu_custom_call.1} parent=1 // pred_check
      _
    $region39: #{tpu_custom_call.1} parent=1 // pred_check_branch
      %104 = sbr.rel (0) target = $region41
    $region40: #{tpu_custom_call.1} parent=1 // pred_region
      _
    $region41: #{tpu_custom_call.1} parent=1 // pred_fallthru
      _
    // Predicated region
    $region42: #{tpu_custom_call.1} parent=1 // pred_check
      _
    $region43: #{tpu_custom_call.1} parent=1 // pred_check_branch
      %106 = sbr.rel (0) target = $region45
    $region44: #{tpu_custom_call.1} parent=1 // pred_region
      _
    $region45: #{tpu_custom_call.1} parent=1 // pred_fallthru
      _
    // Predicated region
    $region46: #{tpu_custom_call.1} parent=1 // pred_check
      _
    $region47: #{tpu_custom_call.1} parent=1 // pred_check_branch
      %108 = sbr.rel (0) target = $region49
    $region48: #{tpu_custom_call.1} parent=1 // pred_region
      %s110 = ssub.s32 512, 512
      %111 = vsyncadd [#allocation16], %s110
      %s112 = sshll.u32 [#allocation15], 4
      %s113 = int_to_ptr.vmem [resolvable:$true] %s112
      %118 = dma.hbm_to_vmem [thread:$0]  %s11, 512, %s113, [#allocation16], 128, 128, 8
    $region49: #{tpu_custom_call.1} parent=1 // pred_fallthru
      _
    // Predicated region
    $region50: #{tpu_custom_call.1} parent=1 // pred_check
      _
    $region51: #{tpu_custom_call.1} parent=1 // pred_check_branch
      %120 = sbr.rel (0) target = $region53
    $region52: #{tpu_custom_call.1} parent=1 // pred_region
      %121 = dma.done [#allocation4], 256
    $region53: #{tpu_custom_call.1} parent=1 // pred_fallthru
      _
    // Predicated region
    $region54: #{tpu_custom_call.1} parent=1 // pred_check
      _
    $region55: #{tpu_custom_call.1} parent=1 // pred_check_branch
      %123 = sbr.rel (0) target = $region57
    $region56: #{tpu_custom_call.1} parent=1 // pred_region
      %124 = dma.done [#allocation7], 256
    $region57: #{tpu_custom_call.1} parent=1 // pred_fallthru
      _
    // Predicated region
    $region58: #{tpu_custom_call.1} parent=1 // pred_check
      _
    $region59: #{tpu_custom_call.1} parent=1 // pred_check_branch
      %126 = sbr.rel (0) target = $region61
    $region60: #{tpu_custom_call.1} parent=1 // pred_region
      %127 = dma.done [#allocation7], 64
    $region61: #{tpu_custom_call.1} parent=1 // pred_fallthru
      _
    // Predicated region
    $region62: #{tpu_custom_call.1} parent=1 // pred_check
      _
    $region63: #{tpu_custom_call.1} parent=1 // pred_check_branch
      %129 = sbr.rel (0) target = $region65
    $region64: #{tpu_custom_call.1} parent=1 // pred_region
      %130 = dma.done [#allocation10], 512
    $region65: #{tpu_custom_call.1} parent=1 // pred_fallthru
      _
    // Predicated region
    $region66: #{tpu_custom_call.1} parent=1 // pred_check
      _
    $region67: #{tpu_custom_call.1} parent=1 // pred_check_branch
      %132 = sbr.rel (0) target = $region69
    $region68: #{tpu_custom_call.1} parent=1 // pred_region
      %133 = dma.done [#allocation10], 16
    $region69: #{tpu_custom_call.1} parent=1 // pred_fallthru
      _
    // Predicated region
    $region70: #{tpu_custom_call.1} parent=1 // pred_check
      _
    $region71: #{tpu_custom_call.1} parent=1 // pred_check_branch
      %135 = sbr.rel (0) target = $region73
    $region72: #{tpu_custom_call.1} parent=1 // pred_region
      %136 = dma.done [#allocation13], 16
    $region73: #{tpu_custom_call.1} parent=1 // pred_fallthru
      _
    // Predicated region
    $region74: #{tpu_custom_call.1} parent=1 // pred_check
      _
    $region75: #{tpu_custom_call.1} parent=1 // pred_check_branch
      %138 = sbr.rel (0) target = $region77
    $region76: #{tpu_custom_call.1} parent=1 // pred_region
      %139 = dma.done [#allocation13], 16
    $region77: #{tpu_custom_call.1} parent=1 // pred_fallthru
      _
    // Predicated region
    $region78: #{tpu_custom_call.1} parent=1 // pred_check
      _
    $region79: #{tpu_custom_call.1} parent=1 // pred_check_branch
      %141 = sbr.rel (0) target = $region81
    $region80: #{tpu_custom_call.1} parent=1 // pred_region
      %142 = dma.done [#allocation16], 512
    $region81: #{tpu_custom_call.1} parent=1 // pred_fallthru
      _
    %v143 = vld [vmem:[#allocation3] sm:$0xff]
    %v144 = vld [vmem:[#allocation3 + $0x8] sm:$0xff]
    %v145 = vld [vmem:[#allocation6] sm:$0xff]
    %v146 = vld [vmem:[#allocation6 + $0x8] sm:$0xff]
    %v147 = vld [vmem:[%s2] sm:$0x1]
    %v149 = vlaneseq
    %v150 = vshrl.u32 %v149, 7
    %v151 = vsub.s32 0, %v150
    %v152 = vrot.slane %v147, %v151
    %vm154 = vcmask 130048
    %v156 = vsel %vm154, %v143, 0
    %v159 = vsel %vm154, %v144, 0
    %161 = vmatprep.subr.mxu0 0.0
    %v162 = vand.u32 %v145, 4294901760
    %163 = vmatpush1.msra.mxu0 %v162
    %164 = vmatprep.subr.mxu0 0.0
    %v165 = vand.u32 %v146, 4294901760
    %166 = vmatpush1.msra.mxu0 %v165
    %167 = vmatprep.subr.mxu0 0.0
    %168 = vmatpush1.msra.mxu0 0.0
    %169 = vmatprep.subr.mxu0 0.0
    %170 = vmatpush1.msra.mxu0 0.0
    %171 = vmatprep.subr.mxu0 0.0
    %172 = vmatpush1.msra.mxu0 0.0
    %173 = vmatprep.subr.mxu0 0.0
    %174 = vmatpush1.msra.mxu0 0.0
    %175 = vmatprep.subr.mxu0 0.0
    %176 = vmatpush1.msra.mxu0 0.0
    %177 = vmatprep.subr.mxu0 0.0
    %178 = vmatpush1.msra.mxu0 0.0
    %179 = vmatprep.subr.mxu0 0.0
    %180 = vmatpush1.msra.mxu0 0.0
    %181 = vmatprep.subr.mxu0 0.0
    %182 = vmatpush1.msra.mxu0 0.0
    %183 = vmatprep.subr.mxu0 0.0
    %184 = vmatpush1.msra.mxu0 0.0
    %185 = vmatprep.subr.mxu0 0.0
    %186 = vmatpush1.msra.mxu0 0.0
    %187 = vmatprep.subr.mxu0 0.0
    %188 = vmatpush1.msra.mxu0 0.0
    %189 = vmatprep.subr.mxu0 0.0
    %190 = vmatpush1.msra.mxu0 0.0
    %191 = vmatprep.subr.mxu0 0.0
    %192 = vmatpush1.msra.mxu0 0.0
    %193 = vmatprep.subr.mxu0 0.0
    %194 = vmatpush1.msra.mxu0 0.0
    %195 = vmatprep.subr.mxu0 0.0
    %196 = vmatpush1.msra.mxu0 0.0
    %197 = vmatprep.subr.mxu0 0.0
    %198 = vmatpush1.msra.mxu0 0.0
    %199 = vmatprep.subr.mxu0 0.0
    %200 = vmatpush1.msra.mxu0 0.0
    %201 = vmatprep.subr.mxu0 0.0
    %202 = vmatpush1.msra.mxu0 0.0
    %203 = vmatprep.subr.mxu0 0.0
    %204 = vmatpush1.msra.mxu0 0.0
    %205 = vmatprep.subr.mxu0 0.0
    %206 = vmatpush1.msra.mxu0 0.0
    %207 = vmatprep.subr.mxu0 0.0
    %208 = vmatpush1.msra.mxu0 0.0
    %209 = vmatprep.subr.mxu0 0.0
    %210 = vmatpush1.msra.mxu0 0.0
    %211 = vmatprep.subr.mxu0 0.0
    %212 = vmatpush1.msra.mxu0 0.0
    %213 = vmatprep.subr.mxu0 0.0
    %214 = vmatpush1.msra.mxu0 0.0
    %215 = vmatprep.subr.mxu0 0.0
    %216 = vmatpush1.msra.mxu0 0.0
    %217 = vmatprep.subr.mxu0 0.0
    %218 = vmatpush1.msra.mxu0 0.0
    %219 = vmatprep.subr.mxu0 0.0
    %220 = vmatpush1.msra.mxu0 0.0
    %221 = vmatprep.subr.mxu0 0.0
    %222 = vmatpush1.msra.mxu0 0.0
    %223 = vmatprep.subr.mxu0 0.0
    %224 = vmatpush1.msra.mxu0 0.0
    %225 = vmatprep.subr.mxu0 0.0
    %226 = vmatpush1.msra.mxu0 0.0
    %227 = vmatprep.mubr.f32.mxu0 0.0
    %v228 = vand.u32 %v156, 4294901760
    %v229 = vsub.f32 %v156, %v228
    %v230 = vand.u32 %v229, 4294901760
    %v231 = vsub.f32 %v229, %v230
    %v232 = vand.u32 %v231, 4294901760
    %233 = vmatmul.mubr.f32.gmra.mrb[0].mxu0 %v232
    %v234 = vpop.f32.mrb[0].mxu0
    %v235 = vadd.f32 %v152, %v234
    %v236 = vpop.f32.mrb[0].mxu0
    %237 = vmatprep.mubr.f32.mxu0 0.0
    %v238 = vand.u32 %v159, 4294901760
    %v239 = vsub.f32 %v159, %v238
    %v240 = vand.u32 %v239, 4294901760
    %v241 = vsub.f32 %v239, %v240
    %v242 = vand.u32 %v241, 4294901760
    %243 = vmatmul.mubr.f32.gmra.mrb[0].mxu0 %v242
    %v244 = vpop.f32.mrb[0].mxu0
    %v245 = vadd.f32 %v152, %v244
    %v246 = vpop.f32.mrb[0].mxu0
    %247 = vdwg.mxu0
    %248 = vmatprep.subr.mxu0 0.0
    %v249 = vand.u32 %v145, 4294901760
    %v250 = vsub.f32 %v145, %v249
    %v251 = vand.u32 %v250, 4294901760
    %v252 = vsub.f32 %v250, %v251
    %v253 = vand.u32 %v252, 4294901760
    %254 = vmatpush1.msra.mxu0 %v253
    %255 = vmatprep.subr.mxu0 0.0
    %v256 = vand.u32 %v146, 4294901760
    %v257 = vsub.f32 %v146, %v256
    %v258 = vand.u32 %v257, 4294901760
    %v259 = vsub.f32 %v257, %v258
    %v260 = vand.u32 %v259, 4294901760
    %261 = vmatpush1.msra.mxu0 %v260
    %262 = vmatprep.subr.mxu0 0.0
    %263 = vmatpush1.msra.mxu0 0.0
    %264 = vmatprep.subr.mxu0 0.0
    %265 = vmatpush1.msra.mxu0 0.0
    %266 = vmatprep.subr.mxu0 0.0
    %267 = vmatpush1.msra.mxu0 0.0
    %268 = vmatprep.subr.mxu0 0.0
    %269 = vmatpush1.msra.mxu0 0.0
    %270 = vmatprep.subr.mxu0 0.0
    %271 = vmatpush1.msra.mxu0 0.0
    %272 = vmatprep.subr.mxu0 0.0
    %273 = vmatpush1.msra.mxu0 0.0
    %274 = vmatprep.subr.mxu0 0.0
    %275 = vmatpush1.msra.mxu0 0.0
    %276 = vmatprep.subr.mxu0 0.0
    %277 = vmatpush1.msra.mxu0 0.0
    %278 = vmatprep.subr.mxu0 0.0
    %279 = vmatpush1.msra.mxu0 0.0
    %280 = vmatprep.subr.mxu0 0.0
    %281 = vmatpush1.msra.mxu0 0.0
    %282 = vmatprep.subr.mxu0 0.0
    %283 = vmatpush1.msra.mxu0 0.0
    %284 = vmatprep.subr.mxu0 0.0
    %285 = vmatpush1.msra.mxu0 0.0
    %286 = vmatprep.subr.mxu0 0.0
    %287 = vmatpush1.msra.mxu0 0.0
    %288 = vmatprep.subr.mxu0 0.0
    %289 = vmatpush1.msra.mxu0 0.0
    %290 = vmatprep.subr.mxu0 0.0
    %291 = vmatpush1.msra.mxu0 0.0
    %292 = vmatprep.subr.mxu0 0.0
    %293 = vmatpush1.msra.mxu0 0.0
    %294 = vmatprep.subr.mxu0 0.0
    %295 = vmatpush1.msra.mxu0 0.0
    %296 = vmatprep.subr.mxu0 0.0
    %297 = vmatpush1.msra.mxu0 0.0
    %298 = vmatprep.subr.mxu0 0.0
    %299 = vmatpush1.msra.mxu0 0.0
    %300 = vmatprep.subr.mxu0 0.0
    %301 = vmatpush1.msra.mxu0 0.0
    %302 = vmatprep.subr.mxu0 0.0
    %303 = vmatpush1.msra.mxu0 0.0
    %304 = vmatprep.subr.mxu0 0.0
    %305 = vmatpush1.msra.mxu0 0.0
    %306 = vmatprep.subr.mxu0 0.0
    %307 = vmatpush1.msra.mxu0 0.0
    %308 = vmatprep.subr.mxu0 0.0
    %309 = vmatpush1.msra.mxu0 0.0
    %310 = vmatprep.subr.mxu0 0.0
    %311 = vmatpush1.msra.mxu0 0.0
    %312 = vmatprep.subr.mxu0 0.0
    %313 = vmatpush1.msra.mxu0 0.0
    %314 = vmatprep.subr.mxu0 0.0
    %315 = vmatpush1.msra.mxu0 0.0
    %316 = vmatprep.subr.mxu0 0.0
    %317 = vmatpush1.msra.mxu0 0.0
    %318 = vmatprep.subr.mxu0 0.0
    %319 = vmatpush1.msra.mxu0 0.0
    %320 = vmatprep.subr.mxu0 0.0
    %321 = vmatpush1.msra.mxu0 0.0
    %322 = vmatprep.mubr.f32.mxu0 0.0
    %v323 = vand.u32 %v156, 4294901760
    %324 = vmatmul.mubr.f32.gmra.mrb[0].mxu0 %v323
    %v325 = vpop.f32.mrb[0].mxu0
    %v326 = vadd.f32 %v235, %v325
    %v327 = vpop.f32.mrb[0].mxu0
    %328 = vmatprep.mubr.f32.mxu0 0.0
    %v329 = vand.u32 %v159, 4294901760
    %330 = vmatmul.mubr.f32.gmra.mrb[0].mxu0 %v329
    %v331 = vpop.f32.mrb[0].mxu0
    %v332 = vadd.f32 %v245, %v331
    %v333 = vpop.f32.mrb[0].mxu0
    %334 = vdwg.mxu0
    %335 = vmatprep.subr.mxu0 0.0
    %v336 = vand.u32 %v145, 4294901760
    %v337 = vsub.f32 %v145, %v336
    %338 = vmatpush1.msra.mxu0 %v337
    %339 = vmatprep.subr.mxu0 0.0
    %v340 = vand.u32 %v146, 4294901760
    %v341 = vsub.f32 %v146, %v340
    %342 = vmatpush1.msra.mxu0 %v341
    %343 = vmatprep.subr.mxu0 0.0
    %344 = vmatpush1.msra.mxu0 0.0
    %345 = vmatprep.subr.mxu0 0.0
    %346 = vmatpush1.msra.mxu0 0.0
    %347 = vmatprep.subr.mxu0 0.0
    %348 = vmatpush1.msra.mxu0 0.0
    %349 = vmatprep.subr.mxu0 0.0
    %350 = vmatpush1.msra.mxu0 0.0
    %351 = vmatprep.subr.mxu0 0.0
    %352 = vmatpush1.msra.mxu0 0.0
    %353 = vmatprep.subr.mxu0 0.0
    %354 = vmatpush1.msra.mxu0 0.0
    %355 = vmatprep.subr.mxu0 0.0
    %356 = vmatpush1.msra.mxu0 0.0
    %357 = vmatprep.subr.mxu0 0.0
    %358 = vmatpush1.msra.mxu0 0.0
    %359 = vmatprep.subr.mxu0 0.0
    %360 = vmatpush1.msra.mxu0 0.0
    %361 = vmatprep.subr.mxu0 0.0
    %362 = vmatpush1.msra.mxu0 0.0
    %363 = vmatprep.subr.mxu0 0.0
    %364 = vmatpush1.msra.mxu0 0.0
    %365 = vmatprep.subr.mxu0 0.0
    %366 = vmatpush1.msra.mxu0 0.0
    %367 = vmatprep.subr.mxu0 0.0
    %368 = vmatpush1.msra.mxu0 0.0
    %369 = vmatprep.subr.mxu0 0.0
    %370 = vmatpush1.msra.mxu0 0.0
    %371 = vmatprep.subr.mxu0 0.0
    %372 = vmatpush1.msra.mxu0 0.0
    %373 = vmatprep.subr.mxu0 0.0
    %374 = vmatpush1.msra.mxu0 0.0
    %375 = vmatprep.subr.mxu0 0.0
    %376 = vmatpush1.msra.mxu0 0.0
    %377 = vmatprep.subr.mxu0 0.0
    %378 = vmatpush1.msra.mxu0 0.0
    %379 = vmatprep.subr.mxu0 0.0
    %380 = vmatpush1.msra.mxu0 0.0
    %381 = vmatprep.subr.mxu0 0.0
    %382 = vmatpush1.msra.mxu0 0.0
    %383 = vmatprep.subr.mxu0 0.0
    %384 = vmatpush1.msra.mxu0 0.0
    %385 = vmatprep.subr.mxu0 0.0
    %386 = vmatpush1.msra.mxu0 0.0
    %387 = vmatprep.subr.mxu0 0.0
    %388 = vmatpush1.msra.mxu0 0.0
    %389 = vmatprep.subr.mxu0 0.0
    %390 = vmatpush1.msra.mxu0 0.0
    %391 = vmatprep.subr.mxu0 0.0
    %392 = vmatpush1.msra.mxu0 0.0
    %393 = vmatprep.subr.mxu0 0.0
    %394 = vmatpush1.msra.mxu0 0.0
    %395 = vmatprep.subr.mxu0 0.0
    %396 = vmatpush1.msra.mxu0 0.0
    %397 = vmatprep.subr.mxu0 0.0
    %398 = vmatpush1.msra.mxu0 0.0
    %399 = vmatprep.subr.mxu0 0.0
    %400 = vmatpush1.msra.mxu0 0.0
    %401 = vmatprep.subr.mxu0 0.0
    %402 = vmatpush1.msra.mxu0 0.0
    %403 = vmatprep.mubr.f32.mxu0 0.0
    %v404 = vand.u32 %v156, 4294901760
    %v405 = vsub.f32 %v156, %v404
    %406 = vmatmul.mubr.f32.gmra.mrb[0].mxu0 %v405
    %v407 = vpop.f32.mrb[0].mxu0
    %v408 = vadd.f32 %v326, %v407
    %v409 = vpop.f32.mrb[0].mxu0
    %410 = vmatprep.mubr.f32.mxu0 0.0
    %v411 = vand.u32 %v159, 4294901760
    %v412 = vsub.f32 %v159, %v411
    %413 = vmatmul.mubr.f32.gmra.mrb[0].mxu0 %v412
    %v414 = vpop.f32.mrb[0].mxu0
    %v415 = vadd.f32 %v332, %v414
    %v416 = vpop.f32.mrb[0].mxu0
    %417 = vdwg.mxu0
    %418 = vmatprep.subr.mxu0 0.0
    %v419 = vand.u32 %v145, 4294901760
    %420 = vmatpush1.msra.mxu0 %v419
    %421 = vmatprep.subr.mxu0 0.0
    %v422 = vand.u32 %v146, 4294901760
    %423 = vmatpush1.msra.mxu0 %v422
    %424 = vmatprep.subr.mxu0 0.0
    %425 = vmatpush1.msra.mxu0 0.0
    %426 = vmatprep.subr.mxu0 0.0
    %427 = vmatpush1.msra.mxu0 0.0
    %428 = vmatprep.subr.mxu0 0.0
    %429 = vmatpush1.msra.mxu0 0.0
    %430 = vmatprep.subr.mxu0 0.0
    %431 = vmatpush1.msra.mxu0 0.0
    %432 = vmatprep.subr.mxu0 0.0
    %433 = vmatpush1.msra.mxu0 0.0
    %434 = vmatprep.subr.mxu0 0.0
    %435 = vmatpush1.msra.mxu0 0.0
    %436 = vmatprep.subr.mxu0 0.0
    %437 = vmatpush1.msra.mxu0 0.0
    %438 = vmatprep.subr.mxu0 0.0
    %439 = vmatpush1.msra.mxu0 0.0
    %440 = vmatprep.subr.mxu0 0.0
    %441 = vmatpush1.msra.mxu0 0.0
    %442 = vmatprep.subr.mxu0 0.0
    %443 = vmatpush1.msra.mxu0 0.0
    %444 = vmatprep.subr.mxu0 0.0
    %445 = vmatpush1.msra.mxu0 0.0
    %446 = vmatprep.subr.mxu0 0.0
    %447 = vmatpush1.msra.mxu0 0.0
    %448 = vmatprep.subr.mxu0 0.0
    %449 = vmatpush1.msra.mxu0 0.0
    %450 = vmatprep.subr.mxu0 0.0
    %451 = vmatpush1.msra.mxu0 0.0
    %452 = vmatprep.subr.mxu0 0.0
    %453 = vmatpush1.msra.mxu0 0.0
    %454 = vmatprep.subr.mxu0 0.0
    %455 = vmatpush1.msra.mxu0 0.0
    %456 = vmatprep.subr.mxu0 0.0
    %457 = vmatpush1.msra.mxu0 0.0
    %458 = vmatprep.subr.mxu0 0.0
    %459 = vmatpush1.msra.mxu0 0.0
    %460 = vmatprep.subr.mxu0 0.0
    %461 = vmatpush1.msra.mxu0 0.0
    %462 = vmatprep.subr.mxu0 0.0
    %463 = vmatpush1.msra.mxu0 0.0
    %464 = vmatprep.subr.mxu0 0.0
    %465 = vmatpush1.msra.mxu0 0.0
    %466 = vmatprep.subr.mxu0 0.0
    %467 = vmatpush1.msra.mxu0 0.0
    %468 = vmatprep.subr.mxu0 0.0
    %469 = vmatpush1.msra.mxu0 0.0
    %470 = vmatprep.subr.mxu0 0.0
    %471 = vmatpush1.msra.mxu0 0.0
    %472 = vmatprep.subr.mxu0 0.0
    %473 = vmatpush1.msra.mxu0 0.0
    %474 = vmatprep.subr.mxu0 0.0
    %475 = vmatpush1.msra.mxu0 0.0
    %476 = vmatprep.subr.mxu0 0.0
    %477 = vmatpush1.msra.mxu0 0.0
    %478 = vmatprep.subr.mxu0 0.0
    %479 = vmatpush1.msra.mxu0 0.0
    %480 = vmatprep.subr.mxu0 0.0
    %481 = vmatpush1.msra.mxu0 0.0
    %482 = vmatprep.subr.mxu0 0.0
    %483 = vmatpush1.msra.mxu0 0.0
    %484 = vmatprep.mubr.f32.mxu0 0.0
    %v485 = vand.u32 %v156, 4294901760
    %v486 = vsub.f32 %v156, %v485
    %v487 = vand.u32 %v486, 4294901760
    %488 = vmatmul.mubr.f32.gmra.mrb[0].mxu0 %v487
    %v489 = vpop.f32.mrb[0].mxu0
    %v490 = vadd.f32 %v408, %v489
    %v491 = vpop.f32.mrb[0].mxu0
    %492 = vmatprep.mubr.f32.mxu0 0.0
    %v493 = vand.u32 %v159, 4294901760
    %v494 = vsub.f32 %v159, %v493
    %v495 = vand.u32 %v494, 4294901760
    %496 = vmatmul.mubr.f32.gmra.mrb[0].mxu0 %v495
    %v497 = vpop.f32.mrb[0].mxu0
    %v498 = vadd.f32 %v415, %v497
    %v499 = vpop.f32.mrb[0].mxu0
    %500 = vdwg.mxu0
    %501 = vmatprep.subr.mxu0 0.0
    %v502 = vand.u32 %v145, 4294901760
    %v503 = vsub.f32 %v145, %v502
    %v504 = vand.u32 %v503, 4294901760
    %505 = vmatpush1.msra.mxu0 %v504
    %506 = vmatprep.subr.mxu0 0.0
    %v507 = vand.u32 %v146, 4294901760
    %v508 = vsub.f32 %v146, %v507
    %v509 = vand.u32 %v508, 4294901760
    %510 = vmatpush1.msra.mxu0 %v509
    %511 = vmatprep.subr.mxu0 0.0
    %512 = vmatpush1.msra.mxu0 0.0
    %513 = vmatprep.subr.mxu0 0.0
    %514 = vmatpush1.msra.mxu0 0.0
    %515 = vmatprep.subr.mxu0 0.0
    %516 = vmatpush1.msra.mxu0 0.0
    %517 = vmatprep.subr.mxu0 0.0
    %518 = vmatpush1.msra.mxu0 0.0
    %519 = vmatprep.subr.mxu0 0.0
    %520 = vmatpush1.msra.mxu0 0.0
    %521 = vmatprep.subr.mxu0 0.0
    %522 = vmatpush1.msra.mxu0 0.0
    %523 = vmatprep.subr.mxu0 0.0
    %524 = vmatpush1.msra.mxu0 0.0
    %525 = vmatprep.subr.mxu0 0.0
    %526 = vmatpush1.msra.mxu0 0.0
    %527 = vmatprep.subr.mxu0 0.0
    %528 = vmatpush1.msra.mxu0 0.0
    %529 = vmatprep.subr.mxu0 0.0
    %530 = vmatpush1.msra.mxu0 0.0
    %531 = vmatprep.subr.mxu0 0.0
    %532 = vmatpush1.msra.mxu0 0.0
    %533 = vmatprep.subr.mxu0 0.0
    %534 = vmatpush1.msra.mxu0 0.0
    %535 = vmatprep.subr.mxu0 0.0
    %536 = vmatpush1.msra.mxu0 0.0
    %537 = vmatprep.subr.mxu0 0.0
    %538 = vmatpush1.msra.mxu0 0.0
    %539 = vmatprep.subr.mxu0 0.0
    %540 = vmatpush1.msra.mxu0 0.0
    %541 = vmatprep.subr.mxu0 0.0
    %542 = vmatpush1.msra.mxu0 0.0
    %543 = vmatprep.subr.mxu0 0.0
    %544 = vmatpush1.msra.mxu0 0.0
    %545 = vmatprep.subr.mxu0 0.0
    %546 = vmatpush1.msra.mxu0 0.0
    %547 = vmatprep.subr.mxu0 0.0
    %548 = vmatpush1.msra.mxu0 0.0
    %549 = vmatprep.subr.mxu0 0.0
    %550 = vmatpush1.msra.mxu0 0.0
    %551 = vmatprep.subr.mxu0 0.0
    %552 = vmatpush1.msra.mxu0 0.0
    %553 = vmatprep.subr.mxu0 0.0
    %554 = vmatpush1.msra.mxu0 0.0
    %555 = vmatprep.subr.mxu0 0.0
    %556 = vmatpush1.msra.mxu0 0.0
    %557 = vmatprep.subr.mxu0 0.0
    %558 = vmatpush1.msra.mxu0 0.0
    %559 = vmatprep.subr.mxu0 0.0
    %560 = vmatpush1.msra.mxu0 0.0
    %561 = vmatprep.subr.mxu0 0.0
    %562 = vmatpush1.msra.mxu0 0.0
    %563 = vmatprep.subr.mxu0 0.0
    %564 = vmatpush1.msra.mxu0 0.0
    %565 = vmatprep.subr.mxu0 0.0
    %566 = vmatpush1.msra.mxu0 0.0
    %567 = vmatprep.subr.mxu0 0.0
    %568 = vmatpush1.msra.mxu0 0.0
    %569 = vmatprep.subr.mxu0 0.0
    %570 = vmatpush1.msra.mxu0 0.0
    %571 = vmatprep.mubr.f32.mxu0 0.0
    %v572 = vand.u32 %v156, 4294901760
    %573 = vmatmul.mubr.f32.gmra.mrb[0].mxu0 %v572
    %v574 = vpop.f32.mrb[0].mxu0
    %v575 = vadd.f32 %v490, %v574
    %v576 = vpop.f32.mrb[0].mxu0
    %577 = vmatprep.mubr.f32.mxu0 0.0
    %v578 = vand.u32 %v159, 4294901760
    %579 = vmatmul.mubr.f32.gmra.mrb[0].mxu0 %v578
    %v580 = vpop.f32.mrb[0].mxu0
    %v581 = vadd.f32 %v498, %v580
    %v582 = vpop.f32.mrb[0].mxu0
    %583 = vdwg.mxu0
    %584 = vmatprep.subr.mxu0 0.0
    %v585 = vand.u32 %v145, 4294901760
    %586 = vmatpush1.msra.mxu0 %v585
    %587 = vmatprep.subr.mxu0 0.0
    %v588 = vand.u32 %v146, 4294901760
    %589 = vmatpush1.msra.mxu0 %v588
    %590 = vmatprep.subr.mxu0 0.0
    %591 = vmatpush1.msra.mxu0 0.0
    %592 = vmatprep.subr.mxu0 0.0
    %593 = vmatpush1.msra.mxu0 0.0
    %594 = vmatprep.subr.mxu0 0.0
    %595 = vmatpush1.msra.mxu0 0.0
    %596 = vmatprep.subr.mxu0 0.0
    %597 = vmatpush1.msra.mxu0 0.0
    %598 = vmatprep.subr.mxu0 0.0
    %599 = vmatpush1.msra.mxu0 0.0
    %600 = vmatprep.subr.mxu0 0.0
    %601 = vmatpush1.msra.mxu0 0.0
    %602 = vmatprep.subr.mxu0 0.0
    %603 = vmatpush1.msra.mxu0 0.0
    %604 = vmatprep.subr.mxu0 0.0
    %605 = vmatpush1.msra.mxu0 0.0
    %606 = vmatprep.subr.mxu0 0.0
    %607 = vmatpush1.msra.mxu0 0.0
    %608 = vmatprep.subr.mxu0 0.0
    %609 = vmatpush1.msra.mxu0 0.0
    %610 = vmatprep.subr.mxu0 0.0
    %611 = vmatpush1.msra.mxu0 0.0
    %612 = vmatprep.subr.mxu0 0.0
    %613 = vmatpush1.msra.mxu0 0.0
    %614 = vmatprep.subr.mxu0 0.0
    %615 = vmatpush1.msra.mxu0 0.0
    %616 = vmatprep.subr.mxu0 0.0
    %617 = vmatpush1.msra.mxu0 0.0
    %618 = vmatprep.subr.mxu0 0.0
    %619 = vmatpush1.msra.mxu0 0.0
    %620 = vmatprep.subr.mxu0 0.0
    %621 = vmatpush1.msra.mxu0 0.0
    %622 = vmatprep.subr.mxu0 0.0
    %623 = vmatpush1.msra.mxu0 0.0
    %624 = vmatprep.subr.mxu0 0.0
    %625 = vmatpush1.msra.mxu0 0.0
    %626 = vmatprep.subr.mxu0 0.0
    %627 = vmatpush1.msra.mxu0 0.0
    %628 = vmatprep.subr.mxu0 0.0
    %629 = vmatpush1.msra.mxu0 0.0
    %630 = vmatprep.subr.mxu0 0.0
    %631 = vmatpush1.msra.mxu0 0.0
    %632 = vmatprep.subr.mxu0 0.0
    %633 = vmatpush1.msra.mxu0 0.0
    %634 = vmatprep.subr.mxu0 0.0
    %635 = vmatpush1.msra.mxu0 0.0
    %636 = vmatprep.subr.mxu0 0.0
    %637 = vmatpush1.msra.mxu0 0.0
    %638 = vmatprep.subr.mxu0 0.0
    %639 = vmatpush1.msra.mxu0 0.0
    %640 = vmatprep.subr.mxu0 0.0
    %641 = vmatpush1.msra.mxu0 0.0
    %642 = vmatprep.subr.mxu0 0.0
    %643 = vmatpush1.msra.mxu0 0.0
    %644 = vmatprep.subr.mxu0 0.0
    %645 = vmatpush1.msra.mxu0 0.0
    %646 = vmatprep.subr.mxu0 0.0
    %647 = vmatpush1.msra.mxu0 0.0
    %648 = vmatprep.subr.mxu0 0.0
    %649 = vmatpush1.msra.mxu0 0.0
    %650 = vmatprep.mubr.f32.mxu0 0.0
    %v651 = vand.u32 %v156, 4294901760
    %652 = vmatmul.mubr.f32.gmra.mrb[0].mxu0 %v651
    %v653 = vpop.f32.mrb[0].mxu0
    %v654 = vadd.f32 %v575, %v653
    %v655 = vpop.f32.mrb[0].mxu0
    %656 = vmatprep.mubr.f32.mxu0 0.0
    %v657 = vand.u32 %v159, 4294901760
    %658 = vmatmul.mubr.f32.gmra.mrb[0].mxu0 %v657
    %v659 = vpop.f32.mrb[0].mxu0
    %v660 = vadd.f32 %v581, %v659
    %v661 = vpop.f32.mrb[0].mxu0
    %662 = vdwg.mxu0
    %v663 = vlaneseq
    %v664 = vshrl.u32 %v663, 7
    %v665 = vadd.s32 %v664, 8
    %vm666 = vcmp.lt.s32.totalorder %v664, 0
    %v667 = vsub.s32 0, %v664
    %v668 = vsel %vm666, %v667, %v664
    %v669 = vshrl.u32 %v668, 3
    %v670 = vand.u32 %v668, 7
    %v671 = vsub.s32 0, %v670
    %v672 = vsel %vm666, %v671, %v670
    %vm673 = vcmp.lt.s32.totalorder %v665, 0
    %v674 = vsub.s32 0, %v665
    %v675 = vsel %vm673, %v674, %v665
    %v676 = vshrl.u32 %v675, 3
    %v677 = vand.u32 %v675, 7
    %v678 = vsub.s32 0, %v677
    %v679 = vsel %vm673, %v678, %v677
    %vm680 = vcmp.ne.s32.totalorder %v672, 0
    %vm681 = vcmp.ne.s32.totalorder %v679, 0
    %vm682 = vcmp.lt.s32.totalorder %v672, 0
    %vm683 = vcmp.lt.s32.totalorder %v679, 0
    %vm684 = vmand %vm682, %vm680
    %vm685 = vmand %vm683, %vm681
    %v686 = vadd.s32 %v672, 8
    %v687 = vadd.s32 %v679, 8
    %v688 = vsel %vm684, %v686, %v672
    %v689 = vsel %vm685, %v687, %v679
    %vm692 = vcmask 1042432
    %v693 = vrot.slane %v654, 5
    %v694 = vrot.slane %v660, 5
    %v695 = vsel %vm692, %v693, %v694
    %v699 = vsel %vm692, 0.0, %v693
    %vm700 = vcmp.ge.s32.totalorder %v688, 3
    %vm701 = vcmp.ge.s32.totalorder %v689, 3
    %v702 = vsel %vm700, 1, 0
    %v703 = vsel %vm701, 1, 0
    %vm704 = vcmp.eq.s32.totalorder %v702, 1
    %vm705 = vcmp.eq.s32.totalorder %v703, 1
    %v706 = vsel %vm704, %v699, 0.0
    %v707 = vsel %vm705, %v695, 0.0
    %v708 = vld [vmem:[#allocation8] sm:$0x1]
    %v709 = vlaneseq
    %v710 = vshrl.u32 %v709, 7
    %v711 = vsub.s32 0, %v710
    %v712 = vrot.slane %v708, %v711
    %v713 = vmul.f32 %v706, %v712
    %v714 = vmul.f32 %v707, %v712
    %v715 = vadd.f32 %v713, 0.0
    %v716 = vadd.f32 %v714, 0.0
    %vm717 = vcmp.ge.s32.totalorder %v688, 2
    %vm718 = vcmp.ge.s32.totalorder %v689, 2
    %v719 = vsel %vm717, 1, 0
    %v720 = vsel %vm718, 1, 0
    %vm721 = vcmp.eq.s32.totalorder %v719, 1
    %vm722 = vcmp.eq.s32.totalorder %v720, 1
    %vm724 = vcmask 1046528
    %v725 = vrot.slane %v699, 1
    %v726 = vrot.slane %v695, 1
    %v727 = vsel %vm724, %v725, %v726
    %v728 = vrot.slane %v694, 1
    %v729 = vsel %vm724, %v726, %v728
    %v732 = vsel %vm721, %v727, 0.0
    %v733 = vsel %vm722, %v729, 0.0
    %v734 = vld [vmem:[#allocation8 + $0x1] sm:$0x1]
    %v735 = vlaneseq
    %v736 = vshrl.u32 %v735, 7
    %v737 = vsub.s32 0, %v736
    %v738 = vrot.slane %v734, %v737
    %v739 = vmul.f32 %v732, %v738
    %v740 = vmul.f32 %v733, %v738
    %v741 = vadd.f32 %v715, %v739
    %v742 = vadd.f32 %v716, %v740
    %vm743 = vcmp.ge.s32.totalorder %v688, 1
    %vm744 = vcmp.ge.s32.totalorder %v689, 1
    %v745 = vsel %vm743, 1, 0
    %v746 = vsel %vm744, 1, 0
    %vm747 = vcmp.eq.s32.totalorder %v745, 1
    %vm748 = vcmp.eq.s32.totalorder %v746, 1
    %vm749 = vcmask 1045504
    %v750 = vrot.slane %v699, 2
    %v751 = vrot.slane %v695, 2
    %v752 = vsel %vm749, %v750, %v751
    %v753 = vrot.slane %v694, 2
    %v754 = vsel %vm749, %v751, %v753
    %v757 = vsel %vm747, %v752, 0.0
    %v758 = vsel %vm748, %v754, 0.0
    %v759 = vld [vmem:[#allocation8 + $0x2] sm:$0x1]
    %v760 = vlaneseq
    %v761 = vshrl.u32 %v760, 7
    %v762 = vsub.s32 0, %v761
    %v763 = vrot.slane %v759, %v762
    %v764 = vmul.f32 %v757, %v763
    %v765 = vmul.f32 %v758, %v763
    %v766 = vadd.f32 %v741, %v764
    %v767 = vadd.f32 %v742, %v765
    %v768 = vld [vmem:[#allocation8 + $0x3] sm:$0x1]
    %v769 = vlaneseq
    %v770 = vshrl.u32 %v769, 7
    %v771 = vsub.s32 0, %v770
    %v772 = vrot.slane %v768, %v771
    %v773 = vmul.f32 %v699, %v772
    %v774 = vmul.f32 %v695, %v772
    %v775 = vmul.f32 %v694, %v772
    %vm779 = vcmask 1044480
    %v780 = vrot.slane %v773, 3
    %v781 = vrot.slane %v774, 3
    %v782 = vsel %vm779, %v780, %v781
    %v783 = vrot.slane %v775, 3
    %v784 = vsel %vm779, %v781, %v783
    %v787 = vadd.f32 %v766, %v782
    %v788 = vadd.f32 %v767, %v784
    %v789 = vld [vmem:[%s4] sm:$0x1]
    %v791 = vlaneseq
    %v792 = vshrl.u32 %v791, 7
    %v793 = vsub.s32 0, %v792
    %v794 = vrot.slane %v789, %v793
    %v796 = vadd.f32 %v787, %v794
    %v797 = vadd.f32 %v788, %v794
    %v798 = vxor.u32 %v796, 2147483648
    %v799 = vxor.u32 %v797, 2147483648
    %v800 = vmul.f32 %v798, 1.442695
    %v801 = vpow.pop %v800
    %v802 = vmul.f32 %v799, 1.442695
    %v803 = vpow.pop %v802
    %v804 = vadd.f32 %v801, 1.0
    %v805 = vadd.f32 %v803, 1.0
    %v806 = vrcp.pop %v804
    %v807 = vmul.f32 1.0, %v806
    %v808 = vrcp.pop %v805
    %v809 = vmul.f32 1.0, %v808
    %v810 = vmul.f32 %v796, %v807
    %v811 = vmul.f32 %v797, %v809
    %v812 = vld [vmem:[#allocation9] sm:$0xff]
    %v813 = vld [vmem:[#allocation9 + $0x8] sm:$0xff]
    %v814 = vld [vmem:[#allocation9 + $0x10] sm:$0xff]
    %v815 = vld [vmem:[#allocation9 + $0x18] sm:$0xff]
    %v816 = vld [vmem:[#allocation11] sm:$0x1]
    %v818 = vlaneseq
    %v819 = vshrl.u32 %v818, 7
    %v820 = vsub.s32 0, %v819
    %v821 = vrot.slane %v816, %v820
    %vm823 = vcmask 261120
    %v825 = vsel %vm823, %v810, 0
    %v828 = vsel %vm823, %v811, 0
    %830 = vmatprep.subr.mxu0 0.0
    %v831 = vand.u32 %v812, 4294901760
    %832 = vmatpush1.msra.mxu0 %v831
    %833 = vmatprep.subr.mxu0 0.0
    %v834 = vand.u32 %v813, 4294901760
    %835 = vmatpush1.msra.mxu0 %v834
    %836 = vmatprep.subr.mxu0 0.0
    %v837 = vand.u32 %v814, 4294901760
    %838 = vmatpush1.msra.mxu0 %v837
    %839 = vmatprep.subr.mxu0 0.0
    %v840 = vand.u32 %v815, 4294901760
    %841 = vmatpush1.msra.mxu0 %v840
    %842 = vmatprep.subr.mxu0 0.0
    %843 = vmatpush1.msra.mxu0 0.0
    %844 = vmatprep.subr.mxu0 0.0
    %845 = vmatpush1.msra.mxu0 0.0
    %846 = vmatprep.subr.mxu0 0.0
    %847 = vmatpush1.msra.mxu0 0.0
    %848 = vmatprep.subr.mxu0 0.0
    %849 = vmatpush1.msra.mxu0 0.0
    %850 = vmatprep.subr.mxu0 0.0
    %851 = vmatpush1.msra.mxu0 0.0
    %852 = vmatprep.subr.mxu0 0.0
    %853 = vmatpush1.msra.mxu0 0.0
    %854 = vmatprep.subr.mxu0 0.0
    %855 = vmatpush1.msra.mxu0 0.0
    %856 = vmatprep.subr.mxu0 0.0
    %857 = vmatpush1.msra.mxu0 0.0
    %858 = vmatprep.subr.mxu0 0.0
    %859 = vmatpush1.msra.mxu0 0.0
    %860 = vmatprep.subr.mxu0 0.0
    %861 = vmatpush1.msra.mxu0 0.0
    %862 = vmatprep.subr.mxu0 0.0
    %863 = vmatpush1.msra.mxu0 0.0
    %864 = vmatprep.subr.mxu0 0.0
    %865 = vmatpush1.msra.mxu0 0.0
    %866 = vmatprep.subr.mxu0 0.0
    %867 = vmatpush1.msra.mxu0 0.0
    %868 = vmatprep.subr.mxu0 0.0
    %869 = vmatpush1.msra.mxu0 0.0
    %870 = vmatprep.subr.mxu0 0.0
    %871 = vmatpush1.msra.mxu0 0.0
    %872 = vmatprep.subr.mxu0 0.0
    %873 = vmatpush1.msra.mxu0 0.0
    %874 = vmatprep.subr.mxu0 0.0
    %875 = vmatpush1.msra.mxu0 0.0
    %876 = vmatprep.subr.mxu0 0.0
    %877 = vmatpush1.msra.mxu0 0.0
    %878 = vmatprep.subr.mxu0 0.0
    %879 = vmatpush1.msra.mxu0 0.0
    %880 = vmatprep.subr.mxu0 0.0
    %881 = vmatpush1.msra.mxu0 0.0
    %882 = vmatprep.subr.mxu0 0.0
    %883 = vmatpush1.msra.mxu0 0.0
    %884 = vmatprep.subr.mxu0 0.0
    %885 = vmatpush1.msra.mxu0 0.0
    %886 = vmatprep.subr.mxu0 0.0
    %887 = vmatpush1.msra.mxu0 0.0
    %888 = vmatprep.subr.mxu0 0.0
    %889 = vmatpush1.msra.mxu0 0.0
    %890 = vmatprep.subr.mxu0 0.0
    %891 = vmatpush1.msra.mxu0 0.0
    %892 = vmatprep.subr.mxu0 0.0
    %893 = vmatpush1.msra.mxu0 0.0
    %894 = vmatprep.subr.mxu0 0.0
    %895 = vmatpush1.msra.mxu0 0.0
    %896 = vmatprep.subr.mxu0 0.0
    %897 = vmatpush1.msra.mxu0 0.0
    %898 = vmatprep.mubr.f32.mxu0 0.0
    %v899 = vand.u32 %v825, 4294901760
    %v900 = vsub.f32 %v825, %v899
    %v901 = vand.u32 %v900, 4294901760
    %v902 = vsub.f32 %v900, %v901
    %v903 = vand.u32 %v902, 4294901760
    %904 = vmatmul.mubr.f32.gmra.mrb[0].mxu0 %v903
    %v905 = vpop.f32.mrb[0].mxu0
    %v906 = vadd.f32 %v821, %v905
    %v907 = vpop.f32.mrb[0].mxu0
    %908 = vmatprep.mubr.f32.mxu0 0.0
    %v909 = vand.u32 %v828, 4294901760
    %v910 = vsub.f32 %v828, %v909
    %v911 = vand.u32 %v910, 4294901760
    %v912 = vsub.f32 %v910, %v911
    %v913 = vand.u32 %v912, 4294901760
    %914 = vmatmul.mubr.f32.gmra.mrb[0].mxu0 %v913
    %v915 = vpop.f32.mrb[0].mxu0
    %v916 = vadd.f32 %v821, %v915
    %v917 = vpop.f32.mrb[0].mxu0
    %918 = vdwg.mxu0
    %919 = vmatprep.subr.mxu0 0.0
    %v920 = vand.u32 %v812, 4294901760
    %v921 = vsub.f32 %v812, %v920
    %v922 = vand.u32 %v921, 4294901760
    %v923 = vsub.f32 %v921, %v922
    %v924 = vand.u32 %v923, 4294901760
    %925 = vmatpush1.msra.mxu0 %v924
    %926 = vmatprep.subr.mxu0 0.0
    %v927 = vand.u32 %v813, 4294901760
    %v928 = vsub.f32 %v813, %v927
    %v929 = vand.u32 %v928, 4294901760
    %v930 = vsub.f32 %v928, %v929
    %v931 = vand.u32 %v930, 4294901760
    %932 = vmatpush1.msra.mxu0 %v931
    %933 = vmatprep.subr.mxu0 0.0
    %v934 = vand.u32 %v814, 4294901760
    %v935 = vsub.f32 %v814, %v934
    %v936 = vand.u32 %v935, 4294901760
    %v937 = vsub.f32 %v935, %v936
    %v938 = vand.u32 %v937, 4294901760
    %939 = vmatpush1.msra.mxu0 %v938
    %940 = vmatprep.subr.mxu0 0.0
    %v941 = vand.u32 %v815, 4294901760
    %v942 = vsub.f32 %v815, %v941
    %v943 = vand.u32 %v942, 4294901760
    %v944 = vsub.f32 %v942, %v943
    %v945 = vand.u32 %v944, 4294901760
    %946 = vmatpush1.msra.mxu0 %v945
    %947 = vmatprep.subr.mxu0 0.0
    %948 = vmatpush1.msra.mxu0 0.0
    %949 = vmatprep.subr.mxu0 0.0
    %950 = vmatpush1.msra.mxu0 0.0
    %951 = vmatprep.subr.mxu0 0.0
    %952 = vmatpush1.msra.mxu0 0.0
    %953 = vmatprep.subr.mxu0 0.0
    %954 = vmatpush1.msra.mxu0 0.0
    %955 = vmatprep.subr.mxu0 0.0
    %956 = vmatpush1.msra.mxu0 0.0
    %957 = vmatprep.subr.mxu0 0.0
    %958 = vmatpush1.msra.mxu0 0.0
    %959 = vmatprep.subr.mxu0 0.0
    %960 = vmatpush1.msra.mxu0 0.0
    %961 = vmatprep.subr.mxu0 0.0
    %962 = vmatpush1.msra.mxu0 0.0
    %963 = vmatprep.subr.mxu0 0.0
    %964 = vmatpush1.msra.mxu0 0.0
    %965 = vmatprep.subr.mxu0 0.0
    %966 = vmatpush1.msra.mxu0 0.0
    %967 = vmatprep.subr.mxu0 0.0
    %968 = vmatpush1.msra.mxu0 0.0
    %969 = vmatprep.subr.mxu0 0.0
    %970 = vmatpush1.msra.mxu0 0.0
    %971 = vmatprep.subr.mxu0 0.0
    %972 = vmatpush1.msra.mxu0 0.0
    %973 = vmatprep.subr.mxu0 0.0
    %974 = vmatpush1.msra.mxu0 0.0
    %975 = vmatprep.subr.mxu0 0.0
    %976 = vmatpush1.msra.mxu0 0.0
    %977 = vmatprep.subr.mxu0 0.0
    %978 = vmatpush1.msra.mxu0 0.0
    %979 = vmatprep.subr.mxu0 0.0
    %980 = vmatpush1.msra.mxu0 0.0
    %981 = vmatprep.subr.mxu0 0.0
    %982 = vmatpush1.msra.mxu0 0.0
    %983 = vmatprep.subr.mxu0 0.0
    %984 = vmatpush1.msra.mxu0 0.0
    %985 = vmatprep.subr.mxu0 0.0
    %986 = vmatpush1.msra.mxu0 0.0
    %987 = vmatprep.subr.mxu0 0.0
    %988 = vmatpush1.msra.mxu0 0.0
    %989 = vmatprep.subr.mxu0 0.0
    %990 = vmatpush1.msra.mxu0 0.0
    %991 = vmatprep.subr.mxu0 0.0
    %992 = vmatpush1.msra.mxu0 0.0
    %993 = vmatprep.subr.mxu0 0.0
    %994 = vmatpush1.msra.mxu0 0.0
    %995 = vmatprep.subr.mxu0 0.0
    %996 = vmatpush1.msra.mxu0 0.0
    %997 = vmatprep.subr.mxu0 0.0
    %998 = vmatpush1.msra.mxu0 0.0
    %999 = vmatprep.subr.mxu0 0.0
    %1000 = vmatpush1.msra.mxu0 0.0
    %1001 = vmatprep.subr.mxu0 0.0
    %1002 = vmatpush1.msra.mxu0 0.0
    %1003 = vmatprep.mubr.f32.mxu0 0.0
    %v1004 = vand.u32 %v825, 4294901760
    %1005 = vmatmul.mubr.f32.gmra.mrb[0].mxu0 %v1004
    %v1006 = vpop.f32.mrb[0].mxu0
    %v1007 = vadd.f32 %v906, %v1006
    %v1008 = vpop.f32.mrb[0].mxu0
    %1009 = vmatprep.mubr.f32.mxu0 0.0
    %v1010 = vand.u32 %v828, 4294901760
    %1011 = vmatmul.mubr.f32.gmra.mrb[0].mxu0 %v1010
    %v1012 = vpop.f32.mrb[0].mxu0
    %v1013 = vadd.f32 %v916, %v1012
    %v1014 = vpop.f32.mrb[0].mxu0
    %1015 = vdwg.mxu0
    %1016 = vmatprep.subr.mxu0 0.0
    %v1017 = vand.u32 %v812, 4294901760
    %v1018 = vsub.f32 %v812, %v1017
    %1019 = vmatpush1.msra.mxu0 %v1018
    %1020 = vmatprep.subr.mxu0 0.0
    %v1021 = vand.u32 %v813, 4294901760
    %v1022 = vsub.f32 %v813, %v1021
    %1023 = vmatpush1.msra.mxu0 %v1022
    %1024 = vmatprep.subr.mxu0 0.0
    %v1025 = vand.u32 %v814, 4294901760
    %v1026 = vsub.f32 %v814, %v1025
    %1027 = vmatpush1.msra.mxu0 %v1026
    %1028 = vmatprep.subr.mxu0 0.0
    %v1029 = vand.u32 %v815, 4294901760
    %v1030 = vsub.f32 %v815, %v1029
    %1031 = vmatpush1.msra.mxu0 %v1030
    %1032 = vmatprep.subr.mxu0 0.0
    %1033 = vmatpush1.msra.mxu0 0.0
    %1034 = vmatprep.subr.mxu0 0.0
    %1035 = vmatpush1.msra.mxu0 0.0
    %1036 = vmatprep.subr.mxu0 0.0
    %1037 = vmatpush1.msra.mxu0 0.0
    %1038 = vmatprep.subr.mxu0 0.0
    %1039 = vmatpush1.msra.mxu0 0.0
    %1040 = vmatprep.subr.mxu0 0.0
    %1041 = vmatpush1.msra.mxu0 0.0
    %1042 = vmatprep.subr.mxu0 0.0
    %1043 = vmatpush1.msra.mxu0 0.0
    %1044 = vmatprep.subr.mxu0 0.0
    %1045 = vmatpush1.msra.mxu0 0.0
    %1046 = vmatprep.subr.mxu0 0.0
    %1047 = vmatpush1.msra.mxu0 0.0
    %1048 = vmatprep.subr.mxu0 0.0
    %1049 = vmatpush1.msra.mxu0 0.0
    %1050 = vmatprep.subr.mxu0 0.0
    %1051 = vmatpush1.msra.mxu0 0.0
    %1052 = vmatprep.subr.mxu0 0.0
    %1053 = vmatpush1.msra.mxu0 0.0
    %1054 = vmatprep.subr.mxu0 0.0
    %1055 = vmatpush1.msra.mxu0 0.0
    %1056 = vmatprep.subr.mxu0 0.0
    %1057 = vmatpush1.msra.mxu0 0.0
    %1058 = vmatprep.subr.mxu0 0.0
    %1059 = vmatpush1.msra.mxu0 0.0
    %1060 = vmatprep.subr.mxu0 0.0
    %1061 = vmatpush1.msra.mxu0 0.0
    %1062 = vmatprep.subr.mxu0 0.0
    %1063 = vmatpush1.msra.mxu0 0.0
    %1064 = vmatprep.subr.mxu0 0.0
    %1065 = vmatpush1.msra.mxu0 0.0
    %1066 = vmatprep.subr.mxu0 0.0
    %1067 = vmatpush1.msra.mxu0 0.0
    %1068 = vmatprep.subr.mxu0 0.0
    %1069 = vmatpush1.msra.mxu0 0.0
    %1070 = vmatprep.subr.mxu0 0.0
    %1071 = vmatpush1.msra.mxu0 0.0
    %1072 = vmatprep.subr.mxu0 0.0
    %1073 = vmatpush1.msra.mxu0 0.0
    %1074 = vmatprep.subr.mxu0 0.0
    %1075 = vmatpush1.msra.mxu0 0.0
    %1076 = vmatprep.subr.mxu0 0.0
    %1077 = vmatpush1.msra.mxu0 0.0
    %1078 = vmatprep.subr.mxu0 0.0
    %1079 = vmatpush1.msra.mxu0 0.0
    %1080 = vmatprep.subr.mxu0 0.0
    %1081 = vmatpush1.msra.mxu0 0.0
    %1082 = vmatprep.subr.mxu0 0.0
    %1083 = vmatpush1.msra.mxu0 0.0
    %1084 = vmatprep.subr.mxu0 0.0
    %1085 = vmatpush1.msra.mxu0 0.0
    %1086 = vmatprep.subr.mxu0 0.0
    %1087 = vmatpush1.msra.mxu0 0.0
    %1088 = vmatprep.mubr.f32.mxu0 0.0
    %v1089 = vand.u32 %v825, 4294901760
    %v1090 = vsub.f32 %v825, %v1089
    %1091 = vmatmul.mubr.f32.gmra.mrb[0].mxu0 %v1090
    %v1092 = vpop.f32.mrb[0].mxu0
    %v1093 = vadd.f32 %v1007, %v1092
    %v1094 = vpop.f32.mrb[0].mxu0
    %1095 = vmatprep.mubr.f32.mxu0 0.0
    %v1096 = vand.u32 %v828, 4294901760
    %v1097 = vsub.f32 %v828, %v1096
    %1098 = vmatmul.mubr.f32.gmra.mrb[0].mxu0 %v1097
    %v1099 = vpop.f32.mrb[0].mxu0
    %v1100 = vadd.f32 %v1013, %v1099
    %v1101 = vpop.f32.mrb[0].mxu0
    %1102 = vdwg.mxu0
    %1103 = vmatprep.subr.mxu0 0.0
    %v1104 = vand.u32 %v812, 4294901760
    %1105 = vmatpush1.msra.mxu0 %v1104
    %1106 = vmatprep.subr.mxu0 0.0
    %v1107 = vand.u32 %v813, 4294901760
    %1108 = vmatpush1.msra.mxu0 %v1107
    %1109 = vmatprep.subr.mxu0 0.0
    %v1110 = vand.u32 %v814, 4294901760
    %1111 = vmatpush1.msra.mxu0 %v1110
    %1112 = vmatprep.subr.mxu0 0.0
    %v1113 = vand.u32 %v815, 4294901760
    %1114 = vmatpush1.msra.mxu0 %v1113
    %1115 = vmatprep.subr.mxu0 0.0
    %1116 = vmatpush1.msra.mxu0 0.0
    %1117 = vmatprep.subr.mxu0 0.0
    %1118 = vmatpush1.msra.mxu0 0.0
    %1119 = vmatprep.subr.mxu0 0.0
    %1120 = vmatpush1.msra.mxu0 0.0
    %1121 = vmatprep.subr.mxu0 0.0
    %1122 = vmatpush1.msra.mxu0 0.0
    %1123 = vmatprep.subr.mxu0 0.0
    %1124 = vmatpush1.msra.mxu0 0.0
    %1125 = vmatprep.subr.mxu0 0.0
    %1126 = vmatpush1.msra.mxu0 0.0
    %1127 = vmatprep.subr.mxu0 0.0
    %1128 = vmatpush1.msra.mxu0 0.0
    %1129 = vmatprep.subr.mxu0 0.0
    %1130 = vmatpush1.msra.mxu0 0.0
    %1131 = vmatprep.subr.mxu0 0.0
    %1132 = vmatpush1.msra.mxu0 0.0
    %1133 = vmatprep.subr.mxu0 0.0
    %1134 = vmatpush1.msra.mxu0 0.0
    %1135 = vmatprep.subr.mxu0 0.0
    %1136 = vmatpush1.msra.mxu0 0.0
    %1137 = vmatprep.subr.mxu0 0.0
    %1138 = vmatpush1.msra.mxu0 0.0
    %1139 = vmatprep.subr.mxu0 0.0
    %1140 = vmatpush1.msra.mxu0 0.0
    %1141 = vmatprep.subr.mxu0 0.0
    %1142 = vmatpush1.msra.mxu0 0.0
    %1143 = vmatprep.subr.mxu0 0.0
    %1144 = vmatpush1.msra.mxu0 0.0
    %1145 = vmatprep.subr.mxu0 0.0
    %1146 = vmatpush1.msra.mxu0 0.0
    %1147 = vmatprep.subr.mxu0 0.0
    %1148 = vmatpush1.msra.mxu0 0.0
    %1149 = vmatprep.subr.mxu0 0.0
    %1150 = vmatpush1.msra.mxu0 0.0
    %1151 = vmatprep.subr.mxu0 0.0
    %1152 = vmatpush1.msra.mxu0 0.0
    %1153 = vmatprep.subr.mxu0 0.0
    %1154 = vmatpush1.msra.mxu0 0.0
    %1155 = vmatprep.subr.mxu0 0.0
    %1156 = vmatpush1.msra.mxu0 0.0
    %1157 = vmatprep.subr.mxu0 0.0
    %1158 = vmatpush1.msra.mxu0 0.0
    %1159 = vmatprep.subr.mxu0 0.0
    %1160 = vmatpush1.msra.mxu0 0.0
    %1161 = vmatprep.subr.mxu0 0.0
    %1162 = vmatpush1.msra.mxu0 0.0
    %1163 = vmatprep.subr.mxu0 0.0
    %1164 = vmatpush1.msra.mxu0 0.0
    %1165 = vmatprep.subr.mxu0 0.0
    %1166 = vmatpush1.msra.mxu0 0.0
    %1167 = vmatprep.subr.mxu0 0.0
    %1168 = vmatpush1.msra.mxu0 0.0
    %1169 = vmatprep.subr.mxu0 0.0
    %1170 = vmatpush1.msra.mxu0 0.0
    %1171 = vmatprep.mubr.f32.mxu0 0.0
    %v1172 = vand.u32 %v825, 4294901760
    %v1173 = vsub.f32 %v825, %v1172
    %v1174 = vand.u32 %v1173, 4294901760
    %1175 = vmatmul.mubr.f32.gmra.mrb[0].mxu0 %v1174
    %v1176 = vpop.f32.mrb[0].mxu0
    %v1177 = vadd.f32 %v1093, %v1176
    %v1178 = vpop.f32.mrb[0].mxu0
    %1179 = vmatprep.mubr.f32.mxu0 0.0
    %v1180 = vand.u32 %v828, 4294901760
    %v1181 = vsub.f32 %v828, %v1180
    %v1182 = vand.u32 %v1181, 4294901760
    %1183 = vmatmul.mubr.f32.gmra.mrb[0].mxu0 %v1182
    %v1184 = vpop.f32.mrb[0].mxu0
    %v1185 = vadd.f32 %v1100, %v1184
    %v1186 = vpop.f32.mrb[0].mxu0
    %1187 = vdwg.mxu0
    %1188 = vmatprep.subr.mxu0 0.0
    %v1189 = vand.u32 %v812, 4294901760
    %v1190 = vsub.f32 %v812, %v1189
    %v1191 = vand.u32 %v1190, 4294901760
    %1192 = vmatpush1.msra.mxu0 %v1191
    %1193 = vmatprep.subr.mxu0 0.0
    %v1194 = vand.u32 %v813, 4294901760
    %v1195 = vsub.f32 %v813, %v1194
    %v1196 = vand.u32 %v1195, 4294901760
    %1197 = vmatpush1.msra.mxu0 %v1196
    %1198 = vmatprep.subr.mxu0 0.0
    %v1199 = vand.u32 %v814, 4294901760
    %v1200 = vsub.f32 %v814, %v1199
    %v1201 = vand.u32 %v1200, 4294901760
    %1202 = vmatpush1.msra.mxu0 %v1201
    %1203 = vmatprep.subr.mxu0 0.0
    %v1204 = vand.u32 %v815, 4294901760
    %v1205 = vsub.f32 %v815, %v1204
    %v1206 = vand.u32 %v1205, 4294901760
    %1207 = vmatpush1.msra.mxu0 %v1206
    %1208 = vmatprep.subr.mxu0 0.0
    %1209 = vmatpush1.msra.mxu0 0.0
    %1210 = vmatprep.subr.mxu0 0.0
    %1211 = vmatpush1.msra.mxu0 0.0
    %1212 = vmatprep.subr.mxu0 0.0
    %1213 = vmatpush1.msra.mxu0 0.0
    %1214 = vmatprep.subr.mxu0 0.0
    %1215 = vmatpush1.msra.mxu0 0.0
    %1216 = vmatprep.subr.mxu0 0.0
    %1217 = vmatpush1.msra.mxu0 0.0
    %1218 = vmatprep.subr.mxu0 0.0
    %1219 = vmatpush1.msra.mxu0 0.0
    %1220 = vmatprep.subr.mxu0 0.0
    %1221 = vmatpush1.msra.mxu0 0.0
    %1222 = vmatprep.subr.mxu0 0.0
    %1223 = vmatpush1.msra.mxu0 0.0
    %1224 = vmatprep.subr.mxu0 0.0
    %1225 = vmatpush1.msra.mxu0 0.0
    %1226 = vmatprep.subr.mxu0 0.0
    %1227 = vmatpush1.msra.mxu0 0.0
    %1228 = vmatprep.subr.mxu0 0.0
    %1229 = vmatpush1.msra.mxu0 0.0
    %1230 = vmatprep.subr.mxu0 0.0
    %1231 = vmatpush1.msra.mxu0 0.0
    %1232 = vmatprep.subr.mxu0 0.0
    %1233 = vmatpush1.msra.mxu0 0.0
    %1234 = vmatprep.subr.mxu0 0.0
    %1235 = vmatpush1.msra.mxu0 0.0
    %1236 = vmatprep.subr.mxu0 0.0
    %1237 = vmatpush1.msra.mxu0 0.0
    %1238 = vmatprep.subr.mxu0 0.0
    %1239 = vmatpush1.msra.mxu0 0.0
    %1240 = vmatprep.subr.mxu0 0.0
    %1241 = vmatpush1.msra.mxu0 0.0
    %1242 = vmatprep.subr.mxu0 0.0
    %1243 = vmatpush1.msra.mxu0 0.0
    %1244 = vmatprep.subr.mxu0 0.0
    %1245 = vmatpush1.msra.mxu0 0.0
    %1246 = vmatprep.subr.mxu0 0.0
    %1247 = vmatpush1.msra.mxu0 0.0
    %1248 = vmatprep.subr.mxu0 0.0
    %1249 = vmatpush1.msra.mxu0 0.0
    %1250 = vmatprep.subr.mxu0 0.0
    %1251 = vmatpush1.msra.mxu0 0.0
    %1252 = vmatprep.subr.mxu0 0.0
    %1253 = vmatpush1.msra.mxu0 0.0
    %1254 = vmatprep.subr.mxu0 0.0
    %1255 = vmatpush1.msra.mxu0 0.0
    %1256 = vmatprep.subr.mxu0 0.0
    %1257 = vmatpush1.msra.mxu0 0.0
    %1258 = vmatprep.subr.mxu0 0.0
    %1259 = vmatpush1.msra.mxu0 0.0
    %1260 = vmatprep.subr.mxu0 0.0
    %1261 = vmatpush1.msra.mxu0 0.0
    %1262 = vmatprep.subr.mxu0 0.0
    %1263 = vmatpush1.msra.mxu0 0.0
    %1264 = vmatprep.mubr.f32.mxu0 0.0
    %v1265 = vand.u32 %v825, 4294901760
    %1266 = vmatmul.mubr.f32.gmra.mrb[0].mxu0 %v1265
    %v1267 = vpop.f32.mrb[0].mxu0
    %v1268 = vadd.f32 %v1177, %v1267
    %v1269 = vpop.f32.mrb[0].mxu0
    %1270 = vmatprep.mubr.f32.mxu0 0.0
    %v1271 = vand.u32 %v828, 4294901760
    %1272 = vmatmul.mubr.f32.gmra.mrb[0].mxu0 %v1271
    %v1273 = vpop.f32.mrb[0].mxu0
    %v1274 = vadd.f32 %v1185, %v1273
    %v1275 = vpop.f32.mrb[0].mxu0
    %1276 = vdwg.mxu0
    %1277 = vmatprep.subr.mxu0 0.0
    %v1278 = vand.u32 %v812, 4294901760
    %1279 = vmatpush1.msra.mxu0 %v1278
    %1280 = vmatprep.subr.mxu0 0.0
    %v1281 = vand.u32 %v813, 4294901760
    %1282 = vmatpush1.msra.mxu0 %v1281
    %1283 = vmatprep.subr.mxu0 0.0
    %v1284 = vand.u32 %v814, 4294901760
    %1285 = vmatpush1.msra.mxu0 %v1284
    %1286 = vmatprep.subr.mxu0 0.0
    %v1287 = vand.u32 %v815, 4294901760
    %1288 = vmatpush1.msra.mxu0 %v1287
    %1289 = vmatprep.subr.mxu0 0.0
    %1290 = vmatpush1.msra.mxu0 0.0
    %1291 = vmatprep.subr.mxu0 0.0
    %1292 = vmatpush1.msra.mxu0 0.0
    %1293 = vmatprep.subr.mxu0 0.0
    %1294 = vmatpush1.msra.mxu0 0.0
    %1295 = vmatprep.subr.mxu0 0.0
    %1296 = vmatpush1.msra.mxu0 0.0
    %1297 = vmatprep.subr.mxu0 0.0
    %1298 = vmatpush1.msra.mxu0 0.0
    %1299 = vmatprep.subr.mxu0 0.0
    %1300 = vmatpush1.msra.mxu0 0.0
    %1301 = vmatprep.subr.mxu0 0.0
    %1302 = vmatpush1.msra.mxu0 0.0
    %1303 = vmatprep.subr.mxu0 0.0
    %1304 = vmatpush1.msra.mxu0 0.0
    %1305 = vmatprep.subr.mxu0 0.0
    %1306 = vmatpush1.msra.mxu0 0.0
    %1307 = vmatprep.subr.mxu0 0.0
    %1308 = vmatpush1.msra.mxu0 0.0
    %1309 = vmatprep.subr.mxu0 0.0
    %1310 = vmatpush1.msra.mxu0 0.0
    %1311 = vmatprep.subr.mxu0 0.0
    %1312 = vmatpush1.msra.mxu0 0.0
    %1313 = vmatprep.subr.mxu0 0.0
    %1314 = vmatpush1.msra.mxu0 0.0
    %1315 = vmatprep.subr.mxu0 0.0
    %1316 = vmatpush1.msra.mxu0 0.0
    %1317 = vmatprep.subr.mxu0 0.0
    %1318 = vmatpush1.msra.mxu0 0.0
    %1319 = vmatprep.subr.mxu0 0.0
    %1320 = vmatpush1.msra.mxu0 0.0
    %1321 = vmatprep.subr.mxu0 0.0
    %1322 = vmatpush1.msra.mxu0 0.0
    %1323 = vmatprep.subr.mxu0 0.0
    %1324 = vmatpush1.msra.mxu0 0.0
    %1325 = vmatprep.subr.mxu0 0.0
    %1326 = vmatpush1.msra.mxu0 0.0
    %1327 = vmatprep.subr.mxu0 0.0
    %1328 = vmatpush1.msra.mxu0 0.0
    %1329 = vmatprep.subr.mxu0 0.0
    %1330 = vmatpush1.msra.mxu0 0.0
    %1331 = vmatprep.subr.mxu0 0.0
    %1332 = vmatpush1.msra.mxu0 0.0
    %1333 = vmatprep.subr.mxu0 0.0
    %1334 = vmatpush1.msra.mxu0 0.0
    %1335 = vmatprep.subr.mxu0 0.0
    %1336 = vmatpush1.msra.mxu0 0.0
    %1337 = vmatprep.subr.mxu0 0.0
    %1338 = vmatpush1.msra.mxu0 0.0
    %1339 = vmatprep.subr.mxu0 0.0
    %1340 = vmatpush1.msra.mxu0 0.0
    %1341 = vmatprep.subr.mxu0 0.0
    %1342 = vmatpush1.msra.mxu0 0.0
    %1343 = vmatprep.subr.mxu0 0.0
    %1344 = vmatpush1.msra.mxu0 0.0
    %1345 = vmatprep.mubr.f32.mxu0 0.0
    %v1346 = vand.u32 %v825, 4294901760
    %1347 = vmatmul.mubr.f32.gmra.mrb[0].mxu0 %v1346
    %v1348 = vpop.f32.mrb[0].mxu0
    %v1349 = vadd.f32 %v1268, %v1348
    %v1350 = vpop.f32.mrb[0].mxu0
    %1351 = vmatprep.mubr.f32.mxu0 0.0
    %v1352 = vand.u32 %v828, 4294901760
    %1353 = vmatmul.mubr.f32.gmra.mrb[0].mxu0 %v1352
    %v1354 = vpop.f32.mrb[0].mxu0
    %v1355 = vadd.f32 %v1274, %v1354
    %v1356 = vpop.f32.mrb[0].mxu0
    %1357 = vdwg.mxu0
    %v1358 = vld [vmem:[#allocation12] sm:$0x1]
    %1360 = vset.pattern.permute.xlu0 64
    %1361 = vperm.xlu0 %1360, %v1349
    %v1362 = vpop.permute.xlu0 %1361
    %1365 = vset.pattern.permute.xlu0 64
    %1366 = vperm.xlu0 %1365, %v1355
    %v1367 = vpop.permute.xlu0 %1366
    %v1370 = vlaneseq
    %v1371 = vshrl.u32 %v1370, 7
    %v1372 = vsub.s32 0, %v1371
    %v1373 = vrot.slane %v1358, %v1372
    %v1375 = vmul.f32 %v1362, %v1373
    %v1376 = vmul.f32 %v1367, %v1373
    %v1377 = vld [vmem:[#allocation14] sm:$0x1]
    %v1379 = vlaneseq
    %v1380 = vshrl.u32 %v1379, 7
    %v1381 = vsub.s32 0, %v1380
    %v1382 = vrot.slane %v1377, %v1381
    %v1384 = vadd.f32 %v1375, %v1382
    %v1385 = vadd.f32 %v1376, %v1382
    %vm1386 = vcmp.gt.f32.partialorder %v1384, 20.0
    %vm1387 = vcmp.gt.f32.partialorder %v1385, 20.0
    %v1388 = vmin.f32 %v1384, 20.0
    %v1389 = vmin.f32 %v1385, 20.0
    %v1390 = vmul.f32 %v1388, 1.442695
    %v1391 = vpow.pop %v1390
    %v1392 = vmul.f32 %v1389, 1.442695
    %v1393 = vpow.pop %v1392
    %v1394 = vadd.f32 %v1391, 1.0
    %v1395 = vlog2.pop %v1394
    %v1396 = vmul.f32 %v1395, 0.6931472
    %v1397 = vmul.f32 -0.5, %v1391
    %v1398 = vadd.f32 %v1397, 1.0
    %v1399 = vmul.f32 %v1398, %v1391
    %v1400 = vand.u32 2147483647, %v1391
    %vm1401 = vcmp.lt.f32.partialorder %v1400, 0.0004427343
    %v1402 = vsel %vm1401, %v1399, %v1396
    %v1403 = vadd.f32 %v1393, 1.0
    %v1404 = vlog2.pop %v1403
    %v1405 = vmul.f32 %v1404, 0.6931472
    %v1406 = vmul.f32 -0.5, %v1393
    %v1407 = vadd.f32 %v1406, 1.0
    %v1408 = vmul.f32 %v1407, %v1393
    %v1409 = vand.u32 2147483647, %v1393
    %vm1410 = vcmp.lt.f32.partialorder %v1409, 0.0004427343
    %v1411 = vsel %vm1410, %v1408, %v1405
    %v1412 = vsel %vm1386, %v1384, %v1402
    %v1413 = vsel %vm1387, %v1385, %v1411
    %v1414 = vsel %vm823, %v1412, 0.0
    %1415 = vadd.xlane.f32.xlu0 %v1414
    %v1416 = vpop.xlane.xlu0 %1415
    %v1417 = vsel %vm823, %v1413, 0.0
    %1418 = vadd.xlane.f32.xlu0 %v1417
    %v1419 = vpop.xlane.xlu0 %1418
    %v1420 = vrcp.pop 32.0
    %v1421 = vmul.f32 %v1416, %v1420
    %v1422 = vmul.f32 %v1419, %v1420
    %v1423 = vsel %vm823, %v810, 0.0
    %1424 = vadd.xlane.f32.xlu0 %v1423
    %v1425 = vpop.xlane.xlu0 %1424
    %v1426 = vsel %vm823, %v811, 0.0
    %1427 = vadd.xlane.f32.xlu0 %v1426
    %v1428 = vpop.xlane.xlu0 %1427
    %v1429 = vmul.f32 %v1425, %v1420
    %v1430 = vmul.f32 %v1428, %v1420
    %v1431 = vld [vmem:[#allocation15] sm:$0xff]
    %v1432 = vld [vmem:[#allocation15 + $0x8] sm:$0xff]
    %v1433 = vld [vmem:[#allocation15 + $0x10] sm:$0xff]
    %v1434 = vld [vmem:[#allocation15 + $0x18] sm:$0xff]
    %v1435 = vlaneseq
    %v1436 = vshrl.u32 %v1435, 7
    %v1437 = vsub.s32 0, %v1436
    %v1438 = vrot.slane %v1421, %v1437
    %v1439 = vmul.f32 %v1438, %v1431
    %v1440 = vmul.f32 %v1438, %v1432
    %v1441 = vmul.f32 %v1438, %v1433
    %v1442 = vmul.f32 %v1438, %v1434
    %v1443 = vmul.f32 %v1439, 1.442695
    %v1444 = vpow.pop %v1443
    %v1445 = vmul.f32 %v1440, 1.442695
    %v1446 = vpow.pop %v1445
    %v1447 = vmul.f32 %v1441, 1.442695
    %v1448 = vpow.pop %v1447
    %v1449 = vmul.f32 %v1442, 1.442695
    %v1450 = vpow.pop %v1449
    %1451 = vst.msk [vmem:[#allocation2] sm:$0xff] %vm823, %v1444
    %1452 = vst.msk [vmem:[#allocation2 + $0x8] sm:$0xff] %vm823, %v1446
    %1453 = vst.msk [vmem:[#allocation2 + $0x10] sm:$0xff] %vm823, %v1448
    %1454 = vst.msk [vmem:[#allocation2 + $0x18] sm:$0xff] %vm823, %v1450
    %v1455 = vlaneseq
    %v1456 = vshrl.u32 %v1455, 7
    %v1457 = vsub.s32 1, %v1456
    %v1458 = vrot.slane %v1421, %v1457
    %v1459 = vmul.f32 %v1458, %v1431
    %v1460 = vmul.f32 %v1458, %v1432
    %v1461 = vmul.f32 %v1458, %v1433
    %v1462 = vmul.f32 %v1458, %v1434
    %v1463 = vmul.f32 %v1459, 1.442695
    %v1464 = vpow.pop %v1463
    %v1465 = vmul.f32 %v1460, 1.442695
    %v1466 = vpow.pop %v1465
    %v1467 = vmul.f32 %v1461, 1.442695
    %v1468 = vpow.pop %v1467
    %v1469 = vmul.f32 %v1462, 1.442695
    %v1470 = vpow.pop %v1469
    %s1471 = scalar_lea.vmem [#allocation2], 32
    %1472 = vst.msk [vmem:[%s1471] sm:$0xff] %vm823, %v1464
    %1473 = vst.msk [vmem:[%s1471 + $0x8] sm:$0xff] %vm823, %v1466
    %1474 = vst.msk [vmem:[%s1471 + $0x10] sm:$0xff] %vm823, %v1468
    %1475 = vst.msk [vmem:[%s1471 + $0x18] sm:$0xff] %vm823, %v1470
    %v1476 = vlaneseq
    %v1477 = vshrl.u32 %v1476, 7
    %v1478 = vsub.s32 2, %v1477
    %v1479 = vrot.slane %v1421, %v1478
    %v1480 = vmul.f32 %v1479, %v1431
    %v1481 = vmul.f32 %v1479, %v1432
    %v1482 = vmul.f32 %v1479, %v1433
    %v1483 = vmul.f32 %v1479, %v1434
    %v1484 = vmul.f32 %v1480, 1.442695
    %v1485 = vpow.pop %v1484
    %v1486 = vmul.f32 %v1481, 1.442695
    %v1487 = vpow.pop %v1486
    %v1488 = vmul.f32 %v1482, 1.442695
    %v1489 = vpow.pop %v1488
    %v1490 = vmul.f32 %v1483, 1.442695
    %v1491 = vpow.pop %v1490
    %s1492 = scalar_lea.vmem [#allocation2], 64
    %1493 = vst.msk [vmem:[%s1492] sm:$0xff] %vm823, %v1485
    %1494 = vst.msk [vmem:[%s1492 + $0x8] sm:$0xff] %vm823, %v1487
    %1495 = vst.msk [vmem:[%s1492 + $0x10] sm:$0xff] %vm823, %v1489
    %1496 = vst.msk [vmem:[%s1492 + $0x18] sm:$0xff] %vm823, %v1491
    %v1497 = vlaneseq
    %v1498 = vshrl.u32 %v1497, 7
    %v1499 = vsub.s32 3, %v1498
    %v1500 = vrot.slane %v1421, %v1499
    %v1501 = vmul.f32 %v1500, %v1431
    %v1502 = vmul.f32 %v1500, %v1432
    %v1503 = vmul.f32 %v1500, %v1433
    %v1504 = vmul.f32 %v1500, %v1434
    %v1505 = vmul.f32 %v1501, 1.442695
    %v1506 = vpow.pop %v1505
    %v1507 = vmul.f32 %v1502, 1.442695
    %v1508 = vpow.pop %v1507
    %v1509 = vmul.f32 %v1503, 1.442695
    %v1510 = vpow.pop %v1509
    %v1511 = vmul.f32 %v1504, 1.442695
    %v1512 = vpow.pop %v1511
    %s1513 = scalar_lea.vmem [#allocation2], 96
    %1514 = vst.msk [vmem:[%s1513] sm:$0xff] %vm823, %v1506
    %1515 = vst.msk [vmem:[%s1513 + $0x8] sm:$0xff] %vm823, %v1508
    %1516 = vst.msk [vmem:[%s1513 + $0x10] sm:$0xff] %vm823, %v1510
    %1517 = vst.msk [vmem:[%s1513 + $0x18] sm:$0xff] %vm823, %v1512
    %v1518 = vlaneseq
    %v1519 = vshrl.u32 %v1518, 7
    %v1520 = vsub.s32 4, %v1519
    %v1521 = vrot.slane %v1421, %v1520
    %v1522 = vmul.f32 %v1521, %v1431
    %v1523 = vmul.f32 %v1521, %v1432
    %v1524 = vmul.f32 %v1521, %v1433
    %v1525 = vmul.f32 %v1521, %v1434
    %v1526 = vmul.f32 %v1522, 1.442695
    %v1527 = vpow.pop %v1526
    %v1528 = vmul.f32 %v1523, 1.442695
    %v1529 = vpow.pop %v1528
    %v1530 = vmul.f32 %v1524, 1.442695
    %v1531 = vpow.pop %v1530
    %v1532 = vmul.f32 %v1525, 1.442695
    %v1533 = vpow.pop %v1532
    %s1534 = scalar_lea.vmem [#allocation2], 128
    %1535 = vst.msk [vmem:[%s1534] sm:$0xff] %vm823, %v1527
    %1536 = vst.msk [vmem:[%s1534 + $0x8] sm:$0xff] %vm823, %v1529
    %1537 = vst.msk [vmem:[%s1534 + $0x10] sm:$0xff] %vm823, %v1531
    %1538 = vst.msk [vmem:[%s1534 + $0x18] sm:$0xff] %vm823, %v1533
    %v1539 = vlaneseq
    %v1540 = vshrl.u32 %v1539, 7
    %v1541 = vsub.s32 5, %v1540
    %v1542 = vrot.slane %v1421, %v1541
    %v1543 = vmul.f32 %v1542, %v1431
    %v1544 = vmul.f32 %v1542, %v1432
    %v1545 = vmul.f32 %v1542, %v1433
    %v1546 = vmul.f32 %v1542, %v1434
    %v1547 = vmul.f32 %v1543, 1.442695
    %v1548 = vpow.pop %v1547
    %v1549 = vmul.f32 %v1544, 1.442695
    %v1550 = vpow.pop %v1549
    %v1551 = vmul.f32 %v1545, 1.442695
    %v1552 = vpow.pop %v1551
    %v1553 = vmul.f32 %v1546, 1.442695
    %v1554 = vpow.pop %v1553
    %s1555 = scalar_lea.vmem [#allocation2], 160
    %1556 = vst.msk [vmem:[%s1555] sm:$0xff] %vm823, %v1548
    %1557 = vst.msk [vmem:[%s1555 + $0x8] sm:$0xff] %vm823, %v1550
    %1558 = vst.msk [vmem:[%s1555 + $0x10] sm:$0xff] %vm823, %v1552
    %1559 = vst.msk [vmem:[%s1555 + $0x18] sm:$0xff] %vm823, %v1554
    %v1560 = vlaneseq
    %v1561 = vshrl.u32 %v1560, 7
    %v1562 = vsub.s32 6, %v1561
    %v1563 = vrot.slane %v1421, %v1562
    %v1564 = vmul.f32 %v1563, %v1431
    %v1565 = vmul.f32 %v1563, %v1432
    %v1566 = vmul.f32 %v1563, %v1433
    %v1567 = vmul.f32 %v1563, %v1434
    %v1568 = vmul.f32 %v1564, 1.442695
    %v1569 = vpow.pop %v1568
    %v1570 = vmul.f32 %v1565, 1.442695
    %v1571 = vpow.pop %v1570
    %v1572 = vmul.f32 %v1566, 1.442695
    %v1573 = vpow.pop %v1572
    %v1574 = vmul.f32 %v1567, 1.442695
    %v1575 = vpow.pop %v1574
    %s1576 = scalar_lea.vmem [#allocation2], 192
    %1577 = vst.msk [vmem:[%s1576] sm:$0xff] %vm823, %v1569
    %1578 = vst.msk [vmem:[%s1576 + $0x8] sm:$0xff] %vm823, %v1571
    %1579 = vst.msk [vmem:[%s1576 + $0x10] sm:$0xff] %vm823, %v1573
    %1580 = vst.msk [vmem:[%s1576 + $0x18] sm:$0xff] %vm823, %v1575
    %v1581 = vlaneseq
    %v1582 = vshrl.u32 %v1581, 7
    %v1583 = vsub.s32 7, %v1582
    %v1584 = vrot.slane %v1421, %v1583
    %v1585 = vmul.f32 %v1584, %v1431
    %v1586 = vmul.f32 %v1584, %v1432
    %v1587 = vmul.f32 %v1584, %v1433
    %v1588 = vmul.f32 %v1584, %v1434
    %v1589 = vmul.f32 %v1585, 1.442695
    %v1590 = vpow.pop %v1589
    %v1591 = vmul.f32 %v1586, 1.442695
    %v1592 = vpow.pop %v1591
    %v1593 = vmul.f32 %v1587, 1.442695
    %v1594 = vpow.pop %v1593
    %v1595 = vmul.f32 %v1588, 1.442695
    %v1596 = vpow.pop %v1595
    %s1597 = scalar_lea.vmem [#allocation2], 224
    %1598 = vst.msk [vmem:[%s1597] sm:$0xff] %vm823, %v1590
    %1599 = vst.msk [vmem:[%s1597 + $0x8] sm:$0xff] %vm823, %v1592
    %1600 = vst.msk [vmem:[%s1597 + $0x10] sm:$0xff] %vm823, %v1594
    %1601 = vst.msk [vmem:[%s1597 + $0x18] sm:$0xff] %vm823, %v1596
    %v1602 = vlaneseq
    %v1603 = vshrl.u32 %v1602, 7
    %v1604 = vsub.s32 0, %v1603
    %v1605 = vrot.slane %v1422, %v1604
    %v1606 = vmul.f32 %v1605, %v1431
    %v1607 = vmul.f32 %v1605, %v1432
    %v1608 = vmul.f32 %v1605, %v1433
    %v1609 = vmul.f32 %v1605, %v1434
    %v1610 = vmul.f32 %v1606, 1.442695
    %v1611 = vpow.pop %v1610
    %v1612 = vmul.f32 %v1607, 1.442695
    %v1613 = vpow.pop %v1612
    %v1614 = vmul.f32 %v1608, 1.442695
    %v1615 = vpow.pop %v1614
    %v1616 = vmul.f32 %v1609, 1.442695
    %v1617 = vpow.pop %v1616
    %s1618 = scalar_lea.vmem [#allocation2], 256
    %1619 = vst.msk [vmem:[%s1618] sm:$0xff] %vm823, %v1611
    %1620 = vst.msk [vmem:[%s1618 + $0x8] sm:$0xff] %vm823, %v1613
    %1621 = vst.msk [vmem:[%s1618 + $0x10] sm:$0xff] %vm823, %v1615
    %1622 = vst.msk [vmem:[%s1618 + $0x18] sm:$0xff] %vm823, %v1617
    %v1623 = vlaneseq
    %v1624 = vshrl.u32 %v1623, 7
    %v1625 = vsub.s32 1, %v1624
    %v1626 = vrot.slane %v1422, %v1625
    %v1627 = vmul.f32 %v1626, %v1431
    %v1628 = vmul.f32 %v1626, %v1432
    %v1629 = vmul.f32 %v1626, %v1433
    %v1630 = vmul.f32 %v1626, %v1434
    %v1631 = vmul.f32 %v1627, 1.442695
    %v1632 = vpow.pop %v1631
    %v1633 = vmul.f32 %v1628, 1.442695
    %v1634 = vpow.pop %v1633
    %v1635 = vmul.f32 %v1629, 1.442695
    %v1636 = vpow.pop %v1635
    %v1637 = vmul.f32 %v1630, 1.442695
    %v1638 = vpow.pop %v1637
    %s1639 = scalar_lea.vmem [#allocation2], 288
    %1640 = vst.msk [vmem:[%s1639] sm:$0xff] %vm823, %v1632
    %1641 = vst.msk [vmem:[%s1639 + $0x8] sm:$0xff] %vm823, %v1634
    %1642 = vst.msk [vmem:[%s1639 + $0x10] sm:$0xff] %vm823, %v1636
    %1643 = vst.msk [vmem:[%s1639 + $0x18] sm:$0xff] %vm823, %v1638
    %v1644 = vlaneseq
    %v1645 = vshrl.u32 %v1644, 7
    %v1646 = vsub.s32 2, %v1645
    %v1647 = vrot.slane %v1422, %v1646
    %v1648 = vmul.f32 %v1647, %v1431
    %v1649 = vmul.f32 %v1647, %v1432
    %v1650 = vmul.f32 %v1647, %v1433
    %v1651 = vmul.f32 %v1647, %v1434
    %v1652 = vmul.f32 %v1648, 1.442695
    %v1653 = vpow.pop %v1652
    %v1654 = vmul.f32 %v1649, 1.442695
    %v1655 = vpow.pop %v1654
    %v1656 = vmul.f32 %v1650, 1.442695
    %v1657 = vpow.pop %v1656
    %v1658 = vmul.f32 %v1651, 1.442695
    %v1659 = vpow.pop %v1658
    %s1660 = scalar_lea.vmem [#allocation2], 320
    %1661 = vst.msk [vmem:[%s1660] sm:$0xff] %vm823, %v1653
    %1662 = vst.msk [vmem:[%s1660 + $0x8] sm:$0xff] %vm823, %v1655
    %1663 = vst.msk [vmem:[%s1660 + $0x10] sm:$0xff] %vm823, %v1657
    %1664 = vst.msk [vmem:[%s1660 + $0x18] sm:$0xff] %vm823, %v1659
    %v1665 = vlaneseq
    %v1666 = vshrl.u32 %v1665, 7
    %v1667 = vsub.s32 3, %v1666
    %v1668 = vrot.slane %v1422, %v1667
    %v1669 = vmul.f32 %v1668, %v1431
    %v1670 = vmul.f32 %v1668, %v1432
    %v1671 = vmul.f32 %v1668, %v1433
    %v1672 = vmul.f32 %v1668, %v1434
    %v1673 = vmul.f32 %v1669, 1.442695
    %v1674 = vpow.pop %v1673
    %v1675 = vmul.f32 %v1670, 1.442695
    %v1676 = vpow.pop %v1675
    %v1677 = vmul.f32 %v1671, 1.442695
    %v1678 = vpow.pop %v1677
    %v1679 = vmul.f32 %v1672, 1.442695
    %v1680 = vpow.pop %v1679
    %s1681 = scalar_lea.vmem [#allocation2], 352
    %1682 = vst.msk [vmem:[%s1681] sm:$0xff] %vm823, %v1674
    %1683 = vst.msk [vmem:[%s1681 + $0x8] sm:$0xff] %vm823, %v1676
    %1684 = vst.msk [vmem:[%s1681 + $0x10] sm:$0xff] %vm823, %v1678
    %1685 = vst.msk [vmem:[%s1681 + $0x18] sm:$0xff] %vm823, %v1680
    %v1686 = vlaneseq
    %v1687 = vshrl.u32 %v1686, 7
    %v1688 = vsub.s32 4, %v1687
    %v1689 = vrot.slane %v1422, %v1688
    %v1690 = vmul.f32 %v1689, %v1431
    %v1691 = vmul.f32 %v1689, %v1432
    %v1692 = vmul.f32 %v1689, %v1433
    %v1693 = vmul.f32 %v1689, %v1434
    %v1694 = vmul.f32 %v1690, 1.442695
    %v1695 = vpow.pop %v1694
    %v1696 = vmul.f32 %v1691, 1.442695
    %v1697 = vpow.pop %v1696
    %v1698 = vmul.f32 %v1692, 1.442695
    %v1699 = vpow.pop %v1698
    %v1700 = vmul.f32 %v1693, 1.442695
    %v1701 = vpow.pop %v1700
    %s1702 = scalar_lea.vmem [#allocation2], 384
    %1703 = vst.msk [vmem:[%s1702] sm:$0xff] %vm823, %v1695
    %1704 = vst.msk [vmem:[%s1702 + $0x8] sm:$0xff] %vm823, %v1697
    %1705 = vst.msk [vmem:[%s1702 + $0x10] sm:$0xff] %vm823, %v1699
    %1706 = vst.msk [vmem:[%s1702 + $0x18] sm:$0xff] %vm823, %v1701
    %v1707 = vlaneseq
    %v1708 = vshrl.u32 %v1707, 7
    %v1709 = vsub.s32 5, %v1708
    %v1710 = vrot.slane %v1422, %v1709
    %v1711 = vmul.f32 %v1710, %v1431
    %v1712 = vmul.f32 %v1710, %v1432
    %v1713 = vmul.f32 %v1710, %v1433
    %v1714 = vmul.f32 %v1710, %v1434
    %v1715 = vmul.f32 %v1711, 1.442695
    %v1716 = vpow.pop %v1715
    %v1717 = vmul.f32 %v1712, 1.442695
    %v1718 = vpow.pop %v1717
    %v1719 = vmul.f32 %v1713, 1.442695
    %v1720 = vpow.pop %v1719
    %v1721 = vmul.f32 %v1714, 1.442695
    %v1722 = vpow.pop %v1721
    %s1723 = scalar_lea.vmem [#allocation2], 416
    %1724 = vst.msk [vmem:[%s1723] sm:$0xff] %vm823, %v1716
    %1725 = vst.msk [vmem:[%s1723 + $0x8] sm:$0xff] %vm823, %v1718
    %1726 = vst.msk [vmem:[%s1723 + $0x10] sm:$0xff] %vm823, %v1720
    %1727 = vst.msk [vmem:[%s1723 + $0x18] sm:$0xff] %vm823, %v1722
    %v1728 = vlaneseq
    %v1729 = vshrl.u32 %v1728, 7
    %v1730 = vsub.s32 6, %v1729
    %v1731 = vrot.slane %v1422, %v1730
    %v1732 = vmul.f32 %v1731, %v1431
    %v1733 = vmul.f32 %v1731, %v1432
    %v1734 = vmul.f32 %v1731, %v1433
    %v1735 = vmul.f32 %v1731, %v1434
    %v1736 = vmul.f32 %v1732, 1.442695
    %v1737 = vpow.pop %v1736
    %v1738 = vmul.f32 %v1733, 1.442695
    %v1739 = vpow.pop %v1738
    %v1740 = vmul.f32 %v1734, 1.442695
    %v1741 = vpow.pop %v1740
    %v1742 = vmul.f32 %v1735, 1.442695
    %v1743 = vpow.pop %v1742
    %s1744 = scalar_lea.vmem [#allocation2], 448
    %1745 = vst.msk [vmem:[%s1744] sm:$0xff] %vm823, %v1737
    %1746 = vst.msk [vmem:[%s1744 + $0x8] sm:$0xff] %vm823, %v1739
    %1747 = vst.msk [vmem:[%s1744 + $0x10] sm:$0xff] %vm823, %v1741
    %1748 = vst.msk [vmem:[%s1744 + $0x18] sm:$0xff] %vm823, %v1743
    %v1749 = vlaneseq
    %v1750 = vshrl.u32 %v1749, 7
    %v1751 = vsub.s32 7, %v1750
    %v1752 = vrot.slane %v1422, %v1751
    %v1753 = vmul.f32 %v1752, %v1431
    %v1754 = vmul.f32 %v1752, %v1432
    %v1755 = vmul.f32 %v1752, %v1433
    %v1756 = vmul.f32 %v1752, %v1434
    %v1757 = vmul.f32 %v1753, 1.442695
    %v1758 = vpow.pop %v1757
    %v1759 = vmul.f32 %v1754, 1.442695
    %v1760 = vpow.pop %v1759
    %v1761 = vmul.f32 %v1755, 1.442695
    %v1762 = vpow.pop %v1761
    %v1763 = vmul.f32 %v1756, 1.442695
    %v1764 = vpow.pop %v1763
    %s1765 = scalar_lea.vmem [#allocation2], 480
    %1766 = vst.msk [vmem:[%s1765] sm:$0xff] %vm823, %v1758
    %1767 = vst.msk [vmem:[%s1765 + $0x8] sm:$0xff] %vm823, %v1760
    %1768 = vst.msk [vmem:[%s1765 + $0x10] sm:$0xff] %vm823, %v1762
    %1769 = vst.msk [vmem:[%s1765 + $0x18] sm:$0xff] %vm823, %v1764
    %v1770 = vmul.f32 %v1349, %v1429
    %v1771 = vmul.f32 %v1355, %v1430
    %v1772 = vld [vmem:[#allocation2] sm:$0xff]
    %v1773 = vld [vmem:[#allocation2 + $0x8] sm:$0xff]
    %v1774 = vld [vmem:[#allocation2 + $0x10] sm:$0xff]
    %v1775 = vld [vmem:[#allocation2 + $0x18] sm:$0xff]
    %v1777 = vsel %vm823, 0.0, 0
    %1779 = vmatprep.subr.mxu0 0.0
    %1780 = vmatpush1.msra.mxu0 %v1772
    %1781 = vmatprep.subr.mxu0 0.0
    %1782 = vmatpush1.msra.mxu0 %v1773
    %1783 = vmatprep.subr.mxu0 0.0
    %1784 = vmatpush1.msra.mxu0 %v1774
    %1785 = vmatprep.subr.mxu0 0.0
    %1786 = vmatpush1.msra.mxu0 %v1775
    %1787 = vmatprep.subr.mxu0 0.0
    %1788 = vmatpush1.msra.mxu0 0.0
    %1789 = vmatprep.subr.mxu0 0.0
    %1790 = vmatpush1.msra.mxu0 0.0
    %1791 = vmatprep.subr.mxu0 0.0
    %1792 = vmatpush1.msra.mxu0 0.0
    %1793 = vmatprep.subr.mxu0 0.0
    %1794 = vmatpush1.msra.mxu0 0.0
    %1795 = vmatprep.subr.mxu0 0.0
    %1796 = vmatpush1.msra.mxu0 0.0
    %1797 = vmatprep.subr.mxu0 0.0
    %1798 = vmatpush1.msra.mxu0 0.0
    %1799 = vmatprep.subr.mxu0 0.0
    %1800 = vmatpush1.msra.mxu0 0.0
    %1801 = vmatprep.subr.mxu0 0.0
    %1802 = vmatpush1.msra.mxu0 0.0
    %1803 = vmatprep.subr.mxu0 0.0
    %1804 = vmatpush1.msra.mxu0 0.0
    %1805 = vmatprep.subr.mxu0 0.0
    %1806 = vmatpush1.msra.mxu0 0.0
    %1807 = vmatprep.subr.mxu0 0.0
    %1808 = vmatpush1.msra.mxu0 0.0
    %1809 = vmatprep.subr.mxu0 0.0
    %1810 = vmatpush1.msra.mxu0 0.0
    %1811 = vmatprep.subr.mxu0 0.0
    %1812 = vmatpush1.msra.mxu0 0.0
    %1813 = vmatprep.subr.mxu0 0.0
    %1814 = vmatpush1.msra.mxu0 0.0
    %1815 = vmatprep.subr.mxu0 0.0
    %1816 = vmatpush1.msra.mxu0 0.0
    %1817 = vmatprep.subr.mxu0 0.0
    %1818 = vmatpush1.msra.mxu0 0.0
    %1819 = vmatprep.subr.mxu0 0.0
    %1820 = vmatpush1.msra.mxu0 0.0
    %1821 = vmatprep.subr.mxu0 0.0
    %1822 = vmatpush1.msra.mxu0 0.0
    %1823 = vmatprep.subr.mxu0 0.0
    %1824 = vmatpush1.msra.mxu0 0.0
    %1825 = vmatprep.subr.mxu0 0.0
    %1826 = vmatpush1.msra.mxu0 0.0
    %1827 = vmatprep.subr.mxu0 0.0
    %1828 = vmatpush1.msra.mxu0 0.0
    %1829 = vmatprep.subr.mxu0 0.0
    %1830 = vmatpush1.msra.mxu0 0.0
    %1831 = vmatprep.subr.mxu0 0.0
    %1832 = vmatpush1.msra.mxu0 0.0
    %1833 = vmatprep.subr.mxu0 0.0
    %1834 = vmatpush1.msra.mxu0 0.0
    %1835 = vmatprep.subr.mxu0 0.0
    %1836 = vmatpush1.msra.mxu0 0.0
    %1837 = vmatprep.subr.mxu0 0.0
    %1838 = vmatpush1.msra.mxu0 0.0
    %1839 = vmatprep.subr.mxu0 0.0
    %1840 = vmatpush1.msra.mxu0 0.0
    %1841 = vmatprep.subr.mxu0 0.0
    %1842 = vmatpush1.msra.mxu0 0.0
    %1843 = vmatprep.mubr.f32.mxu0 0.0
    %1844 = vmatmul.mubr.f32.gmra.mrb[0].mxu0 %v1777
    %v1845 = vpop.f32.mrb[0].mxu0
    %v1846 = vadd.f32 %v1770, %v1845
    %v1847 = vpop.f32.mrb[0].mxu0
    %1848 = vdwg.mxu0
    %v1849 = vmul.f32 %v1846, %v1846
    %vm1850 = vcmask 253952
    %v1851 = vsel %vm1850, %v1849, 0.0
    %1852 = vadd.xlane.f32.xlu0 %v1851
    %v1853 = vpop.xlane.xlu0 %1852
    %v1854 = vrsqrt.pop %v1853
    %v1855 = vmul.f32 %v1853, %v1854
    %vm1856 = vcmp.eq.f32.partialorder %v1853, inf
    %v1857 = vsel %vm1856, %v1853, %v1855
    %vm1858 = vcmp.eq.f32.partialorder %v1853, 0.0
    %v1859 = vand.u32 %v1853, 2147483648
    %v1860 = vsel %vm1858, %v1859, %v1857
    %v1861 = vadd.f32 %v1860, 1e-06
    %v1862 = vrcp.pop %v1861
    %v1863 = vmul.f32 %v1846, %v1862
    %vm1864 = vcmp.eq.s32.totalorder %v664, 0
    %vm1865 = vcmp.eq.s32.totalorder %v665, 0
    %v1866 = vsel %vm1864, 1.0, 0.0
    %v1867 = vsel %vm1865, 1.0, 0.0
    %v1868 = vlaneseq
    %v1869 = vshrl.u32 %v1868, 7
    %v1870 = vsub.s32 0, %v1869
    %v1871 = vrot.slane %v1863, %v1870
    %v1872 = vmul.f32 %v1866, %v1871
    %v1873 = vmul.f32 %v1867, %v1871
    %v1874 = vadd.f32 %v1872, 0.0
    %v1875 = vadd.f32 %v1873, 0.0
    %v1876 = vld [vmem:[%s1618] sm:$0xff]
    %v1877 = vld [vmem:[%s1618 + $0x8] sm:$0xff]
    %v1878 = vld [vmem:[%s1618 + $0x10] sm:$0xff]
    %v1879 = vld [vmem:[%s1618 + $0x18] sm:$0xff]
    %1880 = vmatprep.subr.mxu0 0.0
    %1881 = vmatpush1.msra.mxu0 %v1876
    %1882 = vmatprep.subr.mxu0 0.0
    %1883 = vmatpush1.msra.mxu0 %v1877
    %1884 = vmatprep.subr.mxu0 0.0
    %1885 = vmatpush1.msra.mxu0 %v1878
    %1886 = vmatprep.subr.mxu0 0.0
    %1887 = vmatpush1.msra.mxu0 %v1879
    %1888 = vmatprep.subr.mxu0 0.0
    %1889 = vmatpush1.msra.mxu0 0.0
    %1890 = vmatprep.subr.mxu0 0.0
    %1891 = vmatpush1.msra.mxu0 0.0
    %1892 = vmatprep.subr.mxu0 0.0
    %1893 = vmatpush1.msra.mxu0 0.0
    %1894 = vmatprep.subr.mxu0 0.0
    %1895 = vmatpush1.msra.mxu0 0.0
    %1896 = vmatprep.subr.mxu0 0.0
    %1897 = vmatpush1.msra.mxu0 0.0
    %1898 = vmatprep.subr.mxu0 0.0
    %1899 = vmatpush1.msra.mxu0 0.0
    %1900 = vmatprep.subr.mxu0 0.0
    %1901 = vmatpush1.msra.mxu0 0.0
    %1902 = vmatprep.subr.mxu0 0.0
    %1903 = vmatpush1.msra.mxu0 0.0
    %1904 = vmatprep.subr.mxu0 0.0
    %1905 = vmatpush1.msra.mxu0 0.0
    %1906 = vmatprep.subr.mxu0 0.0
    %1907 = vmatpush1.msra.mxu0 0.0
    %1908 = vmatprep.subr.mxu0 0.0
    %1909 = vmatpush1.msra.mxu0 0.0
    %1910 = vmatprep.subr.mxu0 0.0
    %1911 = vmatpush1.msra.mxu0 0.0
    %1912 = vmatprep.subr.mxu0 0.0
    %1913 = vmatpush1.msra.mxu0 0.0
    %1914 = vmatprep.subr.mxu0 0.0
    %1915 = vmatpush1.msra.mxu0 0.0
    %1916 = vmatprep.subr.mxu0 0.0
    %1917 = vmatpush1.msra.mxu0 0.0
    %1918 = vmatprep.subr.mxu0 0.0
    %1919 = vmatpush1.msra.mxu0 0.0
    %1920 = vmatprep.subr.mxu0 0.0
    %1921 = vmatpush1.msra.mxu0 0.0
    %1922 = vmatprep.subr.mxu0 0.0
    %1923 = vmatpush1.msra.mxu0 0.0
    %1924 = vmatprep.subr.mxu0 0.0
    %1925 = vmatpush1.msra.mxu0 0.0
    %1926 = vmatprep.subr.mxu0 0.0
    %1927 = vmatpush1.msra.mxu0 0.0
    %1928 = vmatprep.subr.mxu0 0.0
    %1929 = vmatpush1.msra.mxu0 0.0
    %1930 = vmatprep.subr.mxu0 0.0
    %1931 = vmatpush1.msra.mxu0 0.0
    %1932 = vmatprep.subr.mxu0 0.0
    %1933 = vmatpush1.msra.mxu0 0.0
    %1934 = vmatprep.subr.mxu0 0.0
    %1935 = vmatpush1.msra.mxu0 0.0
    %1936 = vmatprep.subr.mxu0 0.0
    %1937 = vmatpush1.msra.mxu0 0.0
    %1938 = vmatprep.subr.mxu0 0.0
    %1939 = vmatpush1.msra.mxu0 0.0
    %1940 = vmatprep.subr.mxu0 0.0
    %1941 = vmatpush1.msra.mxu0 0.0
    %1942 = vmatprep.subr.mxu0 0.0
    %1943 = vmatpush1.msra.mxu0 0.0
    %1944 = vmatprep.mubr.f32.mxu0 0.0
    %1945 = vmatmul.mubr.f32.gmra.mrb[0].mxu0 %v1777
    %v1946 = vpop.f32.mrb[0].mxu0
    %v1947 = vadd.f32 %v1771, %v1946
    %v1948 = vpop.f32.mrb[0].mxu0
    %1949 = vdwg.mxu0
    %v1950 = vmul.f32 %v1947, %v1947
    %v1951 = vsel %vm1850, %v1950, 0.0
    %1952 = vadd.xlane.f32.xlu0 %v1951
    %v1953 = vpop.xlane.xlu0 %1952
    %v1954 = vrsqrt.pop %v1953
    %v1955 = vmul.f32 %v1953, %v1954
    %vm1956 = vcmp.eq.f32.partialorder %v1953, inf
    %v1957 = vsel %vm1956, %v1953, %v1955
    %vm1958 = vcmp.eq.f32.partialorder %v1953, 0.0
    %v1959 = vand.u32 %v1953, 2147483648
    %v1960 = vsel %vm1958, %v1959, %v1957
    %v1961 = vadd.f32 %v1960, 1e-06
    %v1962 = vrcp.pop %v1961
    %v1963 = vmul.f32 %v1947, %v1962
    %vm1964 = vcmp.eq.s32.totalorder %v664, 8
    %vm1965 = vcmp.eq.s32.totalorder %v665, 8
    %v1966 = vsel %vm1964, 1.0, 0.0
    %v1967 = vsel %vm1965, 1.0, 0.0
    %v1968 = vlaneseq
    %v1969 = vshrl.u32 %v1968, 7
    %v1970 = vsub.s32 0, %v1969
    %v1971 = vrot.slane %v1963, %v1970
    %v1972 = vmul.f32 %v1966, %v1971
    %v1973 = vmul.f32 %v1967, %v1971
    %v1974 = vadd.f32 %v1874, %v1972
    %v1975 = vadd.f32 %v1875, %v1973
    %v1976 = vld [vmem:[%s1471] sm:$0xff]
    %v1977 = vld [vmem:[%s1471 + $0x8] sm:$0xff]
    %v1978 = vld [vmem:[%s1471 + $0x10] sm:$0xff]
    %v1979 = vld [vmem:[%s1471 + $0x18] sm:$0xff]
    %v1981 = vrot.slane %v1770, 1
    %v1984 = vsel %vm823, %v1863, 0
    %1986 = vmatprep.subr.mxu0 0.0
    %1987 = vmatpush1.msra.mxu0 %v1976
    %1988 = vmatprep.subr.mxu0 0.0
    %1989 = vmatpush1.msra.mxu0 %v1977
    %1990 = vmatprep.subr.mxu0 0.0
    %1991 = vmatpush1.msra.mxu0 %v1978
    %1992 = vmatprep.subr.mxu0 0.0
    %1993 = vmatpush1.msra.mxu0 %v1979
    %1994 = vmatprep.subr.mxu0 0.0
    %1995 = vmatpush1.msra.mxu0 0.0
    %1996 = vmatprep.subr.mxu0 0.0
    %1997 = vmatpush1.msra.mxu0 0.0
    %1998 = vmatprep.subr.mxu0 0.0
    %1999 = vmatpush1.msra.mxu0 0.0
    %2000 = vmatprep.subr.mxu0 0.0
    %2001 = vmatpush1.msra.mxu0 0.0
    %2002 = vmatprep.subr.mxu0 0.0
    %2003 = vmatpush1.msra.mxu0 0.0
    %2004 = vmatprep.subr.mxu0 0.0
    %2005 = vmatpush1.msra.mxu0 0.0
    %2006 = vmatprep.subr.mxu0 0.0
    %2007 = vmatpush1.msra.mxu0 0.0
    %2008 = vmatprep.subr.mxu0 0.0
    %2009 = vmatpush1.msra.mxu0 0.0
    %2010 = vmatprep.subr.mxu0 0.0
    %2011 = vmatpush1.msra.mxu0 0.0
    %2012 = vmatprep.subr.mxu0 0.0
    %2013 = vmatpush1.msra.mxu0 0.0
    %2014 = vmatprep.subr.mxu0 0.0
    %2015 = vmatpush1.msra.mxu0 0.0
    %2016 = vmatprep.subr.mxu0 0.0
    %2017 = vmatpush1.msra.mxu0 0.0
    %2018 = vmatprep.subr.mxu0 0.0
    %2019 = vmatpush1.msra.mxu0 0.0
    %2020 = vmatprep.subr.mxu0 0.0
    %2021 = vmatpush1.msra.mxu0 0.0
    %2022 = vmatprep.subr.mxu0 0.0
    %2023 = vmatpush1.msra.mxu0 0.0
    %2024 = vmatprep.subr.mxu0 0.0
    %2025 = vmatpush1.msra.mxu0 0.0
    %2026 = vmatprep.subr.mxu0 0.0
    %2027 = vmatpush1.msra.mxu0 0.0
    %2028 = vmatprep.subr.mxu0 0.0
    %2029 = vmatpush1.msra.mxu0 0.0
    %2030 = vmatprep.subr.mxu0 0.0
    %2031 = vmatpush1.msra.mxu0 0.0
    %2032 = vmatprep.subr.mxu0 0.0
    %2033 = vmatpush1.msra.mxu0 0.0
    %2034 = vmatprep.subr.mxu0 0.0
    %2035 = vmatpush1.msra.mxu0 0.0
    %2036 = vmatprep.subr.mxu0 0.0
    %2037 = vmatpush1.msra.mxu0 0.0
    %2038 = vmatprep.subr.mxu0 0.0
    %2039 = vmatpush1.msra.mxu0 0.0
    %2040 = vmatprep.subr.mxu0 0.0
    %2041 = vmatpush1.msra.mxu0 0.0
    %2042 = vmatprep.subr.mxu0 0.0
    %2043 = vmatpush1.msra.mxu0 0.0
    %2044 = vmatprep.subr.mxu0 0.0
    %2045 = vmatpush1.msra.mxu0 0.0
    %2046 = vmatprep.subr.mxu0 0.0
    %2047 = vmatpush1.msra.mxu0 0.0
    %2048 = vmatprep.subr.mxu0 0.0
    %2049 = vmatpush1.msra.mxu0 0.0
    %2050 = vmatprep.mubr.f32.mxu0 0.0
    %2051 = vmatmul.mubr.f32.gmra.mrb[0].mxu0 %v1984
    %v2052 = vpop.f32.mrb[0].mxu0
    %v2053 = vadd.f32 %v1981, %v2052
    %v2054 = vpop.f32.mrb[0].mxu0
    %2055 = vdwg.mxu0
    %v2056 = vmul.f32 %v2053, %v2053
    %v2057 = vsel %vm1850, %v2056, 0.0
    %2058 = vadd.xlane.f32.xlu0 %v2057
    %v2059 = vpop.xlane.xlu0 %2058
    %v2060 = vrsqrt.pop %v2059
    %v2061 = vmul.f32 %v2059, %v2060
    %vm2062 = vcmp.eq.f32.partialorder %v2059, inf
    %v2063 = vsel %vm2062, %v2059, %v2061
    %vm2064 = vcmp.eq.f32.partialorder %v2059, 0.0
    %v2065 = vand.u32 %v2059, 2147483648
    %v2066 = vsel %vm2064, %v2065, %v2063
    %v2067 = vadd.f32 %v2066, 1e-06
    %v2068 = vrcp.pop %v2067
    %v2069 = vmul.f32 %v2053, %v2068
    %vm2070 = vcmp.eq.s32.totalorder %v664, 1
    %vm2071 = vcmp.eq.s32.totalorder %v665, 1
    %v2072 = vsel %vm2070, 1.0, 0.0
    %v2073 = vsel %vm2071, 1.0, 0.0
    %v2074 = vlaneseq
    %v2075 = vshrl.u32 %v2074, 7
    %v2076 = vsub.s32 0, %v2075
    %v2077 = vrot.slane %v2069, %v2076
    %v2078 = vmul.f32 %v2072, %v2077
    %v2079 = vmul.f32 %v2073, %v2077
    %v2080 = vadd.f32 %v1974, %v2078
    %v2081 = vadd.f32 %v1975, %v2079
    %v2082 = vld [vmem:[%s1639] sm:$0xff]
    %v2083 = vld [vmem:[%s1639 + $0x8] sm:$0xff]
    %v2084 = vld [vmem:[%s1639 + $0x10] sm:$0xff]
    %v2085 = vld [vmem:[%s1639 + $0x18] sm:$0xff]
    %v2087 = vrot.slane %v1771, 1
    %v2090 = vsel %vm823, %v1963, 0
    %2092 = vmatprep.subr.mxu0 0.0
    %2093 = vmatpush1.msra.mxu0 %v2082
    %2094 = vmatprep.subr.mxu0 0.0
    %2095 = vmatpush1.msra.mxu0 %v2083
    %2096 = vmatprep.subr.mxu0 0.0
    %2097 = vmatpush1.msra.mxu0 %v2084
    %2098 = vmatprep.subr.mxu0 0.0
    %2099 = vmatpush1.msra.mxu0 %v2085
    %2100 = vmatprep.subr.mxu0 0.0
    %2101 = vmatpush1.msra.mxu0 0.0
    %2102 = vmatprep.subr.mxu0 0.0
    %2103 = vmatpush1.msra.mxu0 0.0
    %2104 = vmatprep.subr.mxu0 0.0
    %2105 = vmatpush1.msra.mxu0 0.0
    %2106 = vmatprep.subr.mxu0 0.0
    %2107 = vmatpush1.msra.mxu0 0.0
    %2108 = vmatprep.subr.mxu0 0.0
    %2109 = vmatpush1.msra.mxu0 0.0
    %2110 = vmatprep.subr.mxu0 0.0
    %2111 = vmatpush1.msra.mxu0 0.0
    %2112 = vmatprep.subr.mxu0 0.0
    %2113 = vmatpush1.msra.mxu0 0.0
    %2114 = vmatprep.subr.mxu0 0.0
    %2115 = vmatpush1.msra.mxu0 0.0
    %2116 = vmatprep.subr.mxu0 0.0
    %2117 = vmatpush1.msra.mxu0 0.0
    %2118 = vmatprep.subr.mxu0 0.0
    %2119 = vmatpush1.msra.mxu0 0.0
    %2120 = vmatprep.subr.mxu0 0.0
    %2121 = vmatpush1.msra.mxu0 0.0
    %2122 = vmatprep.subr.mxu0 0.0
    %2123 = vmatpush1.msra.mxu0 0.0
    %2124 = vmatprep.subr.mxu0 0.0
    %2125 = vmatpush1.msra.mxu0 0.0
    %2126 = vmatprep.subr.mxu0 0.0
    %2127 = vmatpush1.msra.mxu0 0.0
    %2128 = vmatprep.subr.mxu0 0.0
    %2129 = vmatpush1.msra.mxu0 0.0
    %2130 = vmatprep.subr.mxu0 0.0
    %2131 = vmatpush1.msra.mxu0 0.0
    %2132 = vmatprep.subr.mxu0 0.0
    %2133 = vmatpush1.msra.mxu0 0.0
    %2134 = vmatprep.subr.mxu0 0.0
    %2135 = vmatpush1.msra.mxu0 0.0
    %2136 = vmatprep.subr.mxu0 0.0
    %2137 = vmatpush1.msra.mxu0 0.0
    %2138 = vmatprep.subr.mxu0 0.0
    %2139 = vmatpush1.msra.mxu0 0.0
    %2140 = vmatprep.subr.mxu0 0.0
    %2141 = vmatpush1.msra.mxu0 0.0
    %2142 = vmatprep.subr.mxu0 0.0
    %2143 = vmatpush1.msra.mxu0 0.0
    %2144 = vmatprep.subr.mxu0 0.0
    %2145 = vmatpush1.msra.mxu0 0.0
    %2146 = vmatprep.subr.mxu0 0.0
    %2147 = vmatpush1.msra.mxu0 0.0
    %2148 = vmatprep.subr.mxu0 0.0
    %2149 = vmatpush1.msra.mxu0 0.0
    %2150 = vmatprep.subr.mxu0 0.0
    %2151 = vmatpush1.msra.mxu0 0.0
    %2152 = vmatprep.subr.mxu0 0.0
    %2153 = vmatpush1.msra.mxu0 0.0
    %2154 = vmatprep.subr.mxu0 0.0
    %2155 = vmatpush1.msra.mxu0 0.0
    %2156 = vmatprep.mubr.f32.mxu0 0.0
    %2157 = vmatmul.mubr.f32.gmra.mrb[0].mxu0 %v2090
    %v2158 = vpop.f32.mrb[0].mxu0
    %v2159 = vadd.f32 %v2087, %v2158
    %v2160 = vpop.f32.mrb[0].mxu0
    %2161 = vdwg.mxu0
    %v2162 = vmul.f32 %v2159, %v2159
    %v2163 = vsel %vm1850, %v2162, 0.0
    %2164 = vadd.xlane.f32.xlu0 %v2163
    %v2165 = vpop.xlane.xlu0 %2164
    %v2166 = vrsqrt.pop %v2165
    %v2167 = vmul.f32 %v2165, %v2166
    %vm2168 = vcmp.eq.f32.partialorder %v2165, inf
    %v2169 = vsel %vm2168, %v2165, %v2167
    %vm2170 = vcmp.eq.f32.partialorder %v2165, 0.0
    %v2171 = vand.u32 %v2165, 2147483648
    %v2172 = vsel %vm2170, %v2171, %v2169
    %v2173 = vadd.f32 %v2172, 1e-06
    %v2174 = vrcp.pop %v2173
    %v2175 = vmul.f32 %v2159, %v2174
    %vm2176 = vcmp.eq.s32.totalorder %v664, 9
    %vm2177 = vcmp.eq.s32.totalorder %v665, 9
    %v2178 = vsel %vm2176, 1.0, 0.0
    %v2179 = vsel %vm2177, 1.0, 0.0
    %v2180 = vlaneseq
    %v2181 = vshrl.u32 %v2180, 7
    %v2182 = vsub.s32 0, %v2181
    %v2183 = vrot.slane %v2175, %v2182
    %v2184 = vmul.f32 %v2178, %v2183
    %v2185 = vmul.f32 %v2179, %v2183
    %v2186 = vadd.f32 %v2080, %v2184
    %v2187 = vadd.f32 %v2081, %v2185
    %v2188 = vld [vmem:[%s1492] sm:$0xff]
    %v2189 = vld [vmem:[%s1492 + $0x8] sm:$0xff]
    %v2190 = vld [vmem:[%s1492 + $0x10] sm:$0xff]
    %v2191 = vld [vmem:[%s1492 + $0x18] sm:$0xff]
    %v2192 = vrot.slane %v1770, 2
    %v2195 = vsel %vm823, %v2069, 0
    %2197 = vmatprep.subr.mxu0 0.0
    %2198 = vmatpush1.msra.mxu0 %v2188
    %2199 = vmatprep.subr.mxu0 0.0
    %2200 = vmatpush1.msra.mxu0 %v2189
    %2201 = vmatprep.subr.mxu0 0.0
    %2202 = vmatpush1.msra.mxu0 %v2190
    %2203 = vmatprep.subr.mxu0 0.0
    %2204 = vmatpush1.msra.mxu0 %v2191
    %2205 = vmatprep.subr.mxu0 0.0
    %2206 = vmatpush1.msra.mxu0 0.0
    %2207 = vmatprep.subr.mxu0 0.0
    %2208 = vmatpush1.msra.mxu0 0.0
    %2209 = vmatprep.subr.mxu0 0.0
    %2210 = vmatpush1.msra.mxu0 0.0
    %2211 = vmatprep.subr.mxu0 0.0
    %2212 = vmatpush1.msra.mxu0 0.0
    %2213 = vmatprep.subr.mxu0 0.0
    %2214 = vmatpush1.msra.mxu0 0.0
    %2215 = vmatprep.subr.mxu0 0.0
    %2216 = vmatpush1.msra.mxu0 0.0
    %2217 = vmatprep.subr.mxu0 0.0
    %2218 = vmatpush1.msra.mxu0 0.0
    %2219 = vmatprep.subr.mxu0 0.0
    %2220 = vmatpush1.msra.mxu0 0.0
    %2221 = vmatprep.subr.mxu0 0.0
    %2222 = vmatpush1.msra.mxu0 0.0
    %2223 = vmatprep.subr.mxu0 0.0
    %2224 = vmatpush1.msra.mxu0 0.0
    %2225 = vmatprep.subr.mxu0 0.0
    %2226 = vmatpush1.msra.mxu0 0.0
    %2227 = vmatprep.subr.mxu0 0.0
    %2228 = vmatpush1.msra.mxu0 0.0
    %2229 = vmatprep.subr.mxu0 0.0
    %2230 = vmatpush1.msra.mxu0 0.0
    %2231 = vmatprep.subr.mxu0 0.0
    %2232 = vmatpush1.msra.mxu0 0.0
    %2233 = vmatprep.subr.mxu0 0.0
    %2234 = vmatpush1.msra.mxu0 0.0
    %2235 = vmatprep.subr.mxu0 0.0
    %2236 = vmatpush1.msra.mxu0 0.0
    %2237 = vmatprep.subr.mxu0 0.0
    %2238 = vmatpush1.msra.mxu0 0.0
    %2239 = vmatprep.subr.mxu0 0.0
    %2240 = vmatpush1.msra.mxu0 0.0
    %2241 = vmatprep.subr.mxu0 0.0
    %2242 = vmatpush1.msra.mxu0 0.0
    %2243 = vmatprep.subr.mxu0 0.0
    %2244 = vmatpush1.msra.mxu0 0.0
    %2245 = vmatprep.subr.mxu0 0.0
    %2246 = vmatpush1.msra.mxu0 0.0
    %2247 = vmatprep.subr.mxu0 0.0
    %2248 = vmatpush1.msra.mxu0 0.0
    %2249 = vmatprep.subr.mxu0 0.0
    %2250 = vmatpush1.msra.mxu0 0.0
    %2251 = vmatprep.subr.mxu0 0.0
    %2252 = vmatpush1.msra.mxu0 0.0
    %2253 = vmatprep.subr.mxu0 0.0
    %2254 = vmatpush1.msra.mxu0 0.0
    %2255 = vmatprep.subr.mxu0 0.0
    %2256 = vmatpush1.msra.mxu0 0.0
    %2257 = vmatprep.subr.mxu0 0.0
    %2258 = vmatpush1.msra.mxu0 0.0
    %2259 = vmatprep.subr.mxu0 0.0
    %2260 = vmatpush1.msra.mxu0 0.0
    %2261 = vmatprep.mubr.f32.mxu0 0.0
    %2262 = vmatmul.mubr.f32.gmra.mrb[0].mxu0 %v2195
    %v2263 = vpop.f32.mrb[0].mxu0
    %v2264 = vadd.f32 %v2192, %v2263
    %v2265 = vpop.f32.mrb[0].mxu0
    %2266 = vdwg.mxu0
    %v2267 = vmul.f32 %v2264, %v2264
    %v2268 = vsel %vm1850, %v2267, 0.0
    %2269 = vadd.xlane.f32.xlu0 %v2268
    %v2270 = vpop.xlane.xlu0 %2269
    %v2271 = vrsqrt.pop %v2270
    %v2272 = vmul.f32 %v2270, %v2271
    %vm2273 = vcmp.eq.f32.partialorder %v2270, inf
    %v2274 = vsel %vm2273, %v2270, %v2272
    %vm2275 = vcmp.eq.f32.partialorder %v2270, 0.0
    %v2276 = vand.u32 %v2270, 2147483648
    %v2277 = vsel %vm2275, %v2276, %v2274
    %v2278 = vadd.f32 %v2277, 1e-06
    %v2279 = vrcp.pop %v2278
    %v2280 = vmul.f32 %v2264, %v2279
    %vm2281 = vcmp.eq.s32.totalorder %v664, 2
    %vm2282 = vcmp.eq.s32.totalorder %v665, 2
    %v2283 = vsel %vm2281, 1.0, 0.0
    %v2284 = vsel %vm2282, 1.0, 0.0
    %v2285 = vlaneseq
    %v2286 = vshrl.u32 %v2285, 7
    %v2287 = vsub.s32 0, %v2286
    %v2288 = vrot.slane %v2280, %v2287
    %v2289 = vmul.f32 %v2283, %v2288
    %v2290 = vmul.f32 %v2284, %v2288
    %v2291 = vadd.f32 %v2186, %v2289
    %v2292 = vadd.f32 %v2187, %v2290
    %v2293 = vld [vmem:[%s1660] sm:$0xff]
    %v2294 = vld [vmem:[%s1660 + $0x8] sm:$0xff]
    %v2295 = vld [vmem:[%s1660 + $0x10] sm:$0xff]
    %v2296 = vld [vmem:[%s1660 + $0x18] sm:$0xff]
    %v2297 = vrot.slane %v1771, 2
    %v2300 = vsel %vm823, %v2175, 0
    %2302 = vmatprep.subr.mxu0 0.0
    %2303 = vmatpush1.msra.mxu0 %v2293
    %2304 = vmatprep.subr.mxu0 0.0
    %2305 = vmatpush1.msra.mxu0 %v2294
    %2306 = vmatprep.subr.mxu0 0.0
    %2307 = vmatpush1.msra.mxu0 %v2295
    %2308 = vmatprep.subr.mxu0 0.0
    %2309 = vmatpush1.msra.mxu0 %v2296
    %2310 = vmatprep.subr.mxu0 0.0
    %2311 = vmatpush1.msra.mxu0 0.0
    %2312 = vmatprep.subr.mxu0 0.0
    %2313 = vmatpush1.msra.mxu0 0.0
    %2314 = vmatprep.subr.mxu0 0.0
    %2315 = vmatpush1.msra.mxu0 0.0
    %2316 = vmatprep.subr.mxu0 0.0
    %2317 = vmatpush1.msra.mxu0 0.0
    %2318 = vmatprep.subr.mxu0 0.0
    %2319 = vmatpush1.msra.mxu0 0.0
    %2320 = vmatprep.subr.mxu0 0.0
    %2321 = vmatpush1.msra.mxu0 0.0
    %2322 = vmatprep.subr.mxu0 0.0
    %2323 = vmatpush1.msra.mxu0 0.0
    %2324 = vmatprep.subr.mxu0 0.0
    %2325 = vmatpush1.msra.mxu0 0.0
    %2326 = vmatprep.subr.mxu0 0.0
    %2327 = vmatpush1.msra.mxu0 0.0
    %2328 = vmatprep.subr.mxu0 0.0
    %2329 = vmatpush1.msra.mxu0 0.0
    %2330 = vmatprep.subr.mxu0 0.0
    %2331 = vmatpush1.msra.mxu0 0.0
    %2332 = vmatprep.subr.mxu0 0.0
    %2333 = vmatpush1.msra.mxu0 0.0
    %2334 = vmatprep.subr.mxu0 0.0
    %2335 = vmatpush1.msra.mxu0 0.0
    %2336 = vmatprep.subr.mxu0 0.0
    %2337 = vmatpush1.msra.mxu0 0.0
    %2338 = vmatprep.subr.mxu0 0.0
    %2339 = vmatpush1.msra.mxu0 0.0
    %2340 = vmatprep.subr.mxu0 0.0
    %2341 = vmatpush1.msra.mxu0 0.0
    %2342 = vmatprep.subr.mxu0 0.0
    %2343 = vmatpush1.msra.mxu0 0.0
    %2344 = vmatprep.subr.mxu0 0.0
    %2345 = vmatpush1.msra.mxu0 0.0
    %2346 = vmatprep.subr.mxu0 0.0
    %2347 = vmatpush1.msra.mxu0 0.0
    %2348 = vmatprep.subr.mxu0 0.0
    %2349 = vmatpush1.msra.mxu0 0.0
    %2350 = vmatprep.subr.mxu0 0.0
    %2351 = vmatpush1.msra.mxu0 0.0
    %2352 = vmatprep.subr.mxu0 0.0
    %2353 = vmatpush1.msra.mxu0 0.0
    %2354 = vmatprep.subr.mxu0 0.0
    %2355 = vmatpush1.msra.mxu0 0.0
    %2356 = vmatprep.subr.mxu0 0.0
    %2357 = vmatpush1.msra.mxu0 0.0
    %2358 = vmatprep.subr.mxu0 0.0
    %2359 = vmatpush1.msra.mxu0 0.0
    %2360 = vmatprep.subr.mxu0 0.0
    %2361 = vmatpush1.msra.mxu0 0.0
    %2362 = vmatprep.subr.mxu0 0.0
    %2363 = vmatpush1.msra.mxu0 0.0
    %2364 = vmatprep.subr.mxu0 0.0
    %2365 = vmatpush1.msra.mxu0 0.0
    %2366 = vmatprep.mubr.f32.mxu0 0.0
    %2367 = vmatmul.mubr.f32.gmra.mrb[0].mxu0 %v2300
    %v2368 = vpop.f32.mrb[0].mxu0
    %v2369 = vadd.f32 %v2297, %v2368
    %v2370 = vpop.f32.mrb[0].mxu0
    %2371 = vdwg.mxu0
    %v2372 = vmul.f32 %v2369, %v2369
    %v2373 = vsel %vm1850, %v2372, 0.0
    %2374 = vadd.xlane.f32.xlu0 %v2373
    %v2375 = vpop.xlane.xlu0 %2374
    %v2376 = vrsqrt.pop %v2375
    %v2377 = vmul.f32 %v2375, %v2376
    %vm2378 = vcmp.eq.f32.partialorder %v2375, inf
    %v2379 = vsel %vm2378, %v2375, %v2377
    %vm2380 = vcmp.eq.f32.partialorder %v2375, 0.0
    %v2381 = vand.u32 %v2375, 2147483648
    %v2382 = vsel %vm2380, %v2381, %v2379
    %v2383 = vadd.f32 %v2382, 1e-06
    %v2384 = vrcp.pop %v2383
    %v2385 = vmul.f32 %v2369, %v2384
    %vm2386 = vcmp.eq.s32.totalorder %v664, 10
    %vm2387 = vcmp.eq.s32.totalorder %v665, 10
    %v2388 = vsel %vm2386, 1.0, 0.0
    %v2389 = vsel %vm2387, 1.0, 0.0
    %v2390 = vlaneseq
    %v2391 = vshrl.u32 %v2390, 7
    %v2392 = vsub.s32 0, %v2391
    %v2393 = vrot.slane %v2385, %v2392
    %v2394 = vmul.f32 %v2388, %v2393
    %v2395 = vmul.f32 %v2389, %v2393
    %v2396 = vadd.f32 %v2291, %v2394
    %v2397 = vadd.f32 %v2292, %v2395
    %v2398 = vld [vmem:[%s1513] sm:$0xff]
    %v2399 = vld [vmem:[%s1513 + $0x8] sm:$0xff]
    %v2400 = vld [vmem:[%s1513 + $0x10] sm:$0xff]
    %v2401 = vld [vmem:[%s1513 + $0x18] sm:$0xff]
    %v2402 = vrot.slane %v1770, 3
    %v2405 = vsel %vm823, %v2280, 0
    %2407 = vmatprep.subr.mxu0 0.0
    %2408 = vmatpush1.msra.mxu0 %v2398
    %2409 = vmatprep.subr.mxu0 0.0
    %2410 = vmatpush1.msra.mxu0 %v2399
    %2411 = vmatprep.subr.mxu0 0.0
    %2412 = vmatpush1.msra.mxu0 %v2400
    %2413 = vmatprep.subr.mxu0 0.0
    %2414 = vmatpush1.msra.mxu0 %v2401
    %2415 = vmatprep.subr.mxu0 0.0
    %2416 = vmatpush1.msra.mxu0 0.0
    %2417 = vmatprep.subr.mxu0 0.0
    %2418 = vmatpush1.msra.mxu0 0.0
    %2419 = vmatprep.subr.mxu0 0.0
    %2420 = vmatpush1.msra.mxu0 0.0
    %2421 = vmatprep.subr.mxu0 0.0
    %2422 = vmatpush1.msra.mxu0 0.0
    %2423 = vmatprep.subr.mxu0 0.0
    %2424 = vmatpush1.msra.mxu0 0.0
    %2425 = vmatprep.subr.mxu0 0.0
    %2426 = vmatpush1.msra.mxu0 0.0
    %2427 = vmatprep.subr.mxu0 0.0
    %2428 = vmatpush1.msra.mxu0 0.0
    %2429 = vmatprep.subr.mxu0 0.0
    %2430 = vmatpush1.msra.mxu0 0.0
    %2431 = vmatprep.subr.mxu0 0.0
    %2432 = vmatpush1.msra.mxu0 0.0
    %2433 = vmatprep.subr.mxu0 0.0
    %2434 = vmatpush1.msra.mxu0 0.0
    %2435 = vmatprep.subr.mxu0 0.0
    %2436 = vmatpush1.msra.mxu0 0.0
    %2437 = vmatprep.subr.mxu0 0.0
    %2438 = vmatpush1.msra.mxu0 0.0
    %2439 = vmatprep.subr.mxu0 0.0
    %2440 = vmatpush1.msra.mxu0 0.0
    %2441 = vmatprep.subr.mxu0 0.0
    %2442 = vmatpush1.msra.mxu0 0.0
    %2443 = vmatprep.subr.mxu0 0.0
    %2444 = vmatpush1.msra.mxu0 0.0
    %2445 = vmatprep.subr.mxu0 0.0
    %2446 = vmatpush1.msra.mxu0 0.0
    %2447 = vmatprep.subr.mxu0 0.0
    %2448 = vmatpush1.msra.mxu0 0.0
    %2449 = vmatprep.subr.mxu0 0.0
    %2450 = vmatpush1.msra.mxu0 0.0
    %2451 = vmatprep.subr.mxu0 0.0
    %2452 = vmatpush1.msra.mxu0 0.0
    %2453 = vmatprep.subr.mxu0 0.0
    %2454 = vmatpush1.msra.mxu0 0.0
    %2455 = vmatprep.subr.mxu0 0.0
    %2456 = vmatpush1.msra.mxu0 0.0
    %2457 = vmatprep.subr.mxu0 0.0
    %2458 = vmatpush1.msra.mxu0 0.0
    %2459 = vmatprep.subr.mxu0 0.0
    %2460 = vmatpush1.msra.mxu0 0.0
    %2461 = vmatprep.subr.mxu0 0.0
    %2462 = vmatpush1.msra.mxu0 0.0
    %2463 = vmatprep.subr.mxu0 0.0
    %2464 = vmatpush1.msra.mxu0 0.0
    %2465 = vmatprep.subr.mxu0 0.0
    %2466 = vmatpush1.msra.mxu0 0.0
    %2467 = vmatprep.subr.mxu0 0.0
    %2468 = vmatpush1.msra.mxu0 0.0
    %2469 = vmatprep.subr.mxu0 0.0
    %2470 = vmatpush1.msra.mxu0 0.0
    %2471 = vmatprep.mubr.f32.mxu0 0.0
    %2472 = vmatmul.mubr.f32.gmra.mrb[0].mxu0 %v2405
    %v2473 = vpop.f32.mrb[0].mxu0
    %v2474 = vadd.f32 %v2402, %v2473
    %v2475 = vpop.f32.mrb[0].mxu0
    %2476 = vdwg.mxu0
    %v2477 = vmul.f32 %v2474, %v2474
    %v2478 = vsel %vm1850, %v2477, 0.0
    %2479 = vadd.xlane.f32.xlu0 %v2478
    %v2480 = vpop.xlane.xlu0 %2479
    %v2481 = vrsqrt.pop %v2480
    %v2482 = vmul.f32 %v2480, %v2481
    %vm2483 = vcmp.eq.f32.partialorder %v2480, inf
    %v2484 = vsel %vm2483, %v2480, %v2482
    %vm2485 = vcmp.eq.f32.partialorder %v2480, 0.0
    %v2486 = vand.u32 %v2480, 2147483648
    %v2487 = vsel %vm2485, %v2486, %v2484
    %v2488 = vadd.f32 %v2487, 1e-06
    %v2489 = vrcp.pop %v2488
    %v2490 = vmul.f32 %v2474, %v2489
    %vm2491 = vcmp.eq.s32.totalorder %v664, 3
    %vm2492 = vcmp.eq.s32.totalorder %v665, 3
    %v2493 = vsel %vm2491, 1.0, 0.0
    %v2494 = vsel %vm2492, 1.0, 0.0
    %v2495 = vlaneseq
    %v2496 = vshrl.u32 %v2495, 7
    %v2497 = vsub.s32 0, %v2496
    %v2498 = vrot.slane %v2490, %v2497
    %v2499 = vmul.f32 %v2493, %v2498
    %v2500 = vmul.f32 %v2494, %v2498
    %v2501 = vadd.f32 %v2396, %v2499
    %v2502 = vadd.f32 %v2397, %v2500
    %v2503 = vld [vmem:[%s1681] sm:$0xff]
    %v2504 = vld [vmem:[%s1681 + $0x8] sm:$0xff]
    %v2505 = vld [vmem:[%s1681 + $0x10] sm:$0xff]
    %v2506 = vld [vmem:[%s1681 + $0x18] sm:$0xff]
    %v2507 = vrot.slane %v1771, 3
    %v2510 = vsel %vm823, %v2385, 0
    %2512 = vmatprep.subr.mxu0 0.0
    %2513 = vmatpush1.msra.mxu0 %v2503
    %2514 = vmatprep.subr.mxu0 0.0
    %2515 = vmatpush1.msra.mxu0 %v2504
    %2516 = vmatprep.subr.mxu0 0.0
    %2517 = vmatpush1.msra.mxu0 %v2505
    %2518 = vmatprep.subr.mxu0 0.0
    %2519 = vmatpush1.msra.mxu0 %v2506
    %2520 = vmatprep.subr.mxu0 0.0
    %2521 = vmatpush1.msra.mxu0 0.0
    %2522 = vmatprep.subr.mxu0 0.0
    %2523 = vmatpush1.msra.mxu0 0.0
    %2524 = vmatprep.subr.mxu0 0.0
    %2525 = vmatpush1.msra.mxu0 0.0
    %2526 = vmatprep.subr.mxu0 0.0
    %2527 = vmatpush1.msra.mxu0 0.0
    %2528 = vmatprep.subr.mxu0 0.0
    %2529 = vmatpush1.msra.mxu0 0.0
    %2530 = vmatprep.subr.mxu0 0.0
    %2531 = vmatpush1.msra.mxu0 0.0
    %2532 = vmatprep.subr.mxu0 0.0
    %2533 = vmatpush1.msra.mxu0 0.0
    %2534 = vmatprep.subr.mxu0 0.0
    %2535 = vmatpush1.msra.mxu0 0.0
    %2536 = vmatprep.subr.mxu0 0.0
    %2537 = vmatpush1.msra.mxu0 0.0
    %2538 = vmatprep.subr.mxu0 0.0
    %2539 = vmatpush1.msra.mxu0 0.0
    %2540 = vmatprep.subr.mxu0 0.0
    %2541 = vmatpush1.msra.mxu0 0.0
    %2542 = vmatprep.subr.mxu0 0.0
    %2543 = vmatpush1.msra.mxu0 0.0
    %2544 = vmatprep.subr.mxu0 0.0
    %2545 = vmatpush1.msra.mxu0 0.0
    %2546 = vmatprep.subr.mxu0 0.0
    %2547 = vmatpush1.msra.mxu0 0.0
    %2548 = vmatprep.subr.mxu0 0.0
    %2549 = vmatpush1.msra.mxu0 0.0
    %2550 = vmatprep.subr.mxu0 0.0
    %2551 = vmatpush1.msra.mxu0 0.0
    %2552 = vmatprep.subr.mxu0 0.0
    %2553 = vmatpush1.msra.mxu0 0.0
    %2554 = vmatprep.subr.mxu0 0.0
    %2555 = vmatpush1.msra.mxu0 0.0
    %2556 = vmatprep.subr.mxu0 0.0
    %2557 = vmatpush1.msra.mxu0 0.0
    %2558 = vmatprep.subr.mxu0 0.0
    %2559 = vmatpush1.msra.mxu0 0.0
    %2560 = vmatprep.subr.mxu0 0.0
    %2561 = vmatpush1.msra.mxu0 0.0
    %2562 = vmatprep.subr.mxu0 0.0
    %2563 = vmatpush1.msra.mxu0 0.0
    %2564 = vmatprep.subr.mxu0 0.0
    %2565 = vmatpush1.msra.mxu0 0.0
    %2566 = vmatprep.subr.mxu0 0.0
    %2567 = vmatpush1.msra.mxu0 0.0
    %2568 = vmatprep.subr.mxu0 0.0
    %2569 = vmatpush1.msra.mxu0 0.0
    %2570 = vmatprep.subr.mxu0 0.0
    %2571 = vmatpush1.msra.mxu0 0.0
    %2572 = vmatprep.subr.mxu0 0.0
    %2573 = vmatpush1.msra.mxu0 0.0
    %2574 = vmatprep.subr.mxu0 0.0
    %2575 = vmatpush1.msra.mxu0 0.0
    %2576 = vmatprep.mubr.f32.mxu0 0.0
    %2577 = vmatmul.mubr.f32.gmra.mrb[0].mxu0 %v2510
    %v2578 = vpop.f32.mrb[0].mxu0
    %v2579 = vadd.f32 %v2507, %v2578
    %v2580 = vpop.f32.mrb[0].mxu0
    %2581 = vdwg.mxu0
    %v2582 = vmul.f32 %v2579, %v2579
    %v2583 = vsel %vm1850, %v2582, 0.0
    %2584 = vadd.xlane.f32.xlu0 %v2583
    %v2585 = vpop.xlane.xlu0 %2584
    %v2586 = vrsqrt.pop %v2585
    %v2587 = vmul.f32 %v2585, %v2586
    %vm2588 = vcmp.eq.f32.partialorder %v2585, inf
    %v2589 = vsel %vm2588, %v2585, %v2587
    %vm2590 = vcmp.eq.f32.partialorder %v2585, 0.0
    %v2591 = vand.u32 %v2585, 2147483648
    %v2592 = vsel %vm2590, %v2591, %v2589
    %v2593 = vadd.f32 %v2592, 1e-06
    %v2594 = vrcp.pop %v2593
    %v2595 = vmul.f32 %v2579, %v2594
    %vm2596 = vcmp.eq.s32.totalorder %v664, 11
    %vm2597 = vcmp.eq.s32.totalorder %v665, 11
    %v2598 = vsel %vm2596, 1.0, 0.0
    %v2599 = vsel %vm2597, 1.0, 0.0
    %v2600 = vlaneseq
    %v2601 = vshrl.u32 %v2600, 7
    %v2602 = vsub.s32 0, %v2601
    %v2603 = vrot.slane %v2595, %v2602
    %v2604 = vmul.f32 %v2598, %v2603
    %v2605 = vmul.f32 %v2599, %v2603
    %v2606 = vadd.f32 %v2501, %v2604
    %v2607 = vadd.f32 %v2502, %v2605
    %v2608 = vld [vmem:[%s1534] sm:$0xff]
    %v2609 = vld [vmem:[%s1534 + $0x8] sm:$0xff]
    %v2610 = vld [vmem:[%s1534 + $0x10] sm:$0xff]
    %v2611 = vld [vmem:[%s1534 + $0x18] sm:$0xff]
    %v2612 = vrot.slane %v1770, 4
    %v2615 = vsel %vm823, %v2490, 0
    %2617 = vmatprep.subr.mxu0 0.0
    %2618 = vmatpush1.msra.mxu0 %v2608
    %2619 = vmatprep.subr.mxu0 0.0
    %2620 = vmatpush1.msra.mxu0 %v2609
    %2621 = vmatprep.subr.mxu0 0.0
    %2622 = vmatpush1.msra.mxu0 %v2610
    %2623 = vmatprep.subr.mxu0 0.0
    %2624 = vmatpush1.msra.mxu0 %v2611
    %2625 = vmatprep.subr.mxu0 0.0
    %2626 = vmatpush1.msra.mxu0 0.0
    %2627 = vmatprep.subr.mxu0 0.0
    %2628 = vmatpush1.msra.mxu0 0.0
    %2629 = vmatprep.subr.mxu0 0.0
    %2630 = vmatpush1.msra.mxu0 0.0
    %2631 = vmatprep.subr.mxu0 0.0
    %2632 = vmatpush1.msra.mxu0 0.0
    %2633 = vmatprep.subr.mxu0 0.0
    %2634 = vmatpush1.msra.mxu0 0.0
    %2635 = vmatprep.subr.mxu0 0.0
    %2636 = vmatpush1.msra.mxu0 0.0
    %2637 = vmatprep.subr.mxu0 0.0
    %2638 = vmatpush1.msra.mxu0 0.0
    %2639 = vmatprep.subr.mxu0 0.0
    %2640 = vmatpush1.msra.mxu0 0.0
    %2641 = vmatprep.subr.mxu0 0.0
    %2642 = vmatpush1.msra.mxu0 0.0
    %2643 = vmatprep.subr.mxu0 0.0
    %2644 = vmatpush1.msra.mxu0 0.0
    %2645 = vmatprep.subr.mxu0 0.0
    %2646 = vmatpush1.msra.mxu0 0.0
    %2647 = vmatprep.subr.mxu0 0.0
    %2648 = vmatpush1.msra.mxu0 0.0
    %2649 = vmatprep.subr.mxu0 0.0
    %2650 = vmatpush1.msra.mxu0 0.0
    %2651 = vmatprep.subr.mxu0 0.0
    %2652 = vmatpush1.msra.mxu0 0.0
    %2653 = vmatprep.subr.mxu0 0.0
    %2654 = vmatpush1.msra.mxu0 0.0
    %2655 = vmatprep.subr.mxu0 0.0
    %2656 = vmatpush1.msra.mxu0 0.0
    %2657 = vmatprep.subr.mxu0 0.0
    %2658 = vmatpush1.msra.mxu0 0.0
    %2659 = vmatprep.subr.mxu0 0.0
    %2660 = vmatpush1.msra.mxu0 0.0
    %2661 = vmatprep.subr.mxu0 0.0
    %2662 = vmatpush1.msra.mxu0 0.0
    %2663 = vmatprep.subr.mxu0 0.0
    %2664 = vmatpush1.msra.mxu0 0.0
    %2665 = vmatprep.subr.mxu0 0.0
    %2666 = vmatpush1.msra.mxu0 0.0
    %2667 = vmatprep.subr.mxu0 0.0
    %2668 = vmatpush1.msra.mxu0 0.0
    %2669 = vmatprep.subr.mxu0 0.0
    %2670 = vmatpush1.msra.mxu0 0.0
    %2671 = vmatprep.subr.mxu0 0.0
    %2672 = vmatpush1.msra.mxu0 0.0
    %2673 = vmatprep.subr.mxu0 0.0
    %2674 = vmatpush1.msra.mxu0 0.0
    %2675 = vmatprep.subr.mxu0 0.0
    %2676 = vmatpush1.msra.mxu0 0.0
    %2677 = vmatprep.subr.mxu0 0.0
    %2678 = vmatpush1.msra.mxu0 0.0
    %2679 = vmatprep.subr.mxu0 0.0
    %2680 = vmatpush1.msra.mxu0 0.0
    %2681 = vmatprep.mubr.f32.mxu0 0.0
    %2682 = vmatmul.mubr.f32.gmra.mrb[0].mxu0 %v2615
    %v2683 = vpop.f32.mrb[0].mxu0
    %v2684 = vadd.f32 %v2612, %v2683
    %v2685 = vpop.f32.mrb[0].mxu0
    %2686 = vdwg.mxu0
    %v2687 = vmul.f32 %v2684, %v2684
    %v2688 = vsel %vm1850, %v2687, 0.0
    %2689 = vadd.xlane.f32.xlu0 %v2688
    %v2690 = vpop.xlane.xlu0 %2689
    %v2691 = vrsqrt.pop %v2690
    %v2692 = vmul.f32 %v2690, %v2691
    %vm2693 = vcmp.eq.f32.partialorder %v2690, inf
    %v2694 = vsel %vm2693, %v2690, %v2692
    %vm2695 = vcmp.eq.f32.partialorder %v2690, 0.0
    %v2696 = vand.u32 %v2690, 2147483648
    %v2697 = vsel %vm2695, %v2696, %v2694
    %v2698 = vadd.f32 %v2697, 1e-06
    %v2699 = vrcp.pop %v2698
    %v2700 = vmul.f32 %v2684, %v2699
    %vm2701 = vcmp.eq.s32.totalorder %v664, 4
    %vm2702 = vcmp.eq.s32.totalorder %v665, 4
    %v2703 = vsel %vm2701, 1.0, 0.0
    %v2704 = vsel %vm2702, 1.0, 0.0
    %v2705 = vlaneseq
    %v2706 = vshrl.u32 %v2705, 7
    %v2707 = vsub.s32 0, %v2706
    %v2708 = vrot.slane %v2700, %v2707
    %v2709 = vmul.f32 %v2703, %v2708
    %v2710 = vmul.f32 %v2704, %v2708
    %v2711 = vadd.f32 %v2606, %v2709
    %v2712 = vadd.f32 %v2607, %v2710
    %v2713 = vld [vmem:[%s1702] sm:$0xff]
    %v2714 = vld [vmem:[%s1702 + $0x8] sm:$0xff]
    %v2715 = vld [vmem:[%s1702 + $0x10] sm:$0xff]
    %v2716 = vld [vmem:[%s1702 + $0x18] sm:$0xff]
    %v2717 = vrot.slane %v1771, 4
    %v2720 = vsel %vm823, %v2595, 0
    %2722 = vmatprep.subr.mxu0 0.0
    %2723 = vmatpush1.msra.mxu0 %v2713
    %2724 = vmatprep.subr.mxu0 0.0
    %2725 = vmatpush1.msra.mxu0 %v2714
    %2726 = vmatprep.subr.mxu0 0.0
    %2727 = vmatpush1.msra.mxu0 %v2715
    %2728 = vmatprep.subr.mxu0 0.0
    %2729 = vmatpush1.msra.mxu0 %v2716
    %2730 = vmatprep.subr.mxu0 0.0
    %2731 = vmatpush1.msra.mxu0 0.0
    %2732 = vmatprep.subr.mxu0 0.0
    %2733 = vmatpush1.msra.mxu0 0.0
    %2734 = vmatprep.subr.mxu0 0.0
    %2735 = vmatpush1.msra.mxu0 0.0
    %2736 = vmatprep.subr.mxu0 0.0
    %2737 = vmatpush1.msra.mxu0 0.0
    %2738 = vmatprep.subr.mxu0 0.0
    %2739 = vmatpush1.msra.mxu0 0.0
    %2740 = vmatprep.subr.mxu0 0.0
    %2741 = vmatpush1.msra.mxu0 0.0
    %2742 = vmatprep.subr.mxu0 0.0
    %2743 = vmatpush1.msra.mxu0 0.0
    %2744 = vmatprep.subr.mxu0 0.0
    %2745 = vmatpush1.msra.mxu0 0.0
    %2746 = vmatprep.subr.mxu0 0.0
    %2747 = vmatpush1.msra.mxu0 0.0
    %2748 = vmatprep.subr.mxu0 0.0
    %2749 = vmatpush1.msra.mxu0 0.0
    %2750 = vmatprep.subr.mxu0 0.0
    %2751 = vmatpush1.msra.mxu0 0.0
    %2752 = vmatprep.subr.mxu0 0.0
    %2753 = vmatpush1.msra.mxu0 0.0
    %2754 = vmatprep.subr.mxu0 0.0
    %2755 = vmatpush1.msra.mxu0 0.0
    %2756 = vmatprep.subr.mxu0 0.0
    %2757 = vmatpush1.msra.mxu0 0.0
    %2758 = vmatprep.subr.mxu0 0.0
    %2759 = vmatpush1.msra.mxu0 0.0
    %2760 = vmatprep.subr.mxu0 0.0
    %2761 = vmatpush1.msra.mxu0 0.0
    %2762 = vmatprep.subr.mxu0 0.0
    %2763 = vmatpush1.msra.mxu0 0.0
    %2764 = vmatprep.subr.mxu0 0.0
    %2765 = vmatpush1.msra.mxu0 0.0
    %2766 = vmatprep.subr.mxu0 0.0
    %2767 = vmatpush1.msra.mxu0 0.0
    %2768 = vmatprep.subr.mxu0 0.0
    %2769 = vmatpush1.msra.mxu0 0.0
    %2770 = vmatprep.subr.mxu0 0.0
    %2771 = vmatpush1.msra.mxu0 0.0
    %2772 = vmatprep.subr.mxu0 0.0
    %2773 = vmatpush1.msra.mxu0 0.0
    %2774 = vmatprep.subr.mxu0 0.0
    %2775 = vmatpush1.msra.mxu0 0.0
    %2776 = vmatprep.subr.mxu0 0.0
    %2777 = vmatpush1.msra.mxu0 0.0
    %2778 = vmatprep.subr.mxu0 0.0
    %2779 = vmatpush1.msra.mxu0 0.0
    %2780 = vmatprep.subr.mxu0 0.0
    %2781 = vmatpush1.msra.mxu0 0.0
    %2782 = vmatprep.subr.mxu0 0.0
    %2783 = vmatpush1.msra.mxu0 0.0
    %2784 = vmatprep.subr.mxu0 0.0
    %2785 = vmatpush1.msra.mxu0 0.0
    %2786 = vmatprep.mubr.f32.mxu0 0.0
    %2787 = vmatmul.mubr.f32.gmra.mrb[0].mxu0 %v2720
    %v2788 = vpop.f32.mrb[0].mxu0
    %v2789 = vadd.f32 %v2717, %v2788
    %v2790 = vpop.f32.mrb[0].mxu0
    %2791 = vdwg.mxu0
    %v2792 = vmul.f32 %v2789, %v2789
    %v2793 = vsel %vm1850, %v2792, 0.0
    %2794 = vadd.xlane.f32.xlu0 %v2793
    %v2795 = vpop.xlane.xlu0 %2794
    %v2796 = vrsqrt.pop %v2795
    %v2797 = vmul.f32 %v2795, %v2796
    %vm2798 = vcmp.eq.f32.partialorder %v2795, inf
    %v2799 = vsel %vm2798, %v2795, %v2797
    %vm2800 = vcmp.eq.f32.partialorder %v2795, 0.0
    %v2801 = vand.u32 %v2795, 2147483648
    %v2802 = vsel %vm2800, %v2801, %v2799
    %v2803 = vadd.f32 %v2802, 1e-06
    %v2804 = vrcp.pop %v2803
    %v2805 = vmul.f32 %v2789, %v2804
    %vm2806 = vcmp.eq.s32.totalorder %v664, 12
    %vm2807 = vcmp.eq.s32.totalorder %v665, 12
    %v2808 = vsel %vm2806, 1.0, 0.0
    %v2809 = vsel %vm2807, 1.0, 0.0
    %v2810 = vlaneseq
    %v2811 = vshrl.u32 %v2810, 7
    %v2812 = vsub.s32 0, %v2811
    %v2813 = vrot.slane %v2805, %v2812
    %v2814 = vmul.f32 %v2808, %v2813
    %v2815 = vmul.f32 %v2809, %v2813
    %v2816 = vadd.f32 %v2711, %v2814
    %v2817 = vadd.f32 %v2712, %v2815
    %v2818 = vld [vmem:[%s1555] sm:$0xff]
    %v2819 = vld [vmem:[%s1555 + $0x8] sm:$0xff]
    %v2820 = vld [vmem:[%s1555 + $0x10] sm:$0xff]
    %v2821 = vld [vmem:[%s1555 + $0x18] sm:$0xff]
    %v2822 = vrot.slane %v1770, 5
    %v2825 = vsel %vm823, %v2700, 0
    %2827 = vmatprep.subr.mxu0 0.0
    %2828 = vmatpush1.msra.mxu0 %v2818
    %2829 = vmatprep.subr.mxu0 0.0
    %2830 = vmatpush1.msra.mxu0 %v2819
    %2831 = vmatprep.subr.mxu0 0.0
    %2832 = vmatpush1.msra.mxu0 %v2820
    %2833 = vmatprep.subr.mxu0 0.0
    %2834 = vmatpush1.msra.mxu0 %v2821
    %2835 = vmatprep.subr.mxu0 0.0
    %2836 = vmatpush1.msra.mxu0 0.0
    %2837 = vmatprep.subr.mxu0 0.0
    %2838 = vmatpush1.msra.mxu0 0.0
    %2839 = vmatprep.subr.mxu0 0.0
    %2840 = vmatpush1.msra.mxu0 0.0
    %2841 = vmatprep.subr.mxu0 0.0
    %2842 = vmatpush1.msra.mxu0 0.0
    %2843 = vmatprep.subr.mxu0 0.0
    %2844 = vmatpush1.msra.mxu0 0.0
    %2845 = vmatprep.subr.mxu0 0.0
    %2846 = vmatpush1.msra.mxu0 0.0
    %2847 = vmatprep.subr.mxu0 0.0
    %2848 = vmatpush1.msra.mxu0 0.0
    %2849 = vmatprep.subr.mxu0 0.0
    %2850 = vmatpush1.msra.mxu0 0.0
    %2851 = vmatprep.subr.mxu0 0.0
    %2852 = vmatpush1.msra.mxu0 0.0
    %2853 = vmatprep.subr.mxu0 0.0
    %2854 = vmatpush1.msra.mxu0 0.0
    %2855 = vmatprep.subr.mxu0 0.0
    %2856 = vmatpush1.msra.mxu0 0.0
    %2857 = vmatprep.subr.mxu0 0.0
    %2858 = vmatpush1.msra.mxu0 0.0
    %2859 = vmatprep.subr.mxu0 0.0
    %2860 = vmatpush1.msra.mxu0 0.0
    %2861 = vmatprep.subr.mxu0 0.0
    %2862 = vmatpush1.msra.mxu0 0.0
    %2863 = vmatprep.subr.mxu0 0.0
    %2864 = vmatpush1.msra.mxu0 0.0
    %2865 = vmatprep.subr.mxu0 0.0
    %2866 = vmatpush1.msra.mxu0 0.0
    %2867 = vmatprep.subr.mxu0 0.0
    %2868 = vmatpush1.msra.mxu0 0.0
    %2869 = vmatprep.subr.mxu0 0.0
    %2870 = vmatpush1.msra.mxu0 0.0
    %2871 = vmatprep.subr.mxu0 0.0
    %2872 = vmatpush1.msra.mxu0 0.0
    %2873 = vmatprep.subr.mxu0 0.0
    %2874 = vmatpush1.msra.mxu0 0.0
    %2875 = vmatprep.subr.mxu0 0.0
    %2876 = vmatpush1.msra.mxu0 0.0
    %2877 = vmatprep.subr.mxu0 0.0
    %2878 = vmatpush1.msra.mxu0 0.0
    %2879 = vmatprep.subr.mxu0 0.0
    %2880 = vmatpush1.msra.mxu0 0.0
    %2881 = vmatprep.subr.mxu0 0.0
    %2882 = vmatpush1.msra.mxu0 0.0
    %2883 = vmatprep.subr.mxu0 0.0
    %2884 = vmatpush1.msra.mxu0 0.0
    %2885 = vmatprep.subr.mxu0 0.0
    %2886 = vmatpush1.msra.mxu0 0.0
    %2887 = vmatprep.subr.mxu0 0.0
    %2888 = vmatpush1.msra.mxu0 0.0
    %2889 = vmatprep.subr.mxu0 0.0
    %2890 = vmatpush1.msra.mxu0 0.0
    %2891 = vmatprep.mubr.f32.mxu0 0.0
    %2892 = vmatmul.mubr.f32.gmra.mrb[0].mxu0 %v2825
    %v2893 = vpop.f32.mrb[0].mxu0
    %v2894 = vadd.f32 %v2822, %v2893
    %v2895 = vpop.f32.mrb[0].mxu0
    %2896 = vdwg.mxu0
    %v2897 = vmul.f32 %v2894, %v2894
    %v2898 = vsel %vm1850, %v2897, 0.0
    %2899 = vadd.xlane.f32.xlu0 %v2898
    %v2900 = vpop.xlane.xlu0 %2899
    %v2901 = vrsqrt.pop %v2900
    %v2902 = vmul.f32 %v2900, %v2901
    %vm2903 = vcmp.eq.f32.partialorder %v2900, inf
    %v2904 = vsel %vm2903, %v2900, %v2902
    %vm2905 = vcmp.eq.f32.partialorder %v2900, 0.0
    %v2906 = vand.u32 %v2900, 2147483648
    %v2907 = vsel %vm2905, %v2906, %v2904
    %v2908 = vadd.f32 %v2907, 1e-06
    %v2909 = vrcp.pop %v2908
    %v2910 = vmul.f32 %v2894, %v2909
    %vm2911 = vcmp.eq.s32.totalorder %v664, 5
    %vm2912 = vcmp.eq.s32.totalorder %v665, 5
    %v2913 = vsel %vm2911, 1.0, 0.0
    %v2914 = vsel %vm2912, 1.0, 0.0
    %v2915 = vlaneseq
    %v2916 = vshrl.u32 %v2915, 7
    %v2917 = vsub.s32 0, %v2916
    %v2918 = vrot.slane %v2910, %v2917
    %v2919 = vmul.f32 %v2913, %v2918
    %v2920 = vmul.f32 %v2914, %v2918
    %v2921 = vadd.f32 %v2816, %v2919
    %v2922 = vadd.f32 %v2817, %v2920
    %v2923 = vld [vmem:[%s1723] sm:$0xff]
    %v2924 = vld [vmem:[%s1723 + $0x8] sm:$0xff]
    %v2925 = vld [vmem:[%s1723 + $0x10] sm:$0xff]
    %v2926 = vld [vmem:[%s1723 + $0x18] sm:$0xff]
    %v2927 = vrot.slane %v1771, 5
    %v2930 = vsel %vm823, %v2805, 0
    %2932 = vmatprep.subr.mxu0 0.0
    %2933 = vmatpush1.msra.mxu0 %v2923
    %2934 = vmatprep.subr.mxu0 0.0
    %2935 = vmatpush1.msra.mxu0 %v2924
    %2936 = vmatprep.subr.mxu0 0.0
    %2937 = vmatpush1.msra.mxu0 %v2925
    %2938 = vmatprep.subr.mxu0 0.0
    %2939 = vmatpush1.msra.mxu0 %v2926
    %2940 = vmatprep.subr.mxu0 0.0
    %2941 = vmatpush1.msra.mxu0 0.0
    %2942 = vmatprep.subr.mxu0 0.0
    %2943 = vmatpush1.msra.mxu0 0.0
    %2944 = vmatprep.subr.mxu0 0.0
    %2945 = vmatpush1.msra.mxu0 0.0
    %2946 = vmatprep.subr.mxu0 0.0
    %2947 = vmatpush1.msra.mxu0 0.0
    %2948 = vmatprep.subr.mxu0 0.0
    %2949 = vmatpush1.msra.mxu0 0.0
    %2950 = vmatprep.subr.mxu0 0.0
    %2951 = vmatpush1.msra.mxu0 0.0
    %2952 = vmatprep.subr.mxu0 0.0
    %2953 = vmatpush1.msra.mxu0 0.0
    %2954 = vmatprep.subr.mxu0 0.0
    %2955 = vmatpush1.msra.mxu0 0.0
    %2956 = vmatprep.subr.mxu0 0.0
    %2957 = vmatpush1.msra.mxu0 0.0
    %2958 = vmatprep.subr.mxu0 0.0
    %2959 = vmatpush1.msra.mxu0 0.0
    %2960 = vmatprep.subr.mxu0 0.0
    %2961 = vmatpush1.msra.mxu0 0.0
    %2962 = vmatprep.subr.mxu0 0.0
    %2963 = vmatpush1.msra.mxu0 0.0
    %2964 = vmatprep.subr.mxu0 0.0
    %2965 = vmatpush1.msra.mxu0 0.0
    %2966 = vmatprep.subr.mxu0 0.0
    %2967 = vmatpush1.msra.mxu0 0.0
    %2968 = vmatprep.subr.mxu0 0.0
    %2969 = vmatpush1.msra.mxu0 0.0
    %2970 = vmatprep.subr.mxu0 0.0
    %2971 = vmatpush1.msra.mxu0 0.0
    %2972 = vmatprep.subr.mxu0 0.0
    %2973 = vmatpush1.msra.mxu0 0.0
    %2974 = vmatprep.subr.mxu0 0.0
    %2975 = vmatpush1.msra.mxu0 0.0
    %2976 = vmatprep.subr.mxu0 0.0
    %2977 = vmatpush1.msra.mxu0 0.0
    %2978 = vmatprep.subr.mxu0 0.0
    %2979 = vmatpush1.msra.mxu0 0.0
    %2980 = vmatprep.subr.mxu0 0.0
    %2981 = vmatpush1.msra.mxu0 0.0
    %2982 = vmatprep.subr.mxu0 0.0
    %2983 = vmatpush1.msra.mxu0 0.0
    %2984 = vmatprep.subr.mxu0 0.0
    %2985 = vmatpush1.msra.mxu0 0.0
    %2986 = vmatprep.subr.mxu0 0.0
    %2987 = vmatpush1.msra.mxu0 0.0
    %2988 = vmatprep.subr.mxu0 0.0
    %2989 = vmatpush1.msra.mxu0 0.0
    %2990 = vmatprep.subr.mxu0 0.0
    %2991 = vmatpush1.msra.mxu0 0.0
    %2992 = vmatprep.subr.mxu0 0.0
    %2993 = vmatpush1.msra.mxu0 0.0
    %2994 = vmatprep.subr.mxu0 0.0
    %2995 = vmatpush1.msra.mxu0 0.0
    %2996 = vmatprep.mubr.f32.mxu0 0.0
    %2997 = vmatmul.mubr.f32.gmra.mrb[0].mxu0 %v2930
    %v2998 = vpop.f32.mrb[0].mxu0
    %v2999 = vadd.f32 %v2927, %v2998
    %v3000 = vpop.f32.mrb[0].mxu0
    %3001 = vdwg.mxu0
    %v3002 = vmul.f32 %v2999, %v2999
    %v3003 = vsel %vm1850, %v3002, 0.0
    %3004 = vadd.xlane.f32.xlu0 %v3003
    %v3005 = vpop.xlane.xlu0 %3004
    %v3006 = vrsqrt.pop %v3005
    %v3007 = vmul.f32 %v3005, %v3006
    %vm3008 = vcmp.eq.f32.partialorder %v3005, inf
    %v3009 = vsel %vm3008, %v3005, %v3007
    %vm3010 = vcmp.eq.f32.partialorder %v3005, 0.0
    %v3011 = vand.u32 %v3005, 2147483648
    %v3012 = vsel %vm3010, %v3011, %v3009
    %v3013 = vadd.f32 %v3012, 1e-06
    %v3014 = vrcp.pop %v3013
    %v3015 = vmul.f32 %v2999, %v3014
    %vm3016 = vcmp.eq.s32.totalorder %v664, 13
    %vm3017 = vcmp.eq.s32.totalorder %v665, 13
    %v3018 = vsel %vm3016, 1.0, 0.0
    %v3019 = vsel %vm3017, 1.0, 0.0
    %v3020 = vlaneseq
    %v3021 = vshrl.u32 %v3020, 7
    %v3022 = vsub.s32 0, %v3021
    %v3023 = vrot.slane %v3015, %v3022
    %v3024 = vmul.f32 %v3018, %v3023
    %v3025 = vmul.f32 %v3019, %v3023
    %v3026 = vadd.f32 %v2921, %v3024
    %v3027 = vadd.f32 %v2922, %v3025
    %v3028 = vld [vmem:[%s1576] sm:$0xff]
    %v3029 = vld [vmem:[%s1576 + $0x8] sm:$0xff]
    %v3030 = vld [vmem:[%s1576 + $0x10] sm:$0xff]
    %v3031 = vld [vmem:[%s1576 + $0x18] sm:$0xff]
    %v3032 = vrot.slane %v1770, 6
    %v3035 = vsel %vm823, %v2910, 0
    %3037 = vmatprep.subr.mxu0 0.0
    %3038 = vmatpush1.msra.mxu0 %v3028
    %3039 = vmatprep.subr.mxu0 0.0
    %3040 = vmatpush1.msra.mxu0 %v3029
    %3041 = vmatprep.subr.mxu0 0.0
    %3042 = vmatpush1.msra.mxu0 %v3030
    %3043 = vmatprep.subr.mxu0 0.0
    %3044 = vmatpush1.msra.mxu0 %v3031
    %3045 = vmatprep.subr.mxu0 0.0
    %3046 = vmatpush1.msra.mxu0 0.0
    %3047 = vmatprep.subr.mxu0 0.0
    %3048 = vmatpush1.msra.mxu0 0.0
    %3049 = vmatprep.subr.mxu0 0.0
    %3050 = vmatpush1.msra.mxu0 0.0
    %3051 = vmatprep.subr.mxu0 0.0
    %3052 = vmatpush1.msra.mxu0 0.0
    %3053 = vmatprep.subr.mxu0 0.0
    %3054 = vmatpush1.msra.mxu0 0.0
    %3055 = vmatprep.subr.mxu0 0.0
    %3056 = vmatpush1.msra.mxu0 0.0
    %3057 = vmatprep.subr.mxu0 0.0
    %3058 = vmatpush1.msra.mxu0 0.0
    %3059 = vmatprep.subr.mxu0 0.0
    %3060 = vmatpush1.msra.mxu0 0.0
    %3061 = vmatprep.subr.mxu0 0.0
    %3062 = vmatpush1.msra.mxu0 0.0
    %3063 = vmatprep.subr.mxu0 0.0
    %3064 = vmatpush1.msra.mxu0 0.0
    %3065 = vmatprep.subr.mxu0 0.0
    %3066 = vmatpush1.msra.mxu0 0.0
    %3067 = vmatprep.subr.mxu0 0.0
    %3068 = vmatpush1.msra.mxu0 0.0
    %3069 = vmatprep.subr.mxu0 0.0
    %3070 = vmatpush1.msra.mxu0 0.0
    %3071 = vmatprep.subr.mxu0 0.0
    %3072 = vmatpush1.msra.mxu0 0.0
    %3073 = vmatprep.subr.mxu0 0.0
    %3074 = vmatpush1.msra.mxu0 0.0
    %3075 = vmatprep.subr.mxu0 0.0
    %3076 = vmatpush1.msra.mxu0 0.0
    %3077 = vmatprep.subr.mxu0 0.0
    %3078 = vmatpush1.msra.mxu0 0.0
    %3079 = vmatprep.subr.mxu0 0.0
    %3080 = vmatpush1.msra.mxu0 0.0
    %3081 = vmatprep.subr.mxu0 0.0
    %3082 = vmatpush1.msra.mxu0 0.0
    %3083 = vmatprep.subr.mxu0 0.0
    %3084 = vmatpush1.msra.mxu0 0.0
    %3085 = vmatprep.subr.mxu0 0.0
    %3086 = vmatpush1.msra.mxu0 0.0
    %3087 = vmatprep.subr.mxu0 0.0
    %3088 = vmatpush1.msra.mxu0 0.0
    %3089 = vmatprep.subr.mxu0 0.0
    %3090 = vmatpush1.msra.mxu0 0.0
    %3091 = vmatprep.subr.mxu0 0.0
    %3092 = vmatpush1.msra.mxu0 0.0
    %3093 = vmatprep.subr.mxu0 0.0
    %3094 = vmatpush1.msra.mxu0 0.0
    %3095 = vmatprep.subr.mxu0 0.0
    %3096 = vmatpush1.msra.mxu0 0.0
    %3097 = vmatprep.subr.mxu0 0.0
    %3098 = vmatpush1.msra.mxu0 0.0
    %3099 = vmatprep.subr.mxu0 0.0
    %3100 = vmatpush1.msra.mxu0 0.0
    %3101 = vmatprep.mubr.f32.mxu0 0.0
    %3102 = vmatmul.mubr.f32.gmra.mrb[0].mxu0 %v3035
    %v3103 = vpop.f32.mrb[0].mxu0
    %v3104 = vadd.f32 %v3032, %v3103
    %v3105 = vpop.f32.mrb[0].mxu0
    %3106 = vdwg.mxu0
    %v3107 = vmul.f32 %v3104, %v3104
    %v3108 = vsel %vm1850, %v3107, 0.0
    %3109 = vadd.xlane.f32.xlu0 %v3108
    %v3110 = vpop.xlane.xlu0 %3109
    %v3111 = vrsqrt.pop %v3110
    %v3112 = vmul.f32 %v3110, %v3111
    %vm3113 = vcmp.eq.f32.partialorder %v3110, inf
    %v3114 = vsel %vm3113, %v3110, %v3112
    %vm3115 = vcmp.eq.f32.partialorder %v3110, 0.0
    %v3116 = vand.u32 %v3110, 2147483648
    %v3117 = vsel %vm3115, %v3116, %v3114
    %v3118 = vadd.f32 %v3117, 1e-06
    %v3119 = vrcp.pop %v3118
    %v3120 = vmul.f32 %v3104, %v3119
    %vm3121 = vcmp.eq.s32.totalorder %v664, 6
    %vm3122 = vcmp.eq.s32.totalorder %v665, 6
    %v3123 = vsel %vm3121, 1.0, 0.0
    %v3124 = vsel %vm3122, 1.0, 0.0
    %v3125 = vlaneseq
    %v3126 = vshrl.u32 %v3125, 7
    %v3127 = vsub.s32 0, %v3126
    %v3128 = vrot.slane %v3120, %v3127
    %v3129 = vmul.f32 %v3123, %v3128
    %v3130 = vmul.f32 %v3124, %v3128
    %v3131 = vadd.f32 %v3026, %v3129
    %v3132 = vadd.f32 %v3027, %v3130
    %v3133 = vld [vmem:[%s1744] sm:$0xff]
    %v3134 = vld [vmem:[%s1744 + $0x8] sm:$0xff]
    %v3135 = vld [vmem:[%s1744 + $0x10] sm:$0xff]
    %v3136 = vld [vmem:[%s1744 + $0x18] sm:$0xff]
    %v3137 = vrot.slane %v1771, 6
    %v3140 = vsel %vm823, %v3015, 0
    %3142 = vmatprep.subr.mxu0 0.0
    %3143 = vmatpush1.msra.mxu0 %v3133
    %3144 = vmatprep.subr.mxu0 0.0
    %3145 = vmatpush1.msra.mxu0 %v3134
    %3146 = vmatprep.subr.mxu0 0.0
    %3147 = vmatpush1.msra.mxu0 %v3135
    %3148 = vmatprep.subr.mxu0 0.0
    %3149 = vmatpush1.msra.mxu0 %v3136
    %3150 = vmatprep.subr.mxu0 0.0
    %3151 = vmatpush1.msra.mxu0 0.0
    %3152 = vmatprep.subr.mxu0 0.0
    %3153 = vmatpush1.msra.mxu0 0.0
    %3154 = vmatprep.subr.mxu0 0.0
    %3155 = vmatpush1.msra.mxu0 0.0
    %3156 = vmatprep.subr.mxu0 0.0
    %3157 = vmatpush1.msra.mxu0 0.0
    %3158 = vmatprep.subr.mxu0 0.0
    %3159 = vmatpush1.msra.mxu0 0.0
    %3160 = vmatprep.subr.mxu0 0.0
    %3161 = vmatpush1.msra.mxu0 0.0
    %3162 = vmatprep.subr.mxu0 0.0
    %3163 = vmatpush1.msra.mxu0 0.0
    %3164 = vmatprep.subr.mxu0 0.0
    %3165 = vmatpush1.msra.mxu0 0.0
    %3166 = vmatprep.subr.mxu0 0.0
    %3167 = vmatpush1.msra.mxu0 0.0
    %3168 = vmatprep.subr.mxu0 0.0
    %3169 = vmatpush1.msra.mxu0 0.0
    %3170 = vmatprep.subr.mxu0 0.0
    %3171 = vmatpush1.msra.mxu0 0.0
    %3172 = vmatprep.subr.mxu0 0.0
    %3173 = vmatpush1.msra.mxu0 0.0
    %3174 = vmatprep.subr.mxu0 0.0
    %3175 = vmatpush1.msra.mxu0 0.0
    %3176 = vmatprep.subr.mxu0 0.0
    %3177 = vmatpush1.msra.mxu0 0.0
    %3178 = vmatprep.subr.mxu0 0.0
    %3179 = vmatpush1.msra.mxu0 0.0
    %3180 = vmatprep.subr.mxu0 0.0
    %3181 = vmatpush1.msra.mxu0 0.0
    %3182 = vmatprep.subr.mxu0 0.0
    %3183 = vmatpush1.msra.mxu0 0.0
    %3184 = vmatprep.subr.mxu0 0.0
    %3185 = vmatpush1.msra.mxu0 0.0
    %3186 = vmatprep.subr.mxu0 0.0
    %3187 = vmatpush1.msra.mxu0 0.0
    %3188 = vmatprep.subr.mxu0 0.0
    %3189 = vmatpush1.msra.mxu0 0.0
    %3190 = vmatprep.subr.mxu0 0.0
    %3191 = vmatpush1.msra.mxu0 0.0
    %3192 = vmatprep.subr.mxu0 0.0
    %3193 = vmatpush1.msra.mxu0 0.0
    %3194 = vmatprep.subr.mxu0 0.0
    %3195 = vmatpush1.msra.mxu0 0.0
    %3196 = vmatprep.subr.mxu0 0.0
    %3197 = vmatpush1.msra.mxu0 0.0
    %3198 = vmatprep.subr.mxu0 0.0
    %3199 = vmatpush1.msra.mxu0 0.0
    %3200 = vmatprep.subr.mxu0 0.0
    %3201 = vmatpush1.msra.mxu0 0.0
    %3202 = vmatprep.subr.mxu0 0.0
    %3203 = vmatpush1.msra.mxu0 0.0
    %3204 = vmatprep.subr.mxu0 0.0
    %3205 = vmatpush1.msra.mxu0 0.0
    %3206 = vmatprep.mubr.f32.mxu0 0.0
    %3207 = vmatmul.mubr.f32.gmra.mrb[0].mxu0 %v3140
    %v3208 = vpop.f32.mrb[0].mxu0
    %v3209 = vadd.f32 %v3137, %v3208
    %v3210 = vpop.f32.mrb[0].mxu0
    %3211 = vdwg.mxu0
    %v3212 = vmul.f32 %v3209, %v3209
    %v3213 = vsel %vm1850, %v3212, 0.0
    %3214 = vadd.xlane.f32.xlu0 %v3213
    %v3215 = vpop.xlane.xlu0 %3214
    %v3216 = vrsqrt.pop %v3215
    %v3217 = vmul.f32 %v3215, %v3216
    %vm3218 = vcmp.eq.f32.partialorder %v3215, inf
    %v3219 = vsel %vm3218, %v3215, %v3217
    %vm3220 = vcmp.eq.f32.partialorder %v3215, 0.0
    %v3221 = vand.u32 %v3215, 2147483648
    %v3222 = vsel %vm3220, %v3221, %v3219
    %v3223 = vadd.f32 %v3222, 1e-06
    %v3224 = vrcp.pop %v3223
    %v3225 = vmul.f32 %v3209, %v3224
    %vm3226 = vcmp.eq.s32.totalorder %v664, 14
    %vm3227 = vcmp.eq.s32.totalorder %v665, 14
    %v3228 = vsel %vm3226, 1.0, 0.0
    %v3229 = vsel %vm3227, 1.0, 0.0
    %v3230 = vlaneseq
    %v3231 = vshrl.u32 %v3230, 7
    %v3232 = vsub.s32 0, %v3231
    %v3233 = vrot.slane %v3225, %v3232
    %v3234 = vmul.f32 %v3228, %v3233
    %v3235 = vmul.f32 %v3229, %v3233
    %v3236 = vadd.f32 %v3131, %v3234
    %v3237 = vadd.f32 %v3132, %v3235
    %v3238 = vld [vmem:[%s1597] sm:$0xff]
    %v3239 = vld [vmem:[%s1597 + $0x8] sm:$0xff]
    %v3240 = vld [vmem:[%s1597 + $0x10] sm:$0xff]
    %v3241 = vld [vmem:[%s1597 + $0x18] sm:$0xff]
    %v3242 = vrot.slane %v1770, 7
    %v3245 = vsel %vm823, %v3120, 0
    %3247 = vmatprep.subr.mxu0 0.0
    %3248 = vmatpush1.msra.mxu0 %v3238
    %3249 = vmatprep.subr.mxu0 0.0
    %3250 = vmatpush1.msra.mxu0 %v3239
    %3251 = vmatprep.subr.mxu0 0.0
    %3252 = vmatpush1.msra.mxu0 %v3240
    %3253 = vmatprep.subr.mxu0 0.0
    %3254 = vmatpush1.msra.mxu0 %v3241
    %3255 = vmatprep.subr.mxu0 0.0
    %3256 = vmatpush1.msra.mxu0 0.0
    %3257 = vmatprep.subr.mxu0 0.0
    %3258 = vmatpush1.msra.mxu0 0.0
    %3259 = vmatprep.subr.mxu0 0.0
    %3260 = vmatpush1.msra.mxu0 0.0
    %3261 = vmatprep.subr.mxu0 0.0
    %3262 = vmatpush1.msra.mxu0 0.0
    %3263 = vmatprep.subr.mxu0 0.0
    %3264 = vmatpush1.msra.mxu0 0.0
    %3265 = vmatprep.subr.mxu0 0.0
    %3266 = vmatpush1.msra.mxu0 0.0
    %3267 = vmatprep.subr.mxu0 0.0
    %3268 = vmatpush1.msra.mxu0 0.0
    %3269 = vmatprep.subr.mxu0 0.0
    %3270 = vmatpush1.msra.mxu0 0.0
    %3271 = vmatprep.subr.mxu0 0.0
    %3272 = vmatpush1.msra.mxu0 0.0
    %3273 = vmatprep.subr.mxu0 0.0
    %3274 = vmatpush1.msra.mxu0 0.0
    %3275 = vmatprep.subr.mxu0 0.0
    %3276 = vmatpush1.msra.mxu0 0.0
    %3277 = vmatprep.subr.mxu0 0.0
    %3278 = vmatpush1.msra.mxu0 0.0
    %3279 = vmatprep.subr.mxu0 0.0
    %3280 = vmatpush1.msra.mxu0 0.0
    %3281 = vmatprep.subr.mxu0 0.0
    %3282 = vmatpush1.msra.mxu0 0.0
    %3283 = vmatprep.subr.mxu0 0.0
    %3284 = vmatpush1.msra.mxu0 0.0
    %3285 = vmatprep.subr.mxu0 0.0
    %3286 = vmatpush1.msra.mxu0 0.0
    %3287 = vmatprep.subr.mxu0 0.0
    %3288 = vmatpush1.msra.mxu0 0.0
    %3289 = vmatprep.subr.mxu0 0.0
    %3290 = vmatpush1.msra.mxu0 0.0
    %3291 = vmatprep.subr.mxu0 0.0
    %3292 = vmatpush1.msra.mxu0 0.0
    %3293 = vmatprep.subr.mxu0 0.0
    %3294 = vmatpush1.msra.mxu0 0.0
    %3295 = vmatprep.subr.mxu0 0.0
    %3296 = vmatpush1.msra.mxu0 0.0
    %3297 = vmatprep.subr.mxu0 0.0
    %3298 = vmatpush1.msra.mxu0 0.0
    %3299 = vmatprep.subr.mxu0 0.0
    %3300 = vmatpush1.msra.mxu0 0.0
    %3301 = vmatprep.subr.mxu0 0.0
    %3302 = vmatpush1.msra.mxu0 0.0
    %3303 = vmatprep.subr.mxu0 0.0
    %3304 = vmatpush1.msra.mxu0 0.0
    %3305 = vmatprep.subr.mxu0 0.0
    %3306 = vmatpush1.msra.mxu0 0.0
    %3307 = vmatprep.subr.mxu0 0.0
    %3308 = vmatpush1.msra.mxu0 0.0
    %3309 = vmatprep.subr.mxu0 0.0
    %3310 = vmatpush1.msra.mxu0 0.0
    %3311 = vmatprep.mubr.f32.mxu0 0.0
    %3312 = vmatmul.mubr.f32.gmra.mrb[0].mxu0 %v3245
    %v3313 = vpop.f32.mrb[0].mxu0
    %v3314 = vadd.f32 %v3242, %v3313
    %v3315 = vpop.f32.mrb[0].mxu0
    %3316 = vdwg.mxu0
    %v3317 = vmul.f32 %v3314, %v3314
    %v3318 = vsel %vm1850, %v3317, 0.0
    %3319 = vadd.xlane.f32.xlu0 %v3318
    %v3320 = vpop.xlane.xlu0 %3319
    %v3321 = vrsqrt.pop %v3320
    %v3322 = vmul.f32 %v3320, %v3321
    %vm3323 = vcmp.eq.f32.partialorder %v3320, inf
    %v3324 = vsel %vm3323, %v3320, %v3322
    %vm3325 = vcmp.eq.f32.partialorder %v3320, 0.0
    %v3326 = vand.u32 %v3320, 2147483648
    %v3327 = vsel %vm3325, %v3326, %v3324
    %v3328 = vadd.f32 %v3327, 1e-06
    %v3329 = vrcp.pop %v3328
    %v3330 = vmul.f32 %v3314, %v3329
    %vm3331 = vcmp.eq.s32.totalorder %v664, 7
    %vm3332 = vcmp.eq.s32.totalorder %v665, 7
    %v3333 = vsel %vm3331, 1.0, 0.0
    %v3334 = vsel %vm3332, 1.0, 0.0
    %v3335 = vlaneseq
    %v3336 = vshrl.u32 %v3335, 7
    %v3337 = vsub.s32 0, %v3336
    %v3338 = vrot.slane %v3330, %v3337
    %v3339 = vmul.f32 %v3333, %v3338
    %v3340 = vmul.f32 %v3334, %v3338
    %v3341 = vadd.f32 %v3236, %v3339
    %v3342 = vadd.f32 %v3237, %v3340
    %v3343 = vld [vmem:[%s1765] sm:$0xff]
    %v3344 = vld [vmem:[%s1765 + $0x8] sm:$0xff]
    %v3345 = vld [vmem:[%s1765 + $0x10] sm:$0xff]
    %v3346 = vld [vmem:[%s1765 + $0x18] sm:$0xff]
    %v3347 = vrot.slane %v1771, 7
    %v3350 = vsel %vm823, %v3225, 0
    %3352 = vmatprep.subr.mxu0 0.0
    %3353 = vmatpush1.msra.mxu0 %v3343
    %3354 = vmatprep.subr.mxu0 0.0
    %3355 = vmatpush1.msra.mxu0 %v3344
    %3356 = vmatprep.subr.mxu0 0.0
    %3357 = vmatpush1.msra.mxu0 %v3345
    %3358 = vmatprep.subr.mxu0 0.0
    %3359 = vmatpush1.msra.mxu0 %v3346
    %3360 = vmatprep.subr.mxu0 0.0
    %3361 = vmatpush1.msra.mxu0 0.0
    %3362 = vmatprep.subr.mxu0 0.0
    %3363 = vmatpush1.msra.mxu0 0.0
    %3364 = vmatprep.subr.mxu0 0.0
    %3365 = vmatpush1.msra.mxu0 0.0
    %3366 = vmatprep.subr.mxu0 0.0
    %3367 = vmatpush1.msra.mxu0 0.0
    %3368 = vmatprep.subr.mxu0 0.0
    %3369 = vmatpush1.msra.mxu0 0.0
    %3370 = vmatprep.subr.mxu0 0.0
    %3371 = vmatpush1.msra.mxu0 0.0
    %3372 = vmatprep.subr.mxu0 0.0
    %3373 = vmatpush1.msra.mxu0 0.0
    %3374 = vmatprep.subr.mxu0 0.0
    %3375 = vmatpush1.msra.mxu0 0.0
    %3376 = vmatprep.subr.mxu0 0.0
    %3377 = vmatpush1.msra.mxu0 0.0
    %3378 = vmatprep.subr.mxu0 0.0
    %3379 = vmatpush1.msra.mxu0 0.0
    %3380 = vmatprep.subr.mxu0 0.0
    %3381 = vmatpush1.msra.mxu0 0.0
    %3382 = vmatprep.subr.mxu0 0.0
    %3383 = vmatpush1.msra.mxu0 0.0
    %3384 = vmatprep.subr.mxu0 0.0
    %3385 = vmatpush1.msra.mxu0 0.0
    %3386 = vmatprep.subr.mxu0 0.0
    %3387 = vmatpush1.msra.mxu0 0.0
    %3388 = vmatprep.subr.mxu0 0.0
    %3389 = vmatpush1.msra.mxu0 0.0
    %3390 = vmatprep.subr.mxu0 0.0
    %3391 = vmatpush1.msra.mxu0 0.0
    %3392 = vmatprep.subr.mxu0 0.0
    %3393 = vmatpush1.msra.mxu0 0.0
    %3394 = vmatprep.subr.mxu0 0.0
    %3395 = vmatpush1.msra.mxu0 0.0
    %3396 = vmatprep.subr.mxu0 0.0
    %3397 = vmatpush1.msra.mxu0 0.0
    %3398 = vmatprep.subr.mxu0 0.0
    %3399 = vmatpush1.msra.mxu0 0.0
    %3400 = vmatprep.subr.mxu0 0.0
    %3401 = vmatpush1.msra.mxu0 0.0
    %3402 = vmatprep.subr.mxu0 0.0
    %3403 = vmatpush1.msra.mxu0 0.0
    %3404 = vmatprep.subr.mxu0 0.0
    %3405 = vmatpush1.msra.mxu0 0.0
    %3406 = vmatprep.subr.mxu0 0.0
    %3407 = vmatpush1.msra.mxu0 0.0
    %3408 = vmatprep.subr.mxu0 0.0
    %3409 = vmatpush1.msra.mxu0 0.0
    %3410 = vmatprep.subr.mxu0 0.0
    %3411 = vmatpush1.msra.mxu0 0.0
    %3412 = vmatprep.subr.mxu0 0.0
    %3413 = vmatpush1.msra.mxu0 0.0
    %3414 = vmatprep.subr.mxu0 0.0
    %3415 = vmatpush1.msra.mxu0 0.0
    %3416 = vmatprep.mubr.f32.mxu0 0.0
    %3417 = vmatmul.mubr.f32.gmra.mrb[0].mxu0 %v3350
    %v3418 = vpop.f32.mrb[0].mxu0
    %v3419 = vadd.f32 %v3347, %v3418
    %v3420 = vpop.f32.mrb[0].mxu0
    %3421 = vdwg.mxu0
    %v3422 = vmul.f32 %v3419, %v3419
    %v3423 = vsel %vm1850, %v3422, 0.0
    %3424 = vadd.xlane.f32.xlu0 %v3423
    %v3425 = vpop.xlane.xlu0 %3424
    %v3426 = vrsqrt.pop %v3425
    %v3427 = vmul.f32 %v3425, %v3426
    %vm3428 = vcmp.eq.f32.partialorder %v3425, inf
    %v3429 = vsel %vm3428, %v3425, %v3427
    %vm3430 = vcmp.eq.f32.partialorder %v3425, 0.0
    %v3431 = vand.u32 %v3425, 2147483648
    %v3432 = vsel %vm3430, %v3431, %v3429
    %v3433 = vadd.f32 %v3432, 1e-06
    %v3434 = vrcp.pop %v3433
    %v3435 = vmul.f32 %v3419, %v3434
    %vm3436 = vcmp.eq.s32.totalorder %v664, 15
    %vm3437 = vcmp.eq.s32.totalorder %v665, 15
    %v3438 = vsel %vm3436, 1.0, 0.0
    %v3439 = vsel %vm3437, 1.0, 0.0
    %v3440 = vlaneseq
    %v3441 = vshrl.u32 %v3440, 7
    %v3442 = vsub.s32 0, %v3441
    %v3443 = vrot.slane %v3435, %v3442
    %v3444 = vmul.f32 %v3438, %v3443
    %v3445 = vmul.f32 %v3439, %v3443
    %v3446 = vadd.f32 %v3341, %v3444
    %v3447 = vadd.f32 %v3342, %v3445
    %3450 = vrot.lane.b32.xlu0 %v3446, 32
    %v3451 = vpop.permute.xlu0 %3450
    %3452 = vrot.lane.b32.xlu0 %v3447, 32
    %v3453 = vpop.permute.xlu0 %3452
    %v3456 = vmul.f32 %v1349, %v3451
    %v3457 = vmul.f32 %v1355, %v3453
    %3460 = vrot.lane.b32.xlu0 %v3456, 96
    %v3461 = vpop.permute.xlu0 %3460
    %3462 = vrot.lane.b32.xlu0 %v3457, 96
    %v3463 = vpop.permute.xlu0 %3462
    %v3466 = vsel %vm823, %v3461, 0.0
    %3467 = vadd.xlane.f32.xlu0 %v3466
    %v3468 = vpop.xlane.xlu0 %3467
    %v3469 = vsel %vm823, %v3463, 0.0
    %3470 = vadd.xlane.f32.xlu0 %v3469
    %v3471 = vpop.xlane.xlu0 %3470
    %v3472 = vadd.f32 %v3468, %v654
    %v3473 = vadd.f32 %v3471, %v660
    %v3474 = vld [vmem:[%s9] sm:$0xff]
    %v3475 = vld [vmem:[%s9 + $0x8] sm:$0xff]
    %v3476 = vld [vmem:[%s9 + $0x10] sm:$0xff]
    %v3477 = vld [vmem:[%s9 + $0x18] sm:$0xff]
    %v3478 = vld [vmem:[%s10] sm:$0x1]
    %v3480 = vlaneseq
    %v3481 = vshrl.u32 %v3480, 7
    %v3482 = vsub.s32 0, %v3481
    %v3483 = vrot.slane %v3478, %v3482
    %3487 = vrot.lane.b32.xlu0 %v3472, 96
    %v3488 = vpop.permute.xlu0 %3487
    %3489 = vrot.lane.b32.xlu0 %v3473, 96
    %v3490 = vpop.permute.xlu0 %3489
    %v3491 = vsel %vm823, %v3488, 0
    %v3493 = vsel %vm823, %v3490, 0
    %3495 = vmatprep.subr.mxu0 0.0
    %v3496 = vand.u32 %v3474, 4294901760
    %3497 = vmatpush1.msra.mxu0 %v3496
    %3498 = vmatprep.subr.mxu0 0.0
    %v3499 = vand.u32 %v3475, 4294901760
    %3500 = vmatpush1.msra.mxu0 %v3499
    %3501 = vmatprep.subr.mxu0 0.0
    %v3502 = vand.u32 %v3476, 4294901760
    %3503 = vmatpush1.msra.mxu0 %v3502
    %3504 = vmatprep.subr.mxu0 0.0
    %v3505 = vand.u32 %v3477, 4294901760
    %3506 = vmatpush1.msra.mxu0 %v3505
    %3507 = vmatprep.subr.mxu0 0.0
    %3508 = vmatpush1.msra.mxu0 0.0
    %3509 = vmatprep.subr.mxu0 0.0
    %3510 = vmatpush1.msra.mxu0 0.0
    %3511 = vmatprep.subr.mxu0 0.0
    %3512 = vmatpush1.msra.mxu0 0.0
    %3513 = vmatprep.subr.mxu0 0.0
    %3514 = vmatpush1.msra.mxu0 0.0
    %3515 = vmatprep.subr.mxu0 0.0
    %3516 = vmatpush1.msra.mxu0 0.0
    %3517 = vmatprep.subr.mxu0 0.0
    %3518 = vmatpush1.msra.mxu0 0.0
    %3519 = vmatprep.subr.mxu0 0.0
    %3520 = vmatpush1.msra.mxu0 0.0
    %3521 = vmatprep.subr.mxu0 0.0
    %3522 = vmatpush1.msra.mxu0 0.0
    %3523 = vmatprep.subr.mxu0 0.0
    %3524 = vmatpush1.msra.mxu0 0.0
    %3525 = vmatprep.subr.mxu0 0.0
    %3526 = vmatpush1.msra.mxu0 0.0
    %3527 = vmatprep.subr.mxu0 0.0
    %3528 = vmatpush1.msra.mxu0 0.0
    %3529 = vmatprep.subr.mxu0 0.0
    %3530 = vmatpush1.msra.mxu0 0.0
    %3531 = vmatprep.subr.mxu0 0.0
    %3532 = vmatpush1.msra.mxu0 0.0
    %3533 = vmatprep.subr.mxu0 0.0
    %3534 = vmatpush1.msra.mxu0 0.0
    %3535 = vmatprep.subr.mxu0 0.0
    %3536 = vmatpush1.msra.mxu0 0.0
    %3537 = vmatprep.subr.mxu0 0.0
    %3538 = vmatpush1.msra.mxu0 0.0
    %3539 = vmatprep.subr.mxu0 0.0
    %3540 = vmatpush1.msra.mxu0 0.0
    %3541 = vmatprep.subr.mxu0 0.0
    %3542 = vmatpush1.msra.mxu0 0.0
    %3543 = vmatprep.subr.mxu0 0.0
    %3544 = vmatpush1.msra.mxu0 0.0
    %3545 = vmatprep.subr.mxu0 0.0
    %3546 = vmatpush1.msra.mxu0 0.0
    %3547 = vmatprep.subr.mxu0 0.0
    %3548 = vmatpush1.msra.mxu0 0.0
    %3549 = vmatprep.subr.mxu0 0.0
    %3550 = vmatpush1.msra.mxu0 0.0
    %3551 = vmatprep.subr.mxu0 0.0
    %3552 = vmatpush1.msra.mxu0 0.0
    %3553 = vmatprep.subr.mxu0 0.0
    %3554 = vmatpush1.msra.mxu0 0.0
    %3555 = vmatprep.subr.mxu0 0.0
    %3556 = vmatpush1.msra.mxu0 0.0
    %3557 = vmatprep.subr.mxu0 0.0
    %3558 = vmatpush1.msra.mxu0 0.0
    %3559 = vmatprep.subr.mxu0 0.0
    %3560 = vmatpush1.msra.mxu0 0.0
    %3561 = vmatprep.subr.mxu0 0.0
    %3562 = vmatpush1.msra.mxu0 0.0
    %3563 = vmatprep.mubr.f32.mxu0 0.0
    %v3564 = vand.u32 %v3491, 4294901760
    %v3565 = vsub.f32 %v3491, %v3564
    %v3566 = vand.u32 %v3565, 4294901760
    %v3567 = vsub.f32 %v3565, %v3566
    %v3568 = vand.u32 %v3567, 4294901760
    %3569 = vmatmul.mubr.f32.gmra.mrb[0].mxu0 %v3568
    %v3570 = vpop.f32.mrb[0].mxu0
    %v3571 = vadd.f32 %v3483, %v3570
    %v3572 = vpop.f32.mrb[0].mxu0
    %3573 = vmatprep.mubr.f32.mxu0 0.0
    %v3574 = vand.u32 %v3493, 4294901760
    %v3575 = vsub.f32 %v3493, %v3574
    %v3576 = vand.u32 %v3575, 4294901760
    %v3577 = vsub.f32 %v3575, %v3576
    %v3578 = vand.u32 %v3577, 4294901760
    %3579 = vmatmul.mubr.f32.gmra.mrb[0].mxu0 %v3578
    %v3580 = vpop.f32.mrb[0].mxu0
    %v3581 = vadd.f32 %v3483, %v3580
    %v3582 = vpop.f32.mrb[0].mxu0
    %3583 = vdwg.mxu0
    %3584 = vmatprep.subr.mxu0 0.0
    %v3585 = vand.u32 %v3474, 4294901760
    %v3586 = vsub.f32 %v3474, %v3585
    %v3587 = vand.u32 %v3586, 4294901760
    %v3588 = vsub.f32 %v3586, %v3587
    %v3589 = vand.u32 %v3588, 4294901760
    %3590 = vmatpush1.msra.mxu0 %v3589
    %3591 = vmatprep.subr.mxu0 0.0
    %v3592 = vand.u32 %v3475, 4294901760
    %v3593 = vsub.f32 %v3475, %v3592
    %v3594 = vand.u32 %v3593, 4294901760
    %v3595 = vsub.f32 %v3593, %v3594
    %v3596 = vand.u32 %v3595, 4294901760
    %3597 = vmatpush1.msra.mxu0 %v3596
    %3598 = vmatprep.subr.mxu0 0.0
    %v3599 = vand.u32 %v3476, 4294901760
    %v3600 = vsub.f32 %v3476, %v3599
    %v3601 = vand.u32 %v3600, 4294901760
    %v3602 = vsub.f32 %v3600, %v3601
    %v3603 = vand.u32 %v3602, 4294901760
    %3604 = vmatpush1.msra.mxu0 %v3603
    %3605 = vmatprep.subr.mxu0 0.0
    %v3606 = vand.u32 %v3477, 4294901760
    %v3607 = vsub.f32 %v3477, %v3606
    %v3608 = vand.u32 %v3607, 4294901760
    %v3609 = vsub.f32 %v3607, %v3608
    %v3610 = vand.u32 %v3609, 4294901760
    %3611 = vmatpush1.msra.mxu0 %v3610
    %3612 = vmatprep.subr.mxu0 0.0
    %3613 = vmatpush1.msra.mxu0 0.0
    %3614 = vmatprep.subr.mxu0 0.0
    %3615 = vmatpush1.msra.mxu0 0.0
    %3616 = vmatprep.subr.mxu0 0.0
    %3617 = vmatpush1.msra.mxu0 0.0
    %3618 = vmatprep.subr.mxu0 0.0
    %3619 = vmatpush1.msra.mxu0 0.0
    %3620 = vmatprep.subr.mxu0 0.0
    %3621 = vmatpush1.msra.mxu0 0.0
    %3622 = vmatprep.subr.mxu0 0.0
    %3623 = vmatpush1.msra.mxu0 0.0
    %3624 = vmatprep.subr.mxu0 0.0
    %3625 = vmatpush1.msra.mxu0 0.0
    %3626 = vmatprep.subr.mxu0 0.0
    %3627 = vmatpush1.msra.mxu0 0.0
    %3628 = vmatprep.subr.mxu0 0.0
    %3629 = vmatpush1.msra.mxu0 0.0
    %3630 = vmatprep.subr.mxu0 0.0
    %3631 = vmatpush1.msra.mxu0 0.0
    %3632 = vmatprep.subr.mxu0 0.0
    %3633 = vmatpush1.msra.mxu0 0.0
    %3634 = vmatprep.subr.mxu0 0.0
    %3635 = vmatpush1.msra.mxu0 0.0
    %3636 = vmatprep.subr.mxu0 0.0
    %3637 = vmatpush1.msra.mxu0 0.0
    %3638 = vmatprep.subr.mxu0 0.0
    %3639 = vmatpush1.msra.mxu0 0.0
    %3640 = vmatprep.subr.mxu0 0.0
    %3641 = vmatpush1.msra.mxu0 0.0
    %3642 = vmatprep.subr.mxu0 0.0
    %3643 = vmatpush1.msra.mxu0 0.0
    %3644 = vmatprep.subr.mxu0 0.0
    %3645 = vmatpush1.msra.mxu0 0.0
    %3646 = vmatprep.subr.mxu0 0.0
    %3647 = vmatpush1.msra.mxu0 0.0
    %3648 = vmatprep.subr.mxu0 0.0
    %3649 = vmatpush1.msra.mxu0 0.0
    %3650 = vmatprep.subr.mxu0 0.0
    %3651 = vmatpush1.msra.mxu0 0.0
    %3652 = vmatprep.subr.mxu0 0.0
    %3653 = vmatpush1.msra.mxu0 0.0
    %3654 = vmatprep.subr.mxu0 0.0
    %3655 = vmatpush1.msra.mxu0 0.0
    %3656 = vmatprep.subr.mxu0 0.0
    %3657 = vmatpush1.msra.mxu0 0.0
    %3658 = vmatprep.subr.mxu0 0.0
    %3659 = vmatpush1.msra.mxu0 0.0
    %3660 = vmatprep.subr.mxu0 0.0
    %3661 = vmatpush1.msra.mxu0 0.0
    %3662 = vmatprep.subr.mxu0 0.0
    %3663 = vmatpush1.msra.mxu0 0.0
    %3664 = vmatprep.subr.mxu0 0.0
    %3665 = vmatpush1.msra.mxu0 0.0
    %3666 = vmatprep.subr.mxu0 0.0
    %3667 = vmatpush1.msra.mxu0 0.0
    %3668 = vmatprep.mubr.f32.mxu0 0.0
    %v3669 = vand.u32 %v3491, 4294901760
    %3670 = vmatmul.mubr.f32.gmra.mrb[0].mxu0 %v3669
    %v3671 = vpop.f32.mrb[0].mxu0
    %v3672 = vadd.f32 %v3571, %v3671
    %v3673 = vpop.f32.mrb[0].mxu0
    %3674 = vmatprep.mubr.f32.mxu0 0.0
    %v3675 = vand.u32 %v3493, 4294901760
    %3676 = vmatmul.mubr.f32.gmra.mrb[0].mxu0 %v3675
    %v3677 = vpop.f32.mrb[0].mxu0
    %v3678 = vadd.f32 %v3581, %v3677
    %v3679 = vpop.f32.mrb[0].mxu0
    %3680 = vdwg.mxu0
    %3681 = vmatprep.subr.mxu0 0.0
    %v3682 = vand.u32 %v3474, 4294901760
    %v3683 = vsub.f32 %v3474, %v3682
    %3684 = vmatpush1.msra.mxu0 %v3683
    %3685 = vmatprep.subr.mxu0 0.0
    %v3686 = vand.u32 %v3475, 4294901760
    %v3687 = vsub.f32 %v3475, %v3686
    %3688 = vmatpush1.msra.mxu0 %v3687
    %3689 = vmatprep.subr.mxu0 0.0
    %v3690 = vand.u32 %v3476, 4294901760
    %v3691 = vsub.f32 %v3476, %v3690
    %3692 = vmatpush1.msra.mxu0 %v3691
    %3693 = vmatprep.subr.mxu0 0.0
    %v3694 = vand.u32 %v3477, 4294901760
    %v3695 = vsub.f32 %v3477, %v3694
    %3696 = vmatpush1.msra.mxu0 %v3695
    %3697 = vmatprep.subr.mxu0 0.0
    %3698 = vmatpush1.msra.mxu0 0.0
    %3699 = vmatprep.subr.mxu0 0.0
    %3700 = vmatpush1.msra.mxu0 0.0
    %3701 = vmatprep.subr.mxu0 0.0
    %3702 = vmatpush1.msra.mxu0 0.0
    %3703 = vmatprep.subr.mxu0 0.0
    %3704 = vmatpush1.msra.mxu0 0.0
    %3705 = vmatprep.subr.mxu0 0.0
    %3706 = vmatpush1.msra.mxu0 0.0
    %3707 = vmatprep.subr.mxu0 0.0
    %3708 = vmatpush1.msra.mxu0 0.0
    %3709 = vmatprep.subr.mxu0 0.0
    %3710 = vmatpush1.msra.mxu0 0.0
    %3711 = vmatprep.subr.mxu0 0.0
    %3712 = vmatpush1.msra.mxu0 0.0
    %3713 = vmatprep.subr.mxu0 0.0
    %3714 = vmatpush1.msra.mxu0 0.0
    %3715 = vmatprep.subr.mxu0 0.0
    %3716 = vmatpush1.msra.mxu0 0.0
    %3717 = vmatprep.subr.mxu0 0.0
    %3718 = vmatpush1.msra.mxu0 0.0
    %3719 = vmatprep.subr.mxu0 0.0
    %3720 = vmatpush1.msra.mxu0 0.0
    %3721 = vmatprep.subr.mxu0 0.0
    %3722 = vmatpush1.msra.mxu0 0.0
    %3723 = vmatprep.subr.mxu0 0.0
    %3724 = vmatpush1.msra.mxu0 0.0
    %3725 = vmatprep.subr.mxu0 0.0
    %3726 = vmatpush1.msra.mxu0 0.0
    %3727 = vmatprep.subr.mxu0 0.0
    %3728 = vmatpush1.msra.mxu0 0.0
    %3729 = vmatprep.subr.mxu0 0.0
    %3730 = vmatpush1.msra.mxu0 0.0
    %3731 = vmatprep.subr.mxu0 0.0
    %3732 = vmatpush1.msra.mxu0 0.0
    %3733 = vmatprep.subr.mxu0 0.0
    %3734 = vmatpush1.msra.mxu0 0.0
    %3735 = vmatprep.subr.mxu0 0.0
    %3736 = vmatpush1.msra.mxu0 0.0
    %3737 = vmatprep.subr.mxu0 0.0
    %3738 = vmatpush1.msra.mxu0 0.0
    %3739 = vmatprep.subr.mxu0 0.0
    %3740 = vmatpush1.msra.mxu0 0.0
    %3741 = vmatprep.subr.mxu0 0.0
    %3742 = vmatpush1.msra.mxu0 0.0
    %3743 = vmatprep.subr.mxu0 0.0
    %3744 = vmatpush1.msra.mxu0 0.0
    %3745 = vmatprep.subr.mxu0 0.0
    %3746 = vmatpush1.msra.mxu0 0.0
    %3747 = vmatprep.subr.mxu0 0.0
    %3748 = vmatpush1.msra.mxu0 0.0
    %3749 = vmatprep.subr.mxu0 0.0
    %3750 = vmatpush1.msra.mxu0 0.0
    %3751 = vmatprep.subr.mxu0 0.0
    %3752 = vmatpush1.msra.mxu0 0.0
    %3753 = vmatprep.mubr.f32.mxu0 0.0
    %v3754 = vand.u32 %v3491, 4294901760
    %v3755 = vsub.f32 %v3491, %v3754
    %3756 = vmatmul.mubr.f32.gmra.mrb[0].mxu0 %v3755
    %v3757 = vpop.f32.mrb[0].mxu0
    %v3758 = vadd.f32 %v3672, %v3757
    %v3759 = vpop.f32.mrb[0].mxu0
    %3760 = vmatprep.mubr.f32.mxu0 0.0
    %v3761 = vand.u32 %v3493, 4294901760
    %v3762 = vsub.f32 %v3493, %v3761
    %3763 = vmatmul.mubr.f32.gmra.mrb[0].mxu0 %v3762
    %v3764 = vpop.f32.mrb[0].mxu0
    %v3765 = vadd.f32 %v3678, %v3764
    %v3766 = vpop.f32.mrb[0].mxu0
    %3767 = vdwg.mxu0
    %3768 = vmatprep.subr.mxu0 0.0
    %v3769 = vand.u32 %v3474, 4294901760
    %3770 = vmatpush1.msra.mxu0 %v3769
    %3771 = vmatprep.subr.mxu0 0.0
    %v3772 = vand.u32 %v3475, 4294901760
    %3773 = vmatpush1.msra.mxu0 %v3772
    %3774 = vmatprep.subr.mxu0 0.0
    %v3775 = vand.u32 %v3476, 4294901760
    %3776 = vmatpush1.msra.mxu0 %v3775
    %3777 = vmatprep.subr.mxu0 0.0
    %v3778 = vand.u32 %v3477, 4294901760
    %3779 = vmatpush1.msra.mxu0 %v3778
    %3780 = vmatprep.subr.mxu0 0.0
    %3781 = vmatpush1.msra.mxu0 0.0
    %3782 = vmatprep.subr.mxu0 0.0
    %3783 = vmatpush1.msra.mxu0 0.0
    %3784 = vmatprep.subr.mxu0 0.0
    %3785 = vmatpush1.msra.mxu0 0.0
    %3786 = vmatprep.subr.mxu0 0.0
    %3787 = vmatpush1.msra.mxu0 0.0
    %3788 = vmatprep.subr.mxu0 0.0
    %3789 = vmatpush1.msra.mxu0 0.0
    %3790 = vmatprep.subr.mxu0 0.0
    %3791 = vmatpush1.msra.mxu0 0.0
    %3792 = vmatprep.subr.mxu0 0.0
    %3793 = vmatpush1.msra.mxu0 0.0
    %3794 = vmatprep.subr.mxu0 0.0
    %3795 = vmatpush1.msra.mxu0 0.0
    %3796 = vmatprep.subr.mxu0 0.0
    %3797 = vmatpush1.msra.mxu0 0.0
    %3798 = vmatprep.subr.mxu0 0.0
    %3799 = vmatpush1.msra.mxu0 0.0
    %3800 = vmatprep.subr.mxu0 0.0
    %3801 = vmatpush1.msra.mxu0 0.0
    %3802 = vmatprep.subr.mxu0 0.0
    %3803 = vmatpush1.msra.mxu0 0.0
    %3804 = vmatprep.subr.mxu0 0.0
    %3805 = vmatpush1.msra.mxu0 0.0
    %3806 = vmatprep.subr.mxu0 0.0
    %3807 = vmatpush1.msra.mxu0 0.0
    %3808 = vmatprep.subr.mxu0 0.0
    %3809 = vmatpush1.msra.mxu0 0.0
    %3810 = vmatprep.subr.mxu0 0.0
    %3811 = vmatpush1.msra.mxu0 0.0
    %3812 = vmatprep.subr.mxu0 0.0
    %3813 = vmatpush1.msra.mxu0 0.0
    %3814 = vmatprep.subr.mxu0 0.0
    %3815 = vmatpush1.msra.mxu0 0.0
    %3816 = vmatprep.subr.mxu0 0.0
    %3817 = vmatpush1.msra.mxu0 0.0
    %3818 = vmatprep.subr.mxu0 0.0
    %3819 = vmatpush1.msra.mxu0 0.0
    %3820 = vmatprep.subr.mxu0 0.0
    %3821 = vmatpush1.msra.mxu0 0.0
    %3822 = vmatprep.subr.mxu0 0.0
    %3823 = vmatpush1.msra.mxu0 0.0
    %3824 = vmatprep.subr.mxu0 0.0
    %3825 = vmatpush1.msra.mxu0 0.0
    %3826 = vmatprep.subr.mxu0 0.0
    %3827 = vmatpush1.msra.mxu0 0.0
    %3828 = vmatprep.subr.mxu0 0.0
    %3829 = vmatpush1.msra.mxu0 0.0
    %3830 = vmatprep.subr.mxu0 0.0
    %3831 = vmatpush1.msra.mxu0 0.0
    %3832 = vmatprep.subr.mxu0 0.0
    %3833 = vmatpush1.msra.mxu0 0.0
    %3834 = vmatprep.subr.mxu0 0.0
    %3835 = vmatpush1.msra.mxu0 0.0
    %3836 = vmatprep.mubr.f32.mxu0 0.0
    %v3837 = vand.u32 %v3491, 4294901760
    %v3838 = vsub.f32 %v3491, %v3837
    %v3839 = vand.u32 %v3838, 4294901760
    %3840 = vmatmul.mubr.f32.gmra.mrb[0].mxu0 %v3839
    %v3841 = vpop.f32.mrb[0].mxu0
    %v3842 = vadd.f32 %v3758, %v3841
    %v3843 = vpop.f32.mrb[0].mxu0
    %3844 = vmatprep.mubr.f32.mxu0 0.0
    %v3845 = vand.u32 %v3493, 4294901760
    %v3846 = vsub.f32 %v3493, %v3845
    %v3847 = vand.u32 %v3846, 4294901760
    %3848 = vmatmul.mubr.f32.gmra.mrb[0].mxu0 %v3847
    %v3849 = vpop.f32.mrb[0].mxu0
    %v3850 = vadd.f32 %v3765, %v3849
    %v3851 = vpop.f32.mrb[0].mxu0
    %3852 = vdwg.mxu0
    %3853 = vmatprep.subr.mxu0 0.0
    %v3854 = vand.u32 %v3474, 4294901760
    %v3855 = vsub.f32 %v3474, %v3854
    %v3856 = vand.u32 %v3855, 4294901760
    %3857 = vmatpush1.msra.mxu0 %v3856
    %3858 = vmatprep.subr.mxu0 0.0
    %v3859 = vand.u32 %v3475, 4294901760
    %v3860 = vsub.f32 %v3475, %v3859
    %v3861 = vand.u32 %v3860, 4294901760
    %3862 = vmatpush1.msra.mxu0 %v3861
    %3863 = vmatprep.subr.mxu0 0.0
    %v3864 = vand.u32 %v3476, 4294901760
    %v3865 = vsub.f32 %v3476, %v3864
    %v3866 = vand.u32 %v3865, 4294901760
    %3867 = vmatpush1.msra.mxu0 %v3866
    %3868 = vmatprep.subr.mxu0 0.0
    %v3869 = vand.u32 %v3477, 4294901760
    %v3870 = vsub.f32 %v3477, %v3869
    %v3871 = vand.u32 %v3870, 4294901760
    %3872 = vmatpush1.msra.mxu0 %v3871
    %3873 = vmatprep.subr.mxu0 0.0
    %3874 = vmatpush1.msra.mxu0 0.0
    %3875 = vmatprep.subr.mxu0 0.0
    %3876 = vmatpush1.msra.mxu0 0.0
    %3877 = vmatprep.subr.mxu0 0.0
    %3878 = vmatpush1.msra.mxu0 0.0
    %3879 = vmatprep.subr.mxu0 0.0
    %3880 = vmatpush1.msra.mxu0 0.0
    %3881 = vmatprep.subr.mxu0 0.0
    %3882 = vmatpush1.msra.mxu0 0.0
    %3883 = vmatprep.subr.mxu0 0.0
    %3884 = vmatpush1.msra.mxu0 0.0
    %3885 = vmatprep.subr.mxu0 0.0
    %3886 = vmatpush1.msra.mxu0 0.0
    %3887 = vmatprep.subr.mxu0 0.0
    %3888 = vmatpush1.msra.mxu0 0.0
    %3889 = vmatprep.subr.mxu0 0.0
    %3890 = vmatpush1.msra.mxu0 0.0
    %3891 = vmatprep.subr.mxu0 0.0
    %3892 = vmatpush1.msra.mxu0 0.0
    %3893 = vmatprep.subr.mxu0 0.0
    %3894 = vmatpush1.msra.mxu0 0.0
    %3895 = vmatprep.subr.mxu0 0.0
    %3896 = vmatpush1.msra.mxu0 0.0
    %3897 = vmatprep.subr.mxu0 0.0
    %3898 = vmatpush1.msra.mxu0 0.0
    %3899 = vmatprep.subr.mxu0 0.0
    %3900 = vmatpush1.msra.mxu0 0.0
    %3901 = vmatprep.subr.mxu0 0.0
    %3902 = vmatpush1.msra.mxu0 0.0
    %3903 = vmatprep.subr.mxu0 0.0
    %3904 = vmatpush1.msra.mxu0 0.0
    %3905 = vmatprep.subr.mxu0 0.0
    %3906 = vmatpush1.msra.mxu0 0.0
    %3907 = vmatprep.subr.mxu0 0.0
    %3908 = vmatpush1.msra.mxu0 0.0
    %3909 = vmatprep.subr.mxu0 0.0
    %3910 = vmatpush1.msra.mxu0 0.0
    %3911 = vmatprep.subr.mxu0 0.0
    %3912 = vmatpush1.msra.mxu0 0.0
    %3913 = vmatprep.subr.mxu0 0.0
    %3914 = vmatpush1.msra.mxu0 0.0
    %3915 = vmatprep.subr.mxu0 0.0
    %3916 = vmatpush1.msra.mxu0 0.0
    %3917 = vmatprep.subr.mxu0 0.0
    %3918 = vmatpush1.msra.mxu0 0.0
    %3919 = vmatprep.subr.mxu0 0.0
    %3920 = vmatpush1.msra.mxu0 0.0
    %3921 = vmatprep.subr.mxu0 0.0
    %3922 = vmatpush1.msra.mxu0 0.0
    %3923 = vmatprep.subr.mxu0 0.0
    %3924 = vmatpush1.msra.mxu0 0.0
    %3925 = vmatprep.subr.mxu0 0.0
    %3926 = vmatpush1.msra.mxu0 0.0
    %3927 = vmatprep.subr.mxu0 0.0
    %3928 = vmatpush1.msra.mxu0 0.0
    %3929 = vmatprep.mubr.f32.mxu0 0.0
    %v3930 = vand.u32 %v3491, 4294901760
    %3931 = vmatmul.mubr.f32.gmra.mrb[0].mxu0 %v3930
    %v3932 = vpop.f32.mrb[0].mxu0
    %v3933 = vadd.f32 %v3842, %v3932
    %v3934 = vpop.f32.mrb[0].mxu0
    %3935 = vmatprep.mubr.f32.mxu0 0.0
    %v3936 = vand.u32 %v3493, 4294901760
    %3937 = vmatmul.mubr.f32.gmra.mrb[0].mxu0 %v3936
    %v3938 = vpop.f32.mrb[0].mxu0
    %v3939 = vadd.f32 %v3850, %v3938
    %v3940 = vpop.f32.mrb[0].mxu0
    %3941 = vdwg.mxu0
    %3942 = vmatprep.subr.mxu0 0.0
    %v3943 = vand.u32 %v3474, 4294901760
    %3944 = vmatpush1.msra.mxu0 %v3943
    %3945 = vmatprep.subr.mxu0 0.0
    %v3946 = vand.u32 %v3475, 4294901760
    %3947 = vmatpush1.msra.mxu0 %v3946
    %3948 = vmatprep.subr.mxu0 0.0
    %v3949 = vand.u32 %v3476, 4294901760
    %3950 = vmatpush1.msra.mxu0 %v3949
    %3951 = vmatprep.subr.mxu0 0.0
    %v3952 = vand.u32 %v3477, 4294901760
    %3953 = vmatpush1.msra.mxu0 %v3952
    %3954 = vmatprep.subr.mxu0 0.0
    %3955 = vmatpush1.msra.mxu0 0.0
    %3956 = vmatprep.subr.mxu0 0.0
    %3957 = vmatpush1.msra.mxu0 0.0
    %3958 = vmatprep.subr.mxu0 0.0
    %3959 = vmatpush1.msra.mxu0 0.0
    %3960 = vmatprep.subr.mxu0 0.0
    %3961 = vmatpush1.msra.mxu0 0.0
    %3962 = vmatprep.subr.mxu0 0.0
    %3963 = vmatpush1.msra.mxu0 0.0
    %3964 = vmatprep.subr.mxu0 0.0
    %3965 = vmatpush1.msra.mxu0 0.0
    %3966 = vmatprep.subr.mxu0 0.0
    %3967 = vmatpush1.msra.mxu0 0.0
    %3968 = vmatprep.subr.mxu0 0.0
    %3969 = vmatpush1.msra.mxu0 0.0
    %3970 = vmatprep.subr.mxu0 0.0
    %3971 = vmatpush1.msra.mxu0 0.0
    %3972 = vmatprep.subr.mxu0 0.0
    %3973 = vmatpush1.msra.mxu0 0.0
    %3974 = vmatprep.subr.mxu0 0.0
    %3975 = vmatpush1.msra.mxu0 0.0
    %3976 = vmatprep.subr.mxu0 0.0
    %3977 = vmatpush1.msra.mxu0 0.0
    %3978 = vmatprep.subr.mxu0 0.0
    %3979 = vmatpush1.msra.mxu0 0.0
    %3980 = vmatprep.subr.mxu0 0.0
    %3981 = vmatpush1.msra.mxu0 0.0
    %3982 = vmatprep.subr.mxu0 0.0
    %3983 = vmatpush1.msra.mxu0 0.0
    %3984 = vmatprep.subr.mxu0 0.0
    %3985 = vmatpush1.msra.mxu0 0.0
    %3986 = vmatprep.subr.mxu0 0.0
    %3987 = vmatpush1.msra.mxu0 0.0
    %3988 = vmatprep.subr.mxu0 0.0
    %3989 = vmatpush1.msra.mxu0 0.0
    %3990 = vmatprep.subr.mxu0 0.0
    %3991 = vmatpush1.msra.mxu0 0.0
    %3992 = vmatprep.subr.mxu0 0.0
    %3993 = vmatpush1.msra.mxu0 0.0
    %3994 = vmatprep.subr.mxu0 0.0
    %3995 = vmatpush1.msra.mxu0 0.0
    %3996 = vmatprep.subr.mxu0 0.0
    %3997 = vmatpush1.msra.mxu0 0.0
    %3998 = vmatprep.subr.mxu0 0.0
    %3999 = vmatpush1.msra.mxu0 0.0
    %4000 = vmatprep.subr.mxu0 0.0
    %4001 = vmatpush1.msra.mxu0 0.0
    %4002 = vmatprep.subr.mxu0 0.0
    %4003 = vmatpush1.msra.mxu0 0.0
    %4004 = vmatprep.subr.mxu0 0.0
    %4005 = vmatpush1.msra.mxu0 0.0
    %4006 = vmatprep.subr.mxu0 0.0
    %4007 = vmatpush1.msra.mxu0 0.0
    %4008 = vmatprep.subr.mxu0 0.0
    %4009 = vmatpush1.msra.mxu0 0.0
    %4010 = vmatprep.mubr.f32.mxu0 0.0
    %v4011 = vand.u32 %v3491, 4294901760
    %4012 = vmatmul.mubr.f32.gmra.mrb[0].mxu0 %v4011
    %v4013 = vpop.f32.mrb[0].mxu0
    %v4014 = vadd.f32 %v3933, %v4013
    %v4015 = vpop.f32.mrb[0].mxu0
    %4016 = vmatprep.mubr.f32.mxu0 0.0
    %v4017 = vand.u32 %v3493, 4294901760
    %4018 = vmatmul.mubr.f32.gmra.mrb[0].mxu0 %v4017
    %v4019 = vpop.f32.mrb[0].mxu0
    %v4020 = vadd.f32 %v3939, %v4019
    %v4021 = vpop.f32.mrb[0].mxu0
    %4022 = vdwg.mxu0
    %4023 = vst [vmem:[#allocation17] sm:$0xff] %v4014
    %4024 = vst [vmem:[#allocation17 + $0x8] sm:$0xff] %v4020
    // Predicated region
    $region82: #{tpu_custom_call.1} parent=1 // pred_check
      _
    $region83: #{tpu_custom_call.1} parent=1 // pred_check_branch
      %4026 = sbr.rel (0) target = $region85
    $region84: #{tpu_custom_call.1} parent=1 // pred_region
      %s4028 = ssub.s32 256, 256
      %4029 = vsyncadd [#allocation5], %s4028
      %s4030 = sshll.u32 [#allocation17], 4
      %s4031 = int_to_ptr.vmem [resolvable:$true] %s4030
      %4036 = dma.vmem_to_hbm [thread:$0]  %s4031, 256, %s12, [#allocation5], 128, 128, 8
    $region85: #{tpu_custom_call.1} parent=1 // pred_fallthru
      _
    // Predicated region
    $region86: #{tpu_custom_call.1} parent=1 // pred_check
      _
    $region87: #{tpu_custom_call.1} parent=1 // pred_check_branch
      %4038 = sbr.rel (0) target = $region89
    $region88: #{tpu_custom_call.1} parent=1 // pred_region
      %4039 = dma.done [#allocation5], 256
    $region89: #{tpu_custom_call.1} parent=1 // pred_fallthru
      _
    %4040 = vsyncpa [#allocation4], 1
    %4041 = vsyncpa [#allocation7], 1
    %4042 = vsyncpa [#allocation10], 1
    %4043 = vsyncpa [#allocation13], 1
    %4044 = vsyncpa [#allocation16], 1
    %4045 = vsyncpa [#allocation5], 1

</llo_original>
